<compile_context>
chip_gen: v7x
topology: tpu7x:2x2x1
jax: 0.10.0
libtpu: 0.0.40
codegen_flags: <defaults>
</compile_context>

<pallas_src>
import functools

import jax
import jax.numpy as jnp
from jax.experimental import pallas as pl
from jax.experimental.pallas import tpu as pltpu


# ----------------------------------------------------------------------------
# Kernel 1: fused 1x1-conv + per-patch Gram (A^T A) + mean-over-C row reduction
# ----------------------------------------------------------------------------
def _pick_patches_per_step(num_patches, batch, cap=16):
    # Batch several patches per grid step so the ~0.35 us per-step overhead is
    # amortised over several small MXU matmuls.  For batch == 1 keep >= 2 grid
    # points on the patch axis so both v7x TensorCores get work.
    if batch == 1 and num_patches > 1:
        cap = min(cap, max(1, num_patches // 2))
    for t in range(min(cap, num_patches), 0, -1):
        if num_patches % t == 0:
            return t
    return 1


def _fused_conv_gram_mean_kernel(x_ref, w_ref, b_ref, gram_ref, mean_ref, *, jb):
    # x_ref:    (1, jb, Cin, P)  raw-input patches (patch-major)
    # w_ref:    (C, Cin)         1x1-conv weight
    # b_ref:    (C, 1)           1x1-conv bias
    # gram_ref: (1, jb, P, P)    per-patch A^T A   (A = conv-output patch, C x P)
    # mean_ref: (1, jb, 1, P)    per-patch mean over the C rows of A
    w = w_ref[...]
    bias = b_ref[...]
    x_blk = x_ref[0].astype(jnp.float32)          # cast in-register, no HBM pass
    for j in range(jb):                           # static unroll, jb <= 16
        a = jnp.dot(w, x_blk[j], preferred_element_type=jnp.float32) + bias  # (C, P)
        gram_ref[0, j] = jnp.einsum("cp,cq->pq", a, a,
                                    preferred_element_type=jnp.float32)
        mean_ref[0, j] = jnp.mean(a, axis=0, keepdims=True)


def fused_conv_gram_mean(x_patches, w_conv, b_conv):
    """(B, NP, Cin, P) -> Grams (B, NP, P, P) and row-means (B, NP, 1, P), f32."""
    B, NP, cin, P = x_patches.shape
    C = w_conv.shape[0]
    jb = _pick_patches_per_step(NP, B)
    return pl.pallas_call(
        functools.partial(_fused_conv_gram_mean_kernel, jb=jb),
        out_shape=(jax.ShapeDtypeStruct((B, NP, P, P), jnp.float32),
                   jax.ShapeDtypeStruct((B, NP, 1, P), jnp.float32)),
        grid=(B, NP // jb),
        in_specs=[
            pl.BlockSpec((1, jb, cin, P), lambda b, n: (b, n, 0, 0)),
            pl.BlockSpec((C, cin), lambda b, n: (0, 0)),
            pl.BlockSpec((C, 1), lambda b, n: (0, 0)),
        ],
        out_specs=(
            pl.BlockSpec((1, jb, P, P), lambda b, n: (b, n, 0, 0)),
            pl.BlockSpec((1, jb, 1, P), lambda b, n: (b, n, 0, 0)),
        ),
        compiler_params=pltpu.CompilerParams(
            dimension_semantics=("parallel", "parallel")),
    )(x_patches, w_conv, b_conv)


# ----------------------------------------------------------------------------
# Kernel 2: texture head
#   relu( (1/NP) * a_flat @ v_flat @ W_head + bias )
# with bb batch rows per grid step and the NP*P axis reduced in lane-dense
# chunks into a VMEM accumulator (keeps VMEM bounded for large images).
# ----------------------------------------------------------------------------
def _texture_head_kernel(a_ref, v_ref, w_ref, b_ref, o_ref, acc_ref, *, inv_np):
    # a_ref: (bb, 1, chunk)  v_ref: (bb, chunk, k)
    # w_ref: (k, D)          b_ref: (1, D)           o_ref: (bb, 1, D)
    # acc_ref: VMEM (bb, 1, k) accumulator over the NP*P chunk axis.
    @pl.when(pl.program_id(1) == 0)
    def _init():
        acc_ref[...] = jnp.zeros_like(acc_ref)

    acc_ref[...] += jnp.einsum("bqp,bpk->bqk", a_ref[...], v_ref[...],
                               preferred_element_type=jnp.float32)

    @pl.when(pl.program_id(1) == pl.num_programs(1) - 1)
    def _finalize():
        region = acc_ref[...] * inv_np                                  # (bb, 1, k)
        proj = jnp.einsum("bqk,kd->bqd", region, w_ref[...],
                          preferred_element_type=jnp.float32) + b_ref[...]
        o_ref[...] = jnp.maximum(proj, 0.0)


def texture_head(a_flat, v_flat, w_head, b_row, *, inv_np,
                 batch_block=8, npp_chunk=2048):
    B, _, NPP = a_flat.shape
    k = v_flat.shape[-1]
    D = w_head.shape[-1]

    bb = min(batch_block, B)
    B_pad = pl.cdiv(B, bb) * bb
    if NPP <= npp_chunk:
        chunk, NPP_pad = NPP, NPP                  # single resident block
    else:
        chunk = npp_chunk                          # lane-dense multiple of 128
        NPP_pad = pl.cdiv(NPP, chunk) * chunk
    if B_pad != B or NPP_pad != NPP:
        # Zero padding: padded NP*P entries of a_flat are 0 so they add nothing
        # to the reduction; padded batch rows are sliced off below.
        a_flat = jnp.pad(a_flat, ((0, B_pad - B), (0, 0), (0, NPP_pad - NPP)))
        v_flat = jnp.pad(v_flat, ((0, B_pad - B), (0, NPP_pad - NPP), (0, 0)))

    out = pl.pallas_call(
        functools.partial(_texture_head_kernel, inv_np=inv_np),
        out_shape=jax.ShapeDtypeStruct((B_pad, 1, D), jnp.float32),
        grid=(B_pad // bb, NPP_pad // chunk),
        in_specs=[
            pl.BlockSpec((bb, 1, chunk), lambda nb, c: (nb, 0, c)),
            pl.BlockSpec((bb, chunk, k), lambda nb, c: (nb, c, 0)),
            pl.BlockSpec((k, D), lambda nb, c: (0, 0)),
            pl.BlockSpec((1, D), lambda nb, c: (0, 0)),
        ],
        out_specs=pl.BlockSpec((bb, 1, D), lambda nb, c: (nb, 0, 0)),
        scratch_shapes=[pltpu.VMEM((bb, 1, k), jnp.float32)],
        compiler_params=pltpu.CompilerParams(
            dimension_semantics=("parallel", "arbitrary")),
    )(a_flat, v_flat, w_head, b_row)
    return out[:B, 0, :]


# ----------------------------------------------------------------------------
# Glue: patch-major layout and the Gram-eig basis replacing the per-patch SVD
# ----------------------------------------------------------------------------
def _to_patch_major(x, pooling_size):
    # Matches torch: unfold(2,p_h,p_h).unfold(3,p_w,p_w) -> view -> permute.
    # (B, C, H, W) -> (B, NP, C, p_h*p_w); NP enumerates (i_h, i_w) row-major.
    B, C, H, W = x.shape
    num_h, num_w = H // pooling_size, W // pooling_size
    p_h, p_w = H // num_h, W // num_w
    x = x[:, :, : num_h * p_h, : num_w * p_w]
    x = x.reshape(B, C, num_h, p_h, num_w, p_w).transpose(0, 2, 4, 1, 3, 5)
    return x.reshape(B, num_h * num_w, C, p_h * p_w), num_h * num_w, p_h * p_w


def _topk_eig_basis(grams, texture_dim):
    # A = U S V^T ; A^T A = V S^2 V^T.  eigh returns ascending eigenvalues, so
    # reverse columns to descending singular value and keep min(P, texture_dim).
    # Zero singular directions give A @ v == 0 downstream, matching torch's zero
    # padding.  A deterministic per-column sign (largest-|v| entry positive) is
    # applied because SVD/eigh signs are implementation-defined.
    # TODO(synk): batched PxP symmetric eigendecomposition has no Pallas/Mosaic
    # lowering; it runs as plain XLA (candidate for an in-kernel Jacobi sweep).
    P = grams.shape[-1]
    _, v = jnp.linalg.eigh(grams)
    k_keep = min(P, texture_dim)
    v_top = v[..., ::-1][..., :k_keep]
    idx = jnp.argmax(jnp.abs(v_top), axis=-2, keepdims=True)
    sgn = jnp.sign(jnp.take_along_axis(v_top, idx, axis=-2))
    return v_top * jnp.where(sgn == 0.0, 1.0, sgn), k_keep


# ----------------------------------------------------------------------------
# Full forward pass
# ----------------------------------------------------------------------------
def svd_texture_extractor(x, params, *, texture_dim=32, pooling_size=4):
    B, cin, H, W = x.shape
    w_conv = params["conv_w"].reshape(texture_dim, cin).astype(jnp.float32)
    b_conv = params["conv_b"].reshape(texture_dim, 1).astype(jnp.float32)

    # Patch-major view of the RAW input: the only full XLA pass over x (cheap —
    # Cin channels, vs. the texture_dim-channel activation that is never written).
    x_patches, NP, P = _to_patch_major(x, pooling_size)

    # Fused conv + Gram + row-mean: the dense activation never touches HBM.
    grams, means = fused_conv_gram_mean(x_patches, w_conv, b_conv)

    # torch.svd replacement (see _topk_eig_basis).
    # TODO(synk): torch's per-patch try/except zero-fallback on SVD failure has
    # no analogue here (eigh does not raise data-dependently).
    v_top, k_keep = _topk_eig_basis(grams, texture_dim)

    # Head: relu( mean_patches( mean_rows(A) @ V ) @ W^T + b ); mean over rows
    # comes from the fused kernel, mean over patches is folded into the NP*P
    # contraction, and zero-padded sigma columns drop out of W^T.
    a_flat = means.reshape(B, 1, NP * P)
    v_flat = v_top.reshape(B, NP * P, k_keep)
    w_head = params["proj_w"].T[:k_keep, :].astype(jnp.float32)
    b_row = params["proj_b"].reshape(1, texture_dim).astype(jnp.float32)
    return texture_head(a_flat, v_flat, w_head, b_row, inv_np=1.0 / NP)


# ----------------------------------------------------------------------------
# Pure-JAX references (torch-style math; used for validation)
# ----------------------------------------------------------------------------
def reference_conv(x, params, texture_dim):
    w = params["conv_w"].reshape(texture_dim, x.shape[1])
    return jnp.einsum("oi,bihw->bohw", w, x) + params["conv_b"][None, :, None, None]


def reference_forward(x, params, *, texture_dim=32, pooling_size=4):
    """Independent torch-style reference: own conv, own Gram, own eigh."""
    y = reference_conv(x, params, texture_dim)
    patches, NP, P = _to_patch_major(y, pooling_size)
    grams = jnp.einsum("bjcp,bjcq->bjpq", patches, patches)
    v_top, k_keep = _topk_eig_basis(grams, texture_dim)
    weighted = jnp.einsum("bjcp,bjpk->bjck", patches, v_top)     # == U * S (top-k)
    region = weighted.mean(axis=2).mean(axis=1)
    if k_keep < texture_dim:
        region = jnp.pad(region, ((0, 0), (0, texture_dim - k_keep)))
    return jnp.maximum(region @ params["proj_w"].T + params["proj_b"], 0.0)


if __name__ == "__main__":
    in_channels, texture_dim, pooling_size = 4, 32, 4
    B, H, W = 2, 16, 16

    key = jax.random.PRNGKey(0)
    kx, k1, k2, k3, k4 = jax.random.split(key, 5)
    x = jax.random.normal(kx, (B, in_channels, H, W), dtype=jnp.float32)
    params = {
        # Conv2d(in_channels, texture_dim, kernel_size=1): weight (Cout, Cin, 1, 1)
        "conv_w": jax.random.normal(k1, (texture_dim, in_channels, 1, 1),
                                    dtype=jnp.float32) * 0.1,
        "conv_b": jax.random.normal(k2, (texture_dim,), dtype=jnp.float32) * 0.01,
        # Linear(texture_dim, texture_dim): weight (out, in)
        "proj_w": jax.random.normal(k3, (texture_dim, texture_dim),
                                    dtype=jnp.float32) * 0.1,
        "proj_b": jax.random.normal(k4, (texture_dim,), dtype=jnp.float32) * 0.01,
    }

    # Full forward pass.
    out = jax.block_until_ready(
        svd_texture_extractor(x, params, texture_dim=texture_dim,
                              pooling_size=pooling_size))
    assert out.shape == (B, texture_dim), out.shape

    # --- Check 1: fused conv + patch-Gram + row-mean kernel vs plain XLA. ---
    w_conv = params["conv_w"].reshape(texture_dim, in_channels)
    b_conv = params["conv_b"].reshape(texture_dim, 1)
    x_patches, NP, P = _to_patch_major(x, pooling_size)
    grams_p, means_p = jax.block_until_ready(
        fused_conv_gram_mean(x_patches, w_conv, b_conv))

    y_ref = reference_conv(x, params, texture_dim)
    patches_ref, NP_r, P_r = _to_patch_major(y_ref, pooling_size)
    assert (NP, P) == (NP_r, P_r)
    grams_ref = jnp.einsum("bjcp,bjcq->bjpq", patches_ref, patches_ref)
    means_ref = patches_ref.mean(axis=2)
    # Tolerances allow for the MXU's default (bf16-input) matmul precision,
    # which both sides use but may round intermediates slightly differently.
    assert jnp.allclose(grams_p, grams_ref, rtol=1e-3, atol=1e-3), \
        f"gram mismatch: {jnp.max(jnp.abs(grams_p - grams_ref))}"
    assert jnp.allclose(means_p.reshape(B, NP, P), means_ref,
                        rtol=1e-3, atol=1e-4), \
        f"row-mean mismatch: {jnp.max(jnp.abs(means_p.reshape(B, NP, P) - means_ref))}"

    # --- Check 2: Pallas texture head vs plain-JAX head on the SAME basis. ---
    # Both sides share one eigendecomposition, so this check is unaffected by
    # the inherent singular-vector sign / near-degeneracy ambiguity.
    v_top, k_keep = _topk_eig_basis(grams_p, texture_dim)
    a_flat = means_p.reshape(B, 1, NP * P)
    v_flat = v_top.reshape(B, NP * P, k_keep)
    w_head = params["proj_w"].T[:k_keep, :]
    b_row = params["proj_b"].reshape(1, texture_dim)
    head_p = jax.block_until_ready(
        texture_head(a_flat, v_flat, w_head, b_row, inv_np=1.0 / NP))
    region_ref = jnp.einsum("bjp,bjpk->bk", means_p.reshape(B, NP, P), v_top) / NP
    head_ref = jnp.maximum(region_ref @ w_head + b_row, 0.0)
    assert jnp.allclose(head_p, head_ref, rtol=1e-3, atol=1e-3), \
        f"texture head mismatch: {jnp.max(jnp.abs(head_p - head_ref))}"

    # Fully independent torch-style reference is exercised as a smoke test only:
    # two independent eigendecompositions agree only up to per-column sign /
    # near-degenerate rotations (the same caveat as parity with torch.svd).
    ref_out = jax.block_until_ready(
        reference_forward(x, params, texture_dim=texture_dim,
                          pooling_size=pooling_size))
    assert ref_out.shape == out.shape

    # bf16 input path: blocks are loaded in bf16 and cast to f32 in-register
    # inside the fused kernel (no wrapper-side cast / extra HBM pass).
    out_bf16 = jax.block_until_ready(
        svd_texture_extractor(x.astype(jnp.bfloat16), params,
                              texture_dim=texture_dim,
                              pooling_size=pooling_size))
    assert out_bf16.shape == (B, texture_dim)
    assert bool(jnp.all(jnp.isfinite(out_bf16)))

    print("KERNEL_OK")
</pallas_src>

<mosaic_0001>
module attributes {stable_mosaic.version = 11 : i64} {
  func.func @_fused_conv_gram_mean_kernel(%arg0: i32, %arg1: i32, %arg2: memref<1x16x4x16xf32, #tpu.memory_space<vmem>>, %arg3: memref<32x4xf32, #tpu.memory_space<vmem>>, %arg4: memref<32x1xf32, #tpu.memory_space<vmem>>, %arg5: memref<1x16x16x16xf32, #tpu.memory_space<vmem>>, %arg6: memref<1x16x1x16xf32, #tpu.memory_space<vmem>>) attributes {dimension_semantics = [#tpu.dimension_semantics<parallel>, #tpu.dimension_semantics<parallel>], iteration_bounds = array<i64: 2, 1>, scalar_prefetch = 0 : i64, scratch_operands = 0 : i64, tpu.core_type = #tpu.core_type<tc>, window_params = [{transform_indices = @transform_0, window_bounds = array<i64: 1, 16, 4, 16>}, {pipeline_mode = #tpu.pipeline_mode<synchronous>, transform_indices = @transform_1, window_bounds = array<i64: 32, 4>}, {pipeline_mode = #tpu.pipeline_mode<synchronous>, transform_indices = @transform_2, window_bounds = array<i64: 32, 1>}, {transform_indices = @transform_3, window_bounds = array<i64: 1, 16, 16, 16>}, {transform_indices = @transform_4, window_bounds = array<i64: 1, 16, 1, 16>}]} {
    %c0 = arith.constant 0 : index
    %c0_0 = arith.constant 0 : index
    %0 = vector.load %arg3[%c0, %c0_0] : memref<32x4xf32, #tpu.memory_space<vmem>>, vector<32x4xf32>
    %c0_1 = arith.constant 0 : index
    %c0_2 = arith.constant 0 : index
    %1 = vector.load %arg4[%c0_1, %c0_2] : memref<32x1xf32, #tpu.memory_space<vmem>>, vector<32x1xf32>
    %c0_3 = arith.constant 0 : index
    %c0_4 = arith.constant 0 : index
    %c0_5 = arith.constant 0 : index
    %c0_6 = arith.constant 0 : index
    %2 = vector.load %arg2[%c0_3, %c0_4, %c0_5, %c0_6] : memref<1x16x4x16xf32, #tpu.memory_space<vmem>>, vector<1x16x4x16xf32>
    %3 = vector.shape_cast %2 : vector<1x16x4x16xf32> to vector<16x4x16xf32>
    %4 = vector.extract_strided_slice %3 {offsets = [0, 0, 0], sizes = [1, 4, 16], strides = [1, 1, 1]} : vector<16x4x16xf32> to vector<1x4x16xf32>
    %5 = vector.shape_cast %4 : vector<1x4x16xf32> to vector<4x16xf32>
    %cst = arith.constant dense<0.000000e+00> : vector<32x16xf32>
    %6 = tpu.matmul %0, %5, %cst {dimension_numbers = #tpu.dot_dimension_numbers<[1], [0], [0], [1], [0, 0, 1, 1], [], []>} : vector<32x4xf32>, vector<4x16xf32>, vector<32x16xf32> -> vector<32x16xf32>
    %7 = vector.broadcast %1 : vector<32x1xf32> to vector<32x16xf32>
    %8 = arith.addf %6, %7 : vector<32x16xf32>
    "tpu.trace_start"() <{level = 10 : i32, message = "cp,cq->pq"}> : () -> ()
    %cst_7 = arith.constant dense<0.000000e+00> : vector<16x16xf32>
    %9 = tpu.matmul %8, %8, %cst_7 {dimension_numbers = #tpu.dot_dimension_numbers<[0], [0], [1], [1], [0, 1, 1, 1], [], []>} : vector<32x16xf32>, vector<32x16xf32>, vector<16x16xf32> -> vector<16x16xf32>
    "tpu.trace_stop"() : () -> ()
    %c0_8 = arith.constant 0 : index
    %c0_9 = arith.constant 0 : index
    %c0_10 = arith.constant 0 : index
    %c0_11 = arith.constant 0 : index
    %10 = vector.load %arg5[%c0_8, %c0_9, %c0_10, %c0_11] : memref<1x16x16x16xf32, #tpu.memory_space<vmem>>, vector<1x1x16x16xf32>
    %11 = vector.shape_cast %10 : vector<1x1x16x16xf32> to vector<16x16xf32>
    %12 = vector.shape_cast %9 : vector<16x16xf32> to vector<1x1x16x16xf32>
    tpu.vector_store %arg5[%c0_8, %c0_9, %c0_10, %c0_11], %12 {strides = array<i32>} : memref<1x16x16x16xf32, #tpu.memory_space<vmem>>, vector<1x1x16x16xf32>,
    %cst_12 = arith.constant dense<0.000000e+00> : vector<16xf32>
    %13 = vector.multi_reduction <add>, %8, %cst_12 [0] : vector<32x16xf32> to vector<16xf32>
    %14 = vector.shape_cast %13 : vector<16xf32> to vector<1x16xf32>
    %cst_13 = arith.constant 3.200000e+01 : f32
    %15 = vector.broadcast %cst_13 : f32 to vector<1x16xf32>
    %16 = arith.divf %14, %15 : vector<1x16xf32>
    %c0_14 = arith.constant 0 : index
    %c0_15 = arith.constant 0 : index
    %c0_16 = arith.constant 0 : index
    %c0_17 = arith.constant 0 : index
    %17 = vector.load %arg6[%c0_14, %c0_15, %c0_16, %c0_17] : memref<1x16x1x16xf32, #tpu.memory_space<vmem>>, vector<1x1x1x16xf32>
    %18 = vector.shape_cast %17 : vector<1x1x1x16xf32> to vector<1x16xf32>
    %19 = vector.shape_cast %16 : vector<1x16xf32> to vector<1x1x1x16xf32>
    tpu.vector_store %arg6[%c0_14, %c0_15, %c0_16, %c0_17], %19 {strides = array<i32>} : memref<1x16x1x16xf32, #tpu.memory_space<vmem>>, vector<1x1x1x16xf32>,
    %20 = vector.extract_strided_slice %3 {offsets = [1, 0, 0], sizes = [1, 4, 16], strides = [1, 1, 1]} : vector<16x4x16xf32> to vector<1x4x16xf32>
    %21 = vector.shape_cast %20 : vector<1x4x16xf32> to vector<4x16xf32>
    %cst_18 = arith.constant dense<0.000000e+00> : vector<32x16xf32>
    %22 = tpu.matmul %0, %21, %cst_18 {dimension_numbers = #tpu.dot_dimension_numbers<[1], [0], [0], [1], [0, 0, 1, 1], [], []>} : vector<32x4xf32>, vector<4x16xf32>, vector<32x16xf32> -> vector<32x16xf32>
    %23 = vector.broadcast %1 : vector<32x1xf32> to vector<32x16xf32>
    %24 = arith.addf %22, %23 : vector<32x16xf32>
    "tpu.trace_start"() <{level = 10 : i32, message = "cp,cq->pq"}> : () -> ()
    %cst_19 = arith.constant dense<0.000000e+00> : vector<16x16xf32>
    %25 = tpu.matmul %24, %24, %cst_19 {dimension_numbers = #tpu.dot_dimension_numbers<[0], [0], [1], [1], [0, 1, 1, 1], [], []>} : vector<32x16xf32>, vector<32x16xf32>, vector<16x16xf32> -> vector<16x16xf32>
    "tpu.trace_stop"() : () -> ()
    %c0_20 = arith.constant 0 : index
    %c1 = arith.constant 1 : index
    %c0_21 = arith.constant 0 : index
    %c0_22 = arith.constant 0 : index
    %26 = vector.load %arg5[%c0_20, %c1, %c0_21, %c0_22] : memref<1x16x16x16xf32, #tpu.memory_space<vmem>>, vector<1x1x16x16xf32>
    %27 = vector.shape_cast %26 : vector<1x1x16x16xf32> to vector<16x16xf32>
    %28 = vector.shape_cast %25 : vector<16x16xf32> to vector<1x1x16x16xf32>
    tpu.vector_store %arg5[%c0_20, %c1, %c0_21, %c0_22], %28 {strides = array<i32>} : memref<1x16x16x16xf32, #tpu.memory_space<vmem>>, vector<1x1x16x16xf32>,
    %cst_23 = arith.constant dense<0.000000e+00> : vector<16xf32>
    %29 = vector.multi_reduction <add>, %24, %cst_23 [0] : vector<32x16xf32> to vector<16xf32>
    %30 = vector.shape_cast %29 : vector<16xf32> to vector<1x16xf32>
    %cst_24 = arith.constant 3.200000e+01 : f32
    %31 = vector.broadcast %cst_24 : f32 to vector<1x16xf32>
    %32 = arith.divf %30, %31 : vector<1x16xf32>
    %c0_25 = arith.constant 0 : index
    %c1_26 = arith.constant 1 : index
    %c0_27 = arith.constant 0 : index
    %c0_28 = arith.constant 0 : index
    %33 = vector.load %arg6[%c0_25, %c1_26, %c0_27, %c0_28] : memref<1x16x1x16xf32, #tpu.memory_space<vmem>>, vector<1x1x1x16xf32>
    %34 = vector.shape_cast %33 : vector<1x1x1x16xf32> to vector<1x16xf32>
    %35 = vector.shape_cast %32 : vector<1x16xf32> to vector<1x1x1x16xf32>
    tpu.vector_store %arg6[%c0_25, %c1_26, %c0_27, %c0_28], %35 {strides = array<i32>} : memref<1x16x1x16xf32, #tpu.memory_space<vmem>>, vector<1x1x1x16xf32>,
    %36 = vector.extract_strided_slice %3 {offsets = [2, 0, 0], sizes = [1, 4, 16], strides = [1, 1, 1]} : vector<16x4x16xf32> to vector<1x4x16xf32>
    %37 = vector.shape_cast %36 : vector<1x4x16xf32> to vector<4x16xf32>
    %cst_29 = arith.constant dense<0.000000e+00> : vector<32x16xf32>
    %38 = tpu.matmul %0, %37, %cst_29 {dimension_numbers = #tpu.dot_dimension_numbers<[1], [0], [0], [1], [0, 0, 1, 1], [], []>} : vector<32x4xf32>, vector<4x16xf32>, vector<32x16xf32> -> vector<32x16xf32>
    %39 = vector.broadcast %1 : vector<32x1xf32> to vector<32x16xf32>
    %40 = arith.addf %38, %39 : vector<32x16xf32>
    "tpu.trace_start"() <{level = 10 : i32, message = "cp,cq->pq"}> : () -> ()
    %cst_30 = arith.constant dense<0.000000e+00> : vector<16x16xf32>
    %41 = tpu.matmul %40, %40, %cst_30 {dimension_numbers = #tpu.dot_dimension_numbers<[0], [0], [1], [1], [0, 1, 1, 1], [], []>} : vector<32x16xf32>, vector<32x16xf32>, vector<16x16xf32> -> vector<16x16xf32>
    "tpu.trace_stop"() : () -> ()
    %c0_31 = arith.constant 0 : index
    %c2 = arith.constant 2 : index
    %c0_32 = arith.constant 0 : index
    %c0_33 = arith.constant 0 : index
    %42 = vector.load %arg5[%c0_31, %c2, %c0_32, %c0_33] : memref<1x16x16x16xf32, #tpu.memory_space<vmem>>, vector<1x1x16x16xf32>
    %43 = vector.shape_cast %42 : vector<1x1x16x16xf32> to vector<16x16xf32>
    %44 = vector.shape_cast %41 : vector<16x16xf32> to vector<1x1x16x16xf32>
    tpu.vector_store %arg5[%c0_31, %c2, %c0_32, %c0_33], %44 {strides = array<i32>} : memref<1x16x16x16xf32, #tpu.memory_space<vmem>>, vector<1x1x16x16xf32>,
    %cst_34 = arith.constant dense<0.000000e+00> : vector<16xf32>
    %45 = vector.multi_reduction <add>, %40, %cst_34 [0] : vector<32x16xf32> to vector<16xf32>
    %46 = vector.shape_cast %45 : vector<16xf32> to vector<1x16xf32>
    %cst_35 = arith.constant 3.200000e+01 : f32
    %47 = vector.broadcast %cst_35 : f32 to vector<1x16xf32>
    %48 = arith.divf %46, %47 : vector<1x16xf32>
    %c0_36 = arith.constant 0 : index
    %c2_37 = arith.constant 2 : index
    %c0_38 = arith.constant 0 : index
    %c0_39 = arith.constant 0 : index
    %49 = vector.load %arg6[%c0_36, %c2_37, %c0_38, %c0_39] : memref<1x16x1x16xf32, #tpu.memory_space<vmem>>, vector<1x1x1x16xf32>
    %50 = vector.shape_cast %49 : vector<1x1x1x16xf32> to vector<1x16xf32>
    %51 = vector.shape_cast %48 : vector<1x16xf32> to vector<1x1x1x16xf32>
    tpu.vector_store %arg6[%c0_36, %c2_37, %c0_38, %c0_39], %51 {strides = array<i32>} : memref<1x16x1x16xf32, #tpu.memory_space<vmem>>, vector<1x1x1x16xf32>,
    %52 = vector.extract_strided_slice %3 {offsets = [3, 0, 0], sizes = [1, 4, 16], strides = [1, 1, 1]} : vector<16x4x16xf32> to vector<1x4x16xf32>
    %53 = vector.shape_cast %52 : vector<1x4x16xf32> to vector<4x16xf32>
    %cst_40 = arith.constant dense<0.000000e+00> : vector<32x16xf32>
    %54 = tpu.matmul %0, %53, %cst_40 {dimension_numbers = #tpu.dot_dimension_numbers<[1], [0], [0], [1], [0, 0, 1, 1], [], []>} : vector<32x4xf32>, vector<4x16xf32>, vector<32x16xf32> -> vector<32x16xf32>
    %55 = vector.broadcast %1 : vector<32x1xf32> to vector<32x16xf32>
    %56 = arith.addf %54, %55 : vector<32x16xf32>
    "tpu.trace_start"() <{level = 10 : i32, message = "cp,cq->pq"}> : () -> ()
    %cst_41 = arith.constant dense<0.000000e+00> : vector<16x16xf32>
    %57 = tpu.matmul %56, %56, %cst_41 {dimension_numbers = #tpu.dot_dimension_numbers<[0], [0], [1], [1], [0, 1, 1, 1], [], []>} : vector<32x16xf32>, vector<32x16xf32>, vector<16x16xf32> -> vector<16x16xf32>
    "tpu.trace_stop"() : () -> ()
    %c0_42 = arith.constant 0 : index
    %c3 = arith.constant 3 : index
    %c0_43 = arith.constant 0 : index
    %c0_44 = arith.constant 0 : index
    %58 = vector.load %arg5[%c0_42, %c3, %c0_43, %c0_44] : memref<1x16x16x16xf32, #tpu.memory_space<vmem>>, vector<1x1x16x16xf32>
    %59 = vector.shape_cast %58 : vector<1x1x16x16xf32> to vector<16x16xf32>
    %60 = vector.shape_cast %57 : vector<16x16xf32> to vector<1x1x16x16xf32>
    tpu.vector_store %arg5[%c0_42, %c3, %c0_43, %c0_44], %60 {strides = array<i32>} : memref<1x16x16x16xf32, #tpu.memory_space<vmem>>, vector<1x1x16x16xf32>,
    %cst_45 = arith.constant dense<0.000000e+00> : vector<16xf32>
    %61 = vector.multi_reduction <add>, %56, %cst_45 [0] : vector<32x16xf32> to vector<16xf32>
    %62 = vector.shape_cast %61 : vector<16xf32> to vector<1x16xf32>
    %cst_46 = arith.constant 3.200000e+01 : f32
    %63 = vector.broadcast %cst_46 : f32 to vector<1x16xf32>
    %64 = arith.divf %62, %63 : vector<1x16xf32>
    %c0_47 = arith.constant 0 : index
    %c3_48 = arith.constant 3 : index
    %c0_49 = arith.constant 0 : index
    %c0_50 = arith.constant 0 : index
    %65 = vector.load %arg6[%c0_47, %c3_48, %c0_49, %c0_50] : memref<1x16x1x16xf32, #tpu.memory_space<vmem>>, vector<1x1x1x16xf32>
    %66 = vector.shape_cast %65 : vector<1x1x1x16xf32> to vector<1x16xf32>
    %67 = vector.shape_cast %64 : vector<1x16xf32> to vector<1x1x1x16xf32>
    tpu.vector_store %arg6[%c0_47, %c3_48, %c0_49, %c0_50], %67 {strides = array<i32>} : memref<1x16x1x16xf32, #tpu.memory_space<vmem>>, vector<1x1x1x16xf32>,
    %68 = vector.extract_strided_slice %3 {offsets = [4, 0, 0], sizes = [1, 4, 16], strides = [1, 1, 1]} : vector<16x4x16xf32> to vector<1x4x16xf32>
    %69 = vector.shape_cast %68 : vector<1x4x16xf32> to vector<4x16xf32>
    %cst_51 = arith.constant dense<0.000000e+00> : vector<32x16xf32>
    %70 = tpu.matmul %0, %69, %cst_51 {dimension_numbers = #tpu.dot_dimension_numbers<[1], [0], [0], [1], [0, 0, 1, 1], [], []>} : vector<32x4xf32>, vector<4x16xf32>, vector<32x16xf32> -> vector<32x16xf32>
    %71 = vector.broadcast %1 : vector<32x1xf32> to vector<32x16xf32>
    %72 = arith.addf %70, %71 : vector<32x16xf32>
    "tpu.trace_start"() <{level = 10 : i32, message = "cp,cq->pq"}> : () -> ()
    %cst_52 = arith.constant dense<0.000000e+00> : vector<16x16xf32>
    %73 = tpu.matmul %72, %72, %cst_52 {dimension_numbers = #tpu.dot_dimension_numbers<[0], [0], [1], [1], [0, 1, 1, 1], [], []>} : vector<32x16xf32>, vector<32x16xf32>, vector<16x16xf32> -> vector<16x16xf32>
    "tpu.trace_stop"() : () -> ()
    %c0_53 = arith.constant 0 : index
    %c4 = arith.constant 4 : index
    %c0_54 = arith.constant 0 : index
    %c0_55 = arith.constant 0 : index
    %74 = vector.load %arg5[%c0_53, %c4, %c0_54, %c0_55] : memref<1x16x16x16xf32, #tpu.memory_space<vmem>>, vector<1x1x16x16xf32>
    %75 = vector.shape_cast %74 : vector<1x1x16x16xf32> to vector<16x16xf32>
    %76 = vector.shape_cast %73 : vector<16x16xf32> to vector<1x1x16x16xf32>
    tpu.vector_store %arg5[%c0_53, %c4, %c0_54, %c0_55], %76 {strides = array<i32>} : memref<1x16x16x16xf32, #tpu.memory_space<vmem>>, vector<1x1x16x16xf32>,
    %cst_56 = arith.constant dense<0.000000e+00> : vector<16xf32>
    %77 = vector.multi_reduction <add>, %72, %cst_56 [0] : vector<32x16xf32> to vector<16xf32>
    %78 = vector.shape_cast %77 : vector<16xf32> to vector<1x16xf32>
    %cst_57 = arith.constant 3.200000e+01 : f32
    %79 = vector.broadcast %cst_57 : f32 to vector<1x16xf32>
    %80 = arith.divf %78, %79 : vector<1x16xf32>
    %c0_58 = arith.constant 0 : index
    %c4_59 = arith.constant 4 : index
    %c0_60 = arith.constant 0 : index
    %c0_61 = arith.constant 0 : index
    %81 = vector.load %arg6[%c0_58, %c4_59, %c0_60, %c0_61] : memref<1x16x1x16xf32, #tpu.memory_space<vmem>>, vector<1x1x1x16xf32>
    %82 = vector.shape_cast %81 : vector<1x1x1x16xf32> to vector<1x16xf32>
    %83 = vector.shape_cast %80 : vector<1x16xf32> to vector<1x1x1x16xf32>
    tpu.vector_store %arg6[%c0_58, %c4_59, %c0_60, %c0_61], %83 {strides = array<i32>} : memref<1x16x1x16xf32, #tpu.memory_space<vmem>>, vector<1x1x1x16xf32>,
    %84 = vector.extract_strided_slice %3 {offsets = [5, 0, 0], sizes = [1, 4, 16], strides = [1, 1, 1]} : vector<16x4x16xf32> to vector<1x4x16xf32>
    %85 = vector.shape_cast %84 : vector<1x4x16xf32> to vector<4x16xf32>
    %cst_62 = arith.constant dense<0.000000e+00> : vector<32x16xf32>
    %86 = tpu.matmul %0, %85, %cst_62 {dimension_numbers = #tpu.dot_dimension_numbers<[1], [0], [0], [1], [0, 0, 1, 1], [], []>} : vector<32x4xf32>, vector<4x16xf32>, vector<32x16xf32> -> vector<32x16xf32>
    %87 = vector.broadcast %1 : vector<32x1xf32> to vector<32x16xf32>
    %88 = arith.addf %86, %87 : vector<32x16xf32>
    "tpu.trace_start"() <{level = 10 : i32, message = "cp,cq->pq"}> : () -> ()
    %cst_63 = arith.constant dense<0.000000e+00> : vector<16x16xf32>
    %89 = tpu.matmul %88, %88, %cst_63 {dimension_numbers = #tpu.dot_dimension_numbers<[0], [0], [1], [1], [0, 1, 1, 1], [], []>} : vector<32x16xf32>, vector<32x16xf32>, vector<16x16xf32> -> vector<16x16xf32>
    "tpu.trace_stop"() : () -> ()
    %c0_64 = arith.constant 0 : index
    %c5 = arith.constant 5 : index
    %c0_65 = arith.constant 0 : index
    %c0_66 = arith.constant 0 : index
    %90 = vector.load %arg5[%c0_64, %c5, %c0_65, %c0_66] : memref<1x16x16x16xf32, #tpu.memory_space<vmem>>, vector<1x1x16x16xf32>
    %91 = vector.shape_cast %90 : vector<1x1x16x16xf32> to vector<16x16xf32>
    %92 = vector.shape_cast %89 : vector<16x16xf32> to vector<1x1x16x16xf32>
    tpu.vector_store %arg5[%c0_64, %c5, %c0_65, %c0_66], %92 {strides = array<i32>} : memref<1x16x16x16xf32, #tpu.memory_space<vmem>>, vector<1x1x16x16xf32>,
    %cst_67 = arith.constant dense<0.000000e+00> : vector<16xf32>
    %93 = vector.multi_reduction <add>, %88, %cst_67 [0] : vector<32x16xf32> to vector<16xf32>
    %94 = vector.shape_cast %93 : vector<16xf32> to vector<1x16xf32>
    %cst_68 = arith.constant 3.200000e+01 : f32
    %95 = vector.broadcast %cst_68 : f32 to vector<1x16xf32>
    %96 = arith.divf %94, %95 : vector<1x16xf32>
    %c0_69 = arith.constant 0 : index
    %c5_70 = arith.constant 5 : index
    %c0_71 = arith.constant 0 : index
    %c0_72 = arith.constant 0 : index
    %97 = vector.load %arg6[%c0_69, %c5_70, %c0_71, %c0_72] : memref<1x16x1x16xf32, #tpu.memory_space<vmem>>, vector<1x1x1x16xf32>
    %98 = vector.shape_cast %97 : vector<1x1x1x16xf32> to vector<1x16xf32>
    %99 = vector.shape_cast %96 : vector<1x16xf32> to vector<1x1x1x16xf32>
    tpu.vector_store %arg6[%c0_69, %c5_70, %c0_71, %c0_72], %99 {strides = array<i32>} : memref<1x16x1x16xf32, #tpu.memory_space<vmem>>, vector<1x1x1x16xf32>,
    %100 = vector.extract_strided_slice %3 {offsets = [6, 0, 0], sizes = [1, 4, 16], strides = [1, 1, 1]} : vector<16x4x16xf32> to vector<1x4x16xf32>
    %101 = vector.shape_cast %100 : vector<1x4x16xf32> to vector<4x16xf32>
    %cst_73 = arith.constant dense<0.000000e+00> : vector<32x16xf32>
    %102 = tpu.matmul %0, %101, %cst_73 {dimension_numbers = #tpu.dot_dimension_numbers<[1], [0], [0], [1], [0, 0, 1, 1], [], []>} : vector<32x4xf32>, vector<4x16xf32>, vector<32x16xf32> -> vector<32x16xf32>
    %103 = vector.broadcast %1 : vector<32x1xf32> to vector<32x16xf32>
    %104 = arith.addf %102, %103 : vector<32x16xf32>
    "tpu.trace_start"() <{level = 10 : i32, message = "cp,cq->pq"}> : () -> ()
    %cst_74 = arith.constant dense<0.000000e+00> : vector<16x16xf32>
    %105 = tpu.matmul %104, %104, %cst_74 {dimension_numbers = #tpu.dot_dimension_numbers<[0], [0], [1], [1], [0, 1, 1, 1], [], []>} : vector<32x16xf32>, vector<32x16xf32>, vector<16x16xf32> -> vector<16x16xf32>
    "tpu.trace_stop"() : () -> ()
    %c0_75 = arith.constant 0 : index
    %c6 = arith.constant 6 : index
    %c0_76 = arith.constant 0 : index
    %c0_77 = arith.constant 0 : index
    %106 = vector.load %arg5[%c0_75, %c6, %c0_76, %c0_77] : memref<1x16x16x16xf32, #tpu.memory_space<vmem>>, vector<1x1x16x16xf32>
    %107 = vector.shape_cast %106 : vector<1x1x16x16xf32> to vector<16x16xf32>
    %108 = vector.shape_cast %105 : vector<16x16xf32> to vector<1x1x16x16xf32>
    tpu.vector_store %arg5[%c0_75, %c6, %c0_76, %c0_77], %108 {strides = array<i32>} : memref<1x16x16x16xf32, #tpu.memory_space<vmem>>, vector<1x1x16x16xf32>,
    %cst_78 = arith.constant dense<0.000000e+00> : vector<16xf32>
    %109 = vector.multi_reduction <add>, %104, %cst_78 [0] : vector<32x16xf32> to vector<16xf32>
    %110 = vector.shape_cast %109 : vector<16xf32> to vector<1x16xf32>
    %cst_79 = arith.constant 3.200000e+01 : f32
    %111 = vector.broadcast %cst_79 : f32 to vector<1x16xf32>
    %112 = arith.divf %110, %111 : vector<1x16xf32>
    %c0_80 = arith.constant 0 : index
    %c6_81 = arith.constant 6 : index
    %c0_82 = arith.constant 0 : index
    %c0_83 = arith.constant 0 : index
    %113 = vector.load %arg6[%c0_80, %c6_81, %c0_82, %c0_83] : memref<1x16x1x16xf32, #tpu.memory_space<vmem>>, vector<1x1x1x16xf32>
    %114 = vector.shape_cast %113 : vector<1x1x1x16xf32> to vector<1x16xf32>
    %115 = vector.shape_cast %112 : vector<1x16xf32> to vector<1x1x1x16xf32>
    tpu.vector_store %arg6[%c0_80, %c6_81, %c0_82, %c0_83], %115 {strides = array<i32>} : memref<1x16x1x16xf32, #tpu.memory_space<vmem>>, vector<1x1x1x16xf32>,
    %116 = vector.extract_strided_slice %3 {offsets = [7, 0, 0], sizes = [1, 4, 16], strides = [1, 1, 1]} : vector<16x4x16xf32> to vector<1x4x16xf32>
    %117 = vector.shape_cast %116 : vector<1x4x16xf32> to vector<4x16xf32>
    %cst_84 = arith.constant dense<0.000000e+00> : vector<32x16xf32>
    %118 = tpu.matmul %0, %117, %cst_84 {dimension_numbers = #tpu.dot_dimension_numbers<[1], [0], [0], [1], [0, 0, 1, 1], [], []>} : vector<32x4xf32>, vector<4x16xf32>, vector<32x16xf32> -> vector<32x16xf32>
    %119 = vector.broadcast %1 : vector<32x1xf32> to vector<32x16xf32>
    %120 = arith.addf %118, %119 : vector<32x16xf32>
    "tpu.trace_start"() <{level = 10 : i32, message = "cp,cq->pq"}> : () -> ()
    %cst_85 = arith.constant dense<0.000000e+00> : vector<16x16xf32>
    %121 = tpu.matmul %120, %120, %cst_85 {dimension_numbers = #tpu.dot_dimension_numbers<[0], [0], [1], [1], [0, 1, 1, 1], [], []>} : vector<32x16xf32>, vector<32x16xf32>, vector<16x16xf32> -> vector<16x16xf32>
    "tpu.trace_stop"() : () -> ()
    %c0_86 = arith.constant 0 : index
    %c7 = arith.constant 7 : index
    %c0_87 = arith.constant 0 : index
    %c0_88 = arith.constant 0 : index
    %122 = vector.load %arg5[%c0_86, %c7, %c0_87, %c0_88] : memref<1x16x16x16xf32, #tpu.memory_space<vmem>>, vector<1x1x16x16xf32>
    %123 = vector.shape_cast %122 : vector<1x1x16x16xf32> to vector<16x16xf32>
    %124 = vector.shape_cast %121 : vector<16x16xf32> to vector<1x1x16x16xf32>
    tpu.vector_store %arg5[%c0_86, %c7, %c0_87, %c0_88], %124 {strides = array<i32>} : memref<1x16x16x16xf32, #tpu.memory_space<vmem>>, vector<1x1x16x16xf32>,
    %cst_89 = arith.constant dense<0.000000e+00> : vector<16xf32>
    %125 = vector.multi_reduction <add>, %120, %cst_89 [0] : vector<32x16xf32> to vector<16xf32>
    %126 = vector.shape_cast %125 : vector<16xf32> to vector<1x16xf32>
    %cst_90 = arith.constant 3.200000e+01 : f32
    %127 = vector.broadcast %cst_90 : f32 to vector<1x16xf32>
    %128 = arith.divf %126, %127 : vector<1x16xf32>
    %c0_91 = arith.constant 0 : index
    %c7_92 = arith.constant 7 : index
    %c0_93 = arith.constant 0 : index
    %c0_94 = arith.constant 0 : index
    %129 = vector.load %arg6[%c0_91, %c7_92, %c0_93, %c0_94] : memref<1x16x1x16xf32, #tpu.memory_space<vmem>>, vector<1x1x1x16xf32>
    %130 = vector.shape_cast %129 : vector<1x1x1x16xf32> to vector<1x16xf32>
    %131 = vector.shape_cast %128 : vector<1x16xf32> to vector<1x1x1x16xf32>
    tpu.vector_store %arg6[%c0_91, %c7_92, %c0_93, %c0_94], %131 {strides = array<i32>} : memref<1x16x1x16xf32, #tpu.memory_space<vmem>>, vector<1x1x1x16xf32>,
    %132 = vector.extract_strided_slice %3 {offsets = [8, 0, 0], sizes = [1, 4, 16], strides = [1, 1, 1]} : vector<16x4x16xf32> to vector<1x4x16xf32>
    %133 = vector.shape_cast %132 : vector<1x4x16xf32> to vector<4x16xf32>
    %cst_95 = arith.constant dense<0.000000e+00> : vector<32x16xf32>
    %134 = tpu.matmul %0, %133, %cst_95 {dimension_numbers = #tpu.dot_dimension_numbers<[1], [0], [0], [1], [0, 0, 1, 1], [], []>} : vector<32x4xf32>, vector<4x16xf32>, vector<32x16xf32> -> vector<32x16xf32>
    %135 = vector.broadcast %1 : vector<32x1xf32> to vector<32x16xf32>
    %136 = arith.addf %134, %135 : vector<32x16xf32>
    "tpu.trace_start"() <{level = 10 : i32, message = "cp,cq->pq"}> : () -> ()
    %cst_96 = arith.constant dense<0.000000e+00> : vector<16x16xf32>
    %137 = tpu.matmul %136, %136, %cst_96 {dimension_numbers = #tpu.dot_dimension_numbers<[0], [0], [1], [1], [0, 1, 1, 1], [], []>} : vector<32x16xf32>, vector<32x16xf32>, vector<16x16xf32> -> vector<16x16xf32>
    "tpu.trace_stop"() : () -> ()
    %c0_97 = arith.constant 0 : index
    %c8 = arith.constant 8 : index
    %c0_98 = arith.constant 0 : index
    %c0_99 = arith.constant 0 : index
    %138 = vector.load %arg5[%c0_97, %c8, %c0_98, %c0_99] : memref<1x16x16x16xf32, #tpu.memory_space<vmem>>, vector<1x1x16x16xf32>
    %139 = vector.shape_cast %138 : vector<1x1x16x16xf32> to vector<16x16xf32>
    %140 = vector.shape_cast %137 : vector<16x16xf32> to vector<1x1x16x16xf32>
    tpu.vector_store %arg5[%c0_97, %c8, %c0_98, %c0_99], %140 {strides = array<i32>} : memref<1x16x16x16xf32, #tpu.memory_space<vmem>>, vector<1x1x16x16xf32>,
    %cst_100 = arith.constant dense<0.000000e+00> : vector<16xf32>
    %141 = vector.multi_reduction <add>, %136, %cst_100 [0] : vector<32x16xf32> to vector<16xf32>
    %142 = vector.shape_cast %141 : vector<16xf32> to vector<1x16xf32>
    %cst_101 = arith.constant 3.200000e+01 : f32
    %143 = vector.broadcast %cst_101 : f32 to vector<1x16xf32>
    %144 = arith.divf %142, %143 : vector<1x16xf32>
    %c0_102 = arith.constant 0 : index
    %c8_103 = arith.constant 8 : index
    %c0_104 = arith.constant 0 : index
    %c0_105 = arith.constant 0 : index
    %145 = vector.load %arg6[%c0_102, %c8_103, %c0_104, %c0_105] : memref<1x16x1x16xf32, #tpu.memory_space<vmem>>, vector<1x1x1x16xf32>
    %146 = vector.shape_cast %145 : vector<1x1x1x16xf32> to vector<1x16xf32>
    %147 = vector.shape_cast %144 : vector<1x16xf32> to vector<1x1x1x16xf32>
    tpu.vector_store %arg6[%c0_102, %c8_103, %c0_104, %c0_105], %147 {strides = array<i32>} : memref<1x16x1x16xf32, #tpu.memory_space<vmem>>, vector<1x1x1x16xf32>,
    %148 = vector.extract_strided_slice %3 {offsets = [9, 0, 0], sizes = [1, 4, 16], strides = [1, 1, 1]} : vector<16x4x16xf32> to vector<1x4x16xf32>
    %149 = vector.shape_cast %148 : vector<1x4x16xf32> to vector<4x16xf32>
    %cst_106 = arith.constant dense<0.000000e+00> : vector<32x16xf32>
    %150 = tpu.matmul %0, %149, %cst_106 {dimension_numbers = #tpu.dot_dimension_numbers<[1], [0], [0], [1], [0, 0, 1, 1], [], []>} : vector<32x4xf32>, vector<4x16xf32>, vector<32x16xf32> -> vector<32x16xf32>
    %151 = vector.broadcast %1 : vector<32x1xf32> to vector<32x16xf32>
    %152 = arith.addf %150, %151 : vector<32x16xf32>
    "tpu.trace_start"() <{level = 10 : i32, message = "cp,cq->pq"}> : () -> ()
    %cst_107 = arith.constant dense<0.000000e+00> : vector<16x16xf32>
    %153 = tpu.matmul %152, %152, %cst_107 {dimension_numbers = #tpu.dot_dimension_numbers<[0], [0], [1], [1], [0, 1, 1, 1], [], []>} : vector<32x16xf32>, vector<32x16xf32>, vector<16x16xf32> -> vector<16x16xf32>
    "tpu.trace_stop"() : () -> ()
    %c0_108 = arith.constant 0 : index
    %c9 = arith.constant 9 : index
    %c0_109 = arith.constant 0 : index
    %c0_110 = arith.constant 0 : index
    %154 = vector.load %arg5[%c0_108, %c9, %c0_109, %c0_110] : memref<1x16x16x16xf32, #tpu.memory_space<vmem>>, vector<1x1x16x16xf32>
    %155 = vector.shape_cast %154 : vector<1x1x16x16xf32> to vector<16x16xf32>
    %156 = vector.shape_cast %153 : vector<16x16xf32> to vector<1x1x16x16xf32>
    tpu.vector_store %arg5[%c0_108, %c9, %c0_109, %c0_110], %156 {strides = array<i32>} : memref<1x16x16x16xf32, #tpu.memory_space<vmem>>, vector<1x1x16x16xf32>,
    %cst_111 = arith.constant dense<0.000000e+00> : vector<16xf32>
    %157 = vector.multi_reduction <add>, %152, %cst_111 [0] : vector<32x16xf32> to vector<16xf32>
    %158 = vector.shape_cast %157 : vector<16xf32> to vector<1x16xf32>
    %cst_112 = arith.constant 3.200000e+01 : f32
    %159 = vector.broadcast %cst_112 : f32 to vector<1x16xf32>
    %160 = arith.divf %158, %159 : vector<1x16xf32>
    %c0_113 = arith.constant 0 : index
    %c9_114 = arith.constant 9 : index
    %c0_115 = arith.constant 0 : index
    %c0_116 = arith.constant 0 : index
    %161 = vector.load %arg6[%c0_113, %c9_114, %c0_115, %c0_116] : memref<1x16x1x16xf32, #tpu.memory_space<vmem>>, vector<1x1x1x16xf32>
    %162 = vector.shape_cast %161 : vector<1x1x1x16xf32> to vector<1x16xf32>
    %163 = vector.shape_cast %160 : vector<1x16xf32> to vector<1x1x1x16xf32>
    tpu.vector_store %arg6[%c0_113, %c9_114, %c0_115, %c0_116], %163 {strides = array<i32>} : memref<1x16x1x16xf32, #tpu.memory_space<vmem>>, vector<1x1x1x16xf32>,
    %164 = vector.extract_strided_slice %3 {offsets = [10, 0, 0], sizes = [1, 4, 16], strides = [1, 1, 1]} : vector<16x4x16xf32> to vector<1x4x16xf32>
    %165 = vector.shape_cast %164 : vector<1x4x16xf32> to vector<4x16xf32>
    %cst_117 = arith.constant dense<0.000000e+00> : vector<32x16xf32>
    %166 = tpu.matmul %0, %165, %cst_117 {dimension_numbers = #tpu.dot_dimension_numbers<[1], [0], [0], [1], [0, 0, 1, 1], [], []>} : vector<32x4xf32>, vector<4x16xf32>, vector<32x16xf32> -> vector<32x16xf32>
    %167 = vector.broadcast %1 : vector<32x1xf32> to vector<32x16xf32>
    %168 = arith.addf %166, %167 : vector<32x16xf32>
    "tpu.trace_start"() <{level = 10 : i32, message = "cp,cq->pq"}> : () -> ()
    %cst_118 = arith.constant dense<0.000000e+00> : vector<16x16xf32>
    %169 = tpu.matmul %168, %168, %cst_118 {dimension_numbers = #tpu.dot_dimension_numbers<[0], [0], [1], [1], [0, 1, 1, 1], [], []>} : vector<32x16xf32>, vector<32x16xf32>, vector<16x16xf32> -> vector<16x16xf32>
    "tpu.trace_stop"() : () -> ()
    %c0_119 = arith.constant 0 : index
    %c10 = arith.constant 10 : index
    %c0_120 = arith.constant 0 : index
    %c0_121 = arith.constant 0 : index
    %170 = vector.load %arg5[%c0_119, %c10, %c0_120, %c0_121] : memref<1x16x16x16xf32, #tpu.memory_space<vmem>>, vector<1x1x16x16xf32>
    %171 = vector.shape_cast %170 : vector<1x1x16x16xf32> to vector<16x16xf32>
    %172 = vector.shape_cast %169 : vector<16x16xf32> to vector<1x1x16x16xf32>
    tpu.vector_store %arg5[%c0_119, %c10, %c0_120, %c0_121], %172 {strides = array<i32>} : memref<1x16x16x16xf32, #tpu.memory_space<vmem>>, vector<1x1x16x16xf32>,
    %cst_122 = arith.constant dense<0.000000e+00> : vector<16xf32>
    %173 = vector.multi_reduction <add>, %168, %cst_122 [0] : vector<32x16xf32> to vector<16xf32>
    %174 = vector.shape_cast %173 : vector<16xf32> to vector<1x16xf32>
    %cst_123 = arith.constant 3.200000e+01 : f32
    %175 = vector.broadcast %cst_123 : f32 to vector<1x16xf32>
    %176 = arith.divf %174, %175 : vector<1x16xf32>
    %c0_124 = arith.constant 0 : index
    %c10_125 = arith.constant 10 : index
    %c0_126 = arith.constant 0 : index
    %c0_127 = arith.constant 0 : index
    %177 = vector.load %arg6[%c0_124, %c10_125, %c0_126, %c0_127] : memref<1x16x1x16xf32, #tpu.memory_space<vmem>>, vector<1x1x1x16xf32>
    %178 = vector.shape_cast %177 : vector<1x1x1x16xf32> to vector<1x16xf32>
    %179 = vector.shape_cast %176 : vector<1x16xf32> to vector<1x1x1x16xf32>
    tpu.vector_store %arg6[%c0_124, %c10_125, %c0_126, %c0_127], %179 {strides = array<i32>} : memref<1x16x1x16xf32, #tpu.memory_space<vmem>>, vector<1x1x1x16xf32>,
    %180 = vector.extract_strided_slice %3 {offsets = [11, 0, 0], sizes = [1, 4, 16], strides = [1, 1, 1]} : vector<16x4x16xf32> to vector<1x4x16xf32>
    %181 = vector.shape_cast %180 : vector<1x4x16xf32> to vector<4x16xf32>
    %cst_128 = arith.constant dense<0.000000e+00> : vector<32x16xf32>
    %182 = tpu.matmul %0, %181, %cst_128 {dimension_numbers = #tpu.dot_dimension_numbers<[1], [0], [0], [1], [0, 0, 1, 1], [], []>} : vector<32x4xf32>, vector<4x16xf32>, vector<32x16xf32> -> vector<32x16xf32>
    %183 = vector.broadcast %1 : vector<32x1xf32> to vector<32x16xf32>
    %184 = arith.addf %182, %183 : vector<32x16xf32>
    "tpu.trace_start"() <{level = 10 : i32, message = "cp,cq->pq"}> : () -> ()
    %cst_129 = arith.constant dense<0.000000e+00> : vector<16x16xf32>
    %185 = tpu.matmul %184, %184, %cst_129 {dimension_numbers = #tpu.dot_dimension_numbers<[0], [0], [1], [1], [0, 1, 1, 1], [], []>} : vector<32x16xf32>, vector<32x16xf32>, vector<16x16xf32> -> vector<16x16xf32>
    "tpu.trace_stop"() : () -> ()
    %c0_130 = arith.constant 0 : index
    %c11 = arith.constant 11 : index
    %c0_131 = arith.constant 0 : index
    %c0_132 = arith.constant 0 : index
    %186 = vector.load %arg5[%c0_130, %c11, %c0_131, %c0_132] : memref<1x16x16x16xf32, #tpu.memory_space<vmem>>, vector<1x1x16x16xf32>
    %187 = vector.shape_cast %186 : vector<1x1x16x16xf32> to vector<16x16xf32>
    %188 = vector.shape_cast %185 : vector<16x16xf32> to vector<1x1x16x16xf32>
    tpu.vector_store %arg5[%c0_130, %c11, %c0_131, %c0_132], %188 {strides = array<i32>} : memref<1x16x16x16xf32, #tpu.memory_space<vmem>>, vector<1x1x16x16xf32>,
    %cst_133 = arith.constant dense<0.000000e+00> : vector<16xf32>
    %189 = vector.multi_reduction <add>, %184, %cst_133 [0] : vector<32x16xf32> to vector<16xf32>
    %190 = vector.shape_cast %189 : vector<16xf32> to vector<1x16xf32>
    %cst_134 = arith.constant 3.200000e+01 : f32
    %191 = vector.broadcast %cst_134 : f32 to vector<1x16xf32>
    %192 = arith.divf %190, %191 : vector<1x16xf32>
    %c0_135 = arith.constant 0 : index
    %c11_136 = arith.constant 11 : index
    %c0_137 = arith.constant 0 : index
    %c0_138 = arith.constant 0 : index
    %193 = vector.load %arg6[%c0_135, %c11_136, %c0_137, %c0_138] : memref<1x16x1x16xf32, #tpu.memory_space<vmem>>, vector<1x1x1x16xf32>
    %194 = vector.shape_cast %193 : vector<1x1x1x16xf32> to vector<1x16xf32>
    %195 = vector.shape_cast %192 : vector<1x16xf32> to vector<1x1x1x16xf32>
    tpu.vector_store %arg6[%c0_135, %c11_136, %c0_137, %c0_138], %195 {strides = array<i32>} : memref<1x16x1x16xf32, #tpu.memory_space<vmem>>, vector<1x1x1x16xf32>,
    %196 = vector.extract_strided_slice %3 {offsets = [12, 0, 0], sizes = [1, 4, 16], strides = [1, 1, 1]} : vector<16x4x16xf32> to vector<1x4x16xf32>
    %197 = vector.shape_cast %196 : vector<1x4x16xf32> to vector<4x16xf32>
    %cst_139 = arith.constant dense<0.000000e+00> : vector<32x16xf32>
    %198 = tpu.matmul %0, %197, %cst_139 {dimension_numbers = #tpu.dot_dimension_numbers<[1], [0], [0], [1], [0, 0, 1, 1], [], []>} : vector<32x4xf32>, vector<4x16xf32>, vector<32x16xf32> -> vector<32x16xf32>
    %199 = vector.broadcast %1 : vector<32x1xf32> to vector<32x16xf32>
    %200 = arith.addf %198, %199 : vector<32x16xf32>
    "tpu.trace_start"() <{level = 10 : i32, message = "cp,cq->pq"}> : () -> ()
    %cst_140 = arith.constant dense<0.000000e+00> : vector<16x16xf32>
    %201 = tpu.matmul %200, %200, %cst_140 {dimension_numbers = #tpu.dot_dimension_numbers<[0], [0], [1], [1], [0, 1, 1, 1], [], []>} : vector<32x16xf32>, vector<32x16xf32>, vector<16x16xf32> -> vector<16x16xf32>
    "tpu.trace_stop"() : () -> ()
    %c0_141 = arith.constant 0 : index
    %c12 = arith.constant 12 : index
    %c0_142 = arith.constant 0 : index
    %c0_143 = arith.constant 0 : index
    %202 = vector.load %arg5[%c0_141, %c12, %c0_142, %c0_143] : memref<1x16x16x16xf32, #tpu.memory_space<vmem>>, vector<1x1x16x16xf32>
    %203 = vector.shape_cast %202 : vector<1x1x16x16xf32> to vector<16x16xf32>
    %204 = vector.shape_cast %201 : vector<16x16xf32> to vector<1x1x16x16xf32>
    tpu.vector_store %arg5[%c0_141, %c12, %c0_142, %c0_143], %204 {strides = array<i32>} : memref<1x16x16x16xf32, #tpu.memory_space<vmem>>, vector<1x1x16x16xf32>,
    %cst_144 = arith.constant dense<0.000000e+00> : vector<16xf32>
    %205 = vector.multi_reduction <add>, %200, %cst_144 [0] : vector<32x16xf32> to vector<16xf32>
    %206 = vector.shape_cast %205 : vector<16xf32> to vector<1x16xf32>
    %cst_145 = arith.constant 3.200000e+01 : f32
    %207 = vector.broadcast %cst_145 : f32 to vector<1x16xf32>
    %208 = arith.divf %206, %207 : vector<1x16xf32>
    %c0_146 = arith.constant 0 : index
    %c12_147 = arith.constant 12 : index
    %c0_148 = arith.constant 0 : index
    %c0_149 = arith.constant 0 : index
    %209 = vector.load %arg6[%c0_146, %c12_147, %c0_148, %c0_149] : memref<1x16x1x16xf32, #tpu.memory_space<vmem>>, vector<1x1x1x16xf32>
    %210 = vector.shape_cast %209 : vector<1x1x1x16xf32> to vector<1x16xf32>
    %211 = vector.shape_cast %208 : vector<1x16xf32> to vector<1x1x1x16xf32>
    tpu.vector_store %arg6[%c0_146, %c12_147, %c0_148, %c0_149], %211 {strides = array<i32>} : memref<1x16x1x16xf32, #tpu.memory_space<vmem>>, vector<1x1x1x16xf32>,
    %212 = vector.extract_strided_slice %3 {offsets = [13, 0, 0], sizes = [1, 4, 16], strides = [1, 1, 1]} : vector<16x4x16xf32> to vector<1x4x16xf32>
    %213 = vector.shape_cast %212 : vector<1x4x16xf32> to vector<4x16xf32>
    %cst_150 = arith.constant dense<0.000000e+00> : vector<32x16xf32>
    %214 = tpu.matmul %0, %213, %cst_150 {dimension_numbers = #tpu.dot_dimension_numbers<[1], [0], [0], [1], [0, 0, 1, 1], [], []>} : vector<32x4xf32>, vector<4x16xf32>, vector<32x16xf32> -> vector<32x16xf32>
    %215 = vector.broadcast %1 : vector<32x1xf32> to vector<32x16xf32>
    %216 = arith.addf %214, %215 : vector<32x16xf32>
    "tpu.trace_start"() <{level = 10 : i32, message = "cp,cq->pq"}> : () -> ()
    %cst_151 = arith.constant dense<0.000000e+00> : vector<16x16xf32>
    %217 = tpu.matmul %216, %216, %cst_151 {dimension_numbers = #tpu.dot_dimension_numbers<[0], [0], [1], [1], [0, 1, 1, 1], [], []>} : vector<32x16xf32>, vector<32x16xf32>, vector<16x16xf32> -> vector<16x16xf32>
    "tpu.trace_stop"() : () -> ()
    %c0_152 = arith.constant 0 : index
    %c13 = arith.constant 13 : index
    %c0_153 = arith.constant 0 : index
    %c0_154 = arith.constant 0 : index
    %218 = vector.load %arg5[%c0_152, %c13, %c0_153, %c0_154] : memref<1x16x16x16xf32, #tpu.memory_space<vmem>>, vector<1x1x16x16xf32>
    %219 = vector.shape_cast %218 : vector<1x1x16x16xf32> to vector<16x16xf32>
    %220 = vector.shape_cast %217 : vector<16x16xf32> to vector<1x1x16x16xf32>
    tpu.vector_store %arg5[%c0_152, %c13, %c0_153, %c0_154], %220 {strides = array<i32>} : memref<1x16x16x16xf32, #tpu.memory_space<vmem>>, vector<1x1x16x16xf32>,
    %cst_155 = arith.constant dense<0.000000e+00> : vector<16xf32>
    %221 = vector.multi_reduction <add>, %216, %cst_155 [0] : vector<32x16xf32> to vector<16xf32>
    %222 = vector.shape_cast %221 : vector<16xf32> to vector<1x16xf32>
    %cst_156 = arith.constant 3.200000e+01 : f32
    %223 = vector.broadcast %cst_156 : f32 to vector<1x16xf32>
    %224 = arith.divf %222, %223 : vector<1x16xf32>
    %c0_157 = arith.constant 0 : index
    %c13_158 = arith.constant 13 : index
    %c0_159 = arith.constant 0 : index
    %c0_160 = arith.constant 0 : index
    %225 = vector.load %arg6[%c0_157, %c13_158, %c0_159, %c0_160] : memref<1x16x1x16xf32, #tpu.memory_space<vmem>>, vector<1x1x1x16xf32>
    %226 = vector.shape_cast %225 : vector<1x1x1x16xf32> to vector<1x16xf32>
    %227 = vector.shape_cast %224 : vector<1x16xf32> to vector<1x1x1x16xf32>
    tpu.vector_store %arg6[%c0_157, %c13_158, %c0_159, %c0_160], %227 {strides = array<i32>} : memref<1x16x1x16xf32, #tpu.memory_space<vmem>>, vector<1x1x1x16xf32>,
    %228 = vector.extract_strided_slice %3 {offsets = [14, 0, 0], sizes = [1, 4, 16], strides = [1, 1, 1]} : vector<16x4x16xf32> to vector<1x4x16xf32>
    %229 = vector.shape_cast %228 : vector<1x4x16xf32> to vector<4x16xf32>
    %cst_161 = arith.constant dense<0.000000e+00> : vector<32x16xf32>
    %230 = tpu.matmul %0, %229, %cst_161 {dimension_numbers = #tpu.dot_dimension_numbers<[1], [0], [0], [1], [0, 0, 1, 1], [], []>} : vector<32x4xf32>, vector<4x16xf32>, vector<32x16xf32> -> vector<32x16xf32>
    %231 = vector.broadcast %1 : vector<32x1xf32> to vector<32x16xf32>
    %232 = arith.addf %230, %231 : vector<32x16xf32>
    "tpu.trace_start"() <{level = 10 : i32, message = "cp,cq->pq"}> : () -> ()
    %cst_162 = arith.constant dense<0.000000e+00> : vector<16x16xf32>
    %233 = tpu.matmul %232, %232, %cst_162 {dimension_numbers = #tpu.dot_dimension_numbers<[0], [0], [1], [1], [0, 1, 1, 1], [], []>} : vector<32x16xf32>, vector<32x16xf32>, vector<16x16xf32> -> vector<16x16xf32>
    "tpu.trace_stop"() : () -> ()
    %c0_163 = arith.constant 0 : index
    %c14 = arith.constant 14 : index
    %c0_164 = arith.constant 0 : index
    %c0_165 = arith.constant 0 : index
    %234 = vector.load %arg5[%c0_163, %c14, %c0_164, %c0_165] : memref<1x16x16x16xf32, #tpu.memory_space<vmem>>, vector<1x1x16x16xf32>
    %235 = vector.shape_cast %234 : vector<1x1x16x16xf32> to vector<16x16xf32>
    %236 = vector.shape_cast %233 : vector<16x16xf32> to vector<1x1x16x16xf32>
    tpu.vector_store %arg5[%c0_163, %c14, %c0_164, %c0_165], %236 {strides = array<i32>} : memref<1x16x16x16xf32, #tpu.memory_space<vmem>>, vector<1x1x16x16xf32>,
    %cst_166 = arith.constant dense<0.000000e+00> : vector<16xf32>
    %237 = vector.multi_reduction <add>, %232, %cst_166 [0] : vector<32x16xf32> to vector<16xf32>
    %238 = vector.shape_cast %237 : vector<16xf32> to vector<1x16xf32>
    %cst_167 = arith.constant 3.200000e+01 : f32
    %239 = vector.broadcast %cst_167 : f32 to vector<1x16xf32>
    %240 = arith.divf %238, %239 : vector<1x16xf32>
    %c0_168 = arith.constant 0 : index
    %c14_169 = arith.constant 14 : index
    %c0_170 = arith.constant 0 : index
    %c0_171 = arith.constant 0 : index
    %241 = vector.load %arg6[%c0_168, %c14_169, %c0_170, %c0_171] : memref<1x16x1x16xf32, #tpu.memory_space<vmem>>, vector<1x1x1x16xf32>
    %242 = vector.shape_cast %241 : vector<1x1x1x16xf32> to vector<1x16xf32>
    %243 = vector.shape_cast %240 : vector<1x16xf32> to vector<1x1x1x16xf32>
    tpu.vector_store %arg6[%c0_168, %c14_169, %c0_170, %c0_171], %243 {strides = array<i32>} : memref<1x16x1x16xf32, #tpu.memory_space<vmem>>, vector<1x1x1x16xf32>,
    %244 = vector.extract_strided_slice %3 {offsets = [15, 0, 0], sizes = [1, 4, 16], strides = [1, 1, 1]} : vector<16x4x16xf32> to vector<1x4x16xf32>
    %245 = vector.shape_cast %244 : vector<1x4x16xf32> to vector<4x16xf32>
    %cst_172 = arith.constant dense<0.000000e+00> : vector<32x16xf32>
    %246 = tpu.matmul %0, %245, %cst_172 {dimension_numbers = #tpu.dot_dimension_numbers<[1], [0], [0], [1], [0, 0, 1, 1], [], []>} : vector<32x4xf32>, vector<4x16xf32>, vector<32x16xf32> -> vector<32x16xf32>
    %247 = vector.broadcast %1 : vector<32x1xf32> to vector<32x16xf32>
    %248 = arith.addf %246, %247 : vector<32x16xf32>
    "tpu.trace_start"() <{level = 10 : i32, message = "cp,cq->pq"}> : () -> ()
    %cst_173 = arith.constant dense<0.000000e+00> : vector<16x16xf32>
    %249 = tpu.matmul %248, %248, %cst_173 {dimension_numbers = #tpu.dot_dimension_numbers<[0], [0], [1], [1], [0, 1, 1, 1], [], []>} : vector<32x16xf32>, vector<32x16xf32>, vector<16x16xf32> -> vector<16x16xf32>
    "tpu.trace_stop"() : () -> ()
    %c0_174 = arith.constant 0 : index
    %c15 = arith.constant 15 : index
    %c0_175 = arith.constant 0 : index
    %c0_176 = arith.constant 0 : index
    %250 = vector.load %arg5[%c0_174, %c15, %c0_175, %c0_176] : memref<1x16x16x16xf32, #tpu.memory_space<vmem>>, vector<1x1x16x16xf32>
    %251 = vector.shape_cast %250 : vector<1x1x16x16xf32> to vector<16x16xf32>
    %252 = vector.shape_cast %249 : vector<16x16xf32> to vector<1x1x16x16xf32>
    tpu.vector_store %arg5[%c0_174, %c15, %c0_175, %c0_176], %252 {strides = array<i32>} : memref<1x16x16x16xf32, #tpu.memory_space<vmem>>, vector<1x1x16x16xf32>,
    %cst_177 = arith.constant dense<0.000000e+00> : vector<16xf32>
    %253 = vector.multi_reduction <add>, %248, %cst_177 [0] : vector<32x16xf32> to vector<16xf32>
    %254 = vector.shape_cast %253 : vector<16xf32> to vector<1x16xf32>
    %cst_178 = arith.constant 3.200000e+01 : f32
    %255 = vector.broadcast %cst_178 : f32 to vector<1x16xf32>
    %256 = arith.divf %254, %255 : vector<1x16xf32>
    %c0_179 = arith.constant 0 : index
    %c15_180 = arith.constant 15 : index
    %c0_181 = arith.constant 0 : index
    %c0_182 = arith.constant 0 : index
    %257 = vector.load %arg6[%c0_179, %c15_180, %c0_181, %c0_182] : memref<1x16x1x16xf32, #tpu.memory_space<vmem>>, vector<1x1x1x16xf32>
    %258 = vector.shape_cast %257 : vector<1x1x1x16xf32> to vector<1x16xf32>
    %259 = vector.shape_cast %256 : vector<1x16xf32> to vector<1x1x1x16xf32>
    tpu.vector_store %arg6[%c0_179, %c15_180, %c0_181, %c0_182], %259 {strides = array<i32>} : memref<1x16x1x16xf32, #tpu.memory_space<vmem>>, vector<1x1x1x16xf32>,
    return
  }
  func.func @transform_0(%arg0: i32, %arg1: i32) -> (i32, i32, i32, i32) {
    %c0_i32 = arith.constant 0 : i32
    %c0_i32_0 = arith.constant 0 : i32
    %c0_i32_1 = arith.constant 0 : i32
    return %arg0, %arg1, %c0_i32, %c0_i32_0 : i32, i32, i32, i32
  }
  func.func @transform_1(%arg0: i32, %arg1: i32) -> (i32, i32) {
    %c0_i32 = arith.constant 0 : i32
    %c0_i32_0 = arith.constant 0 : i32
    %c0_i32_1 = arith.constant 0 : i32
    return %c0_i32, %c0_i32_0 : i32, i32
  }
  func.func @transform_2(%arg0: i32, %arg1: i32) -> (i32, i32) {
    %c0_i32 = arith.constant 0 : i32
    %c0_i32_0 = arith.constant 0 : i32
    %c0_i32_1 = arith.constant 0 : i32
    return %c0_i32, %c0_i32_0 : i32, i32
  }
  func.func @transform_3(%arg0: i32, %arg1: i32) -> (i32, i32, i32, i32) {
    %c0_i32 = arith.constant 0 : i32
    %c0_i32_0 = arith.constant 0 : i32
    %c0_i32_1 = arith.constant 0 : i32
    return %arg0, %arg1, %c0_i32, %c0_i32_0 : i32, i32, i32, i32
  }
  func.func @transform_4(%arg0: i32, %arg1: i32) -> (i32, i32, i32, i32) {
    %c0_i32 = arith.constant 0 : i32
    %c0_i32_0 = arith.constant 0 : i32
    %c0_i32_1 = arith.constant 0 : i32
    return %arg0, %arg1, %c0_i32, %c0_i32_0 : i32, i32, i32, i32
  }
}

</mosaic_0001>

<llo_original>
// kernel: tpu_custom_call.1
$region0: #{tpu_custom_call.1}
  #allocation0 [shape = 'u32[]', space=smem, size = 0x4, offset = 0x4, fixed_abs, tag = 'smem constant byte address 0x4 - core index']
  #allocation1 [shape = 'u32[144,128]{1,0:T(1,128)}', space=vmem, size = 0x12000, scoped, tag = 'internal scratch']
  %s0 = inlined_call_operand.hbm [shape: f32[2,16,4,16], index: 0, kind: input, shape index: {}]
  %s1 = inlined_call_operand.vmem [shape: f32[32,4], index: 1, kind: input, shape index: {}]
  %s2 = inlined_call_operand.vmem [shape: f32[32,1], index: 2, kind: input, shape index: {}]
  %s3 = inlined_call_operand.hbm [shape: f32[2,16,16,16], index: 3, kind: output, shape index: {0}]
  %s4 = inlined_call_operand.hbm [shape: f32[2,16,1,16], index: 4, kind: output, shape index: {1}]
  %5 = xla_tuple %s3, %s4
  %s6 = sld [smem:[#allocation0]]
  $region57: #{tpu_custom_call.1} parent=0
    _
  %s8 = ssub.s32 1, %s6
  %s9 = scalar_select 0, %s8, %s6
  $region1: #{tpu_custom_call.1} parent=0
    #allocation2 [shape = 'u8[65536]{0}', space=vmem, size = 0x10000, scoped, tag = 'input window, operand 0']
    #allocation3 [shape = 's32[2]{0}', space=sflag, size = 0x8, scoped, tag = 'scoped memory for tpu_custom_call.1']
    #allocation4 [shape = 's32[2]{0}', space=sflag, size = 0x8, scoped, tag = 'scoped memory for tpu_custom_call.1']
    #allocation5 [shape = 'u8[262144]{0}', space=vmem, size = 0x40000, scoped, tag = 'output window, operand 0']
    #allocation6 [shape = 'u8[16384]{0}', space=vmem, size = 0x4000, scoped, tag = 'output window, operand 1']
    #allocation7 [shape = 's32[2]{0}', space=sflag, size = 0x8, scoped, tag = 'scoped memory for tpu_custom_call.1']
    %10 = vsyncpa [#allocation3], 0
    %s11 = scalar_lea.sflag [#allocation3], 1
    %12 = vsyncpa %s11, 0
    %13 = vsyncpa [#allocation4], 0
    %s14 = scalar_lea.sflag [#allocation4], 1
    %15 = vsyncpa %s14, 0
    %16 = vsyncpa [#allocation7], 0
    %s17 = scalar_lea.sflag [#allocation7], 1
    %18 = vsyncpa %s17, 0
    loop: start=0, step=1, limit=4
    $region2: #{tpu_custom_call.1} parent=1 // loop_pre_header
      _
    $region3: #{tpu_custom_call.1} parent=1 // loop_header
      %s20 = sphi 0, %s24
      %p21 = scmp.ge.s32.totalorder %s20, 4
      %s27 = sphi 0, %s39
      %s28 = sphi 0, %s35
      %s29 = sphi 0, %s27
      %s30 = sphi 0, %s28
      %s31 = sphi 0, %s29
      %s32 = sphi 0, %s30
      %s44 = sphi 0, %s46
      %s47 = sphi 0, %s44
      %s48 = sphi 0, %s47
      %s64 = sphi 0, %s48
      %s68 = sphi 0, %s68
      %s70 = sphi 0, %s68
      %s71 = sphi 0, %s70
      %s85 = sphi 0, %s71
      %s89 = sphi 0, %s89
      %s91 = sphi 0, %s89
      %s92 = sphi 0, %s91
      %s106 = sphi 0, %s92
      %s114 = sphi 0, %s116
      %s117 = sphi 0, %s114
      %s118 = sphi 0, %s117
      %s134 = sphi 0, %s118
      %s142 = sphi 0, %s144
      %s145 = sphi 0, %s142
      %s146 = sphi 0, %s145
      %s162 = sphi 0, %s146
    $region4: #{tpu_custom_call.1} parent=1 // loop_header_branch
      %23 = sbr.rel (%p21) target = $region8
    $region5: #{tpu_custom_call.1} parent=1 // loop_body
      %s25 = ssub.s32 %s20, 1
      %s26 = ssub.s32 %s20, 2
      %s33 = sadd.s32 1, %s28
      %p34 = scmp.ge.s32.totalorder %s33, 1
      %s35 = scalar_select %p34, 0, %s33
      %s36 = sadd.s32 1, %s27
      %s37 = scalar_select %p34, %s36, %s27
      %p38 = scmp.ge.s32.totalorder %s37, 2
      %s39 = scalar_select %p38, 0, %s37
      %s40 = ssub.s32 %s27, %s39
      %s41 = ssub.s32 %s28, %s35
      %s42 = sor.u32 %s40, %s41
      %p43 = scmp.eq.s32.totalorder %s42, 0
      %s45 = sadd.s32 %s44, 1
      %s46 = scalar_select %p43, %s44, %s45
      %p49 = pneg %p43
      %p50 = scmp.eq.s32.totalorder %s20, 1
      %p51 = por %p49, %p50
      %p52 = scmp.ne.s32.totalorder %s44, %s47
      %p53 = scmp.eq.s32.totalorder %s20, 0
      %p54 = por %p52, %p53
      %p55 = scmp.ne.s32.totalorder %s44, %s47
      %p56 = scmp.eq.s32.totalorder %s25, 1
      %p57 = por %p55, %p56
      %p58 = scmp.ne.s32.totalorder %s47, %s48
      %p59 = scmp.eq.s32.totalorder %s25, 0
      %p60 = por %p58, %p59
      %p61 = scmp.ne.s32.totalorder %s47, %s48
      %p62 = scmp.eq.s32.totalorder %s26, 1
      %p63 = por %p61, %p62
      %p65 = scmp.ne.s32.totalorder %s48, %s64
      %p66 = scmp.eq.s32.totalorder %s26, 0
      %p67 = por %p65, %p66
      %s69 = sadd.s32 %s68, 1
      %p72 = scmp.eq.s32.totalorder %s20, 1
      %p73 = scmp.ne.s32.totalorder %s68, %s70
      %p74 = scmp.eq.s32.totalorder %s20, 0
      %p75 = por %p73, %p74
      %p76 = scmp.ne.s32.totalorder %s68, %s70
      %p77 = scmp.eq.s32.totalorder %s25, 1
      %p78 = por %p76, %p77
      %p79 = scmp.ne.s32.totalorder %s70, %s71
      %p80 = scmp.eq.s32.totalorder %s25, 0
      %p81 = por %p79, %p80
      %p82 = scmp.ne.s32.totalorder %s70, %s71
      %p83 = scmp.eq.s32.totalorder %s26, 1
      %p84 = por %p82, %p83
      %p86 = scmp.ne.s32.totalorder %s71, %s85
      %p87 = scmp.eq.s32.totalorder %s26, 0
      %p88 = por %p86, %p87
      %s90 = sadd.s32 %s89, 1
      %p93 = scmp.eq.s32.totalorder %s20, 1
      %p94 = scmp.ne.s32.totalorder %s89, %s91
      %p95 = scmp.eq.s32.totalorder %s20, 0
      %p96 = por %p94, %p95
      %p97 = scmp.ne.s32.totalorder %s89, %s91
      %p98 = scmp.eq.s32.totalorder %s25, 1
      %p99 = por %p97, %p98
      %p100 = scmp.ne.s32.totalorder %s91, %s92
      %p101 = scmp.eq.s32.totalorder %s25, 0
      %p102 = por %p100, %p101
      %p103 = scmp.ne.s32.totalorder %s91, %s92
      %p104 = scmp.eq.s32.totalorder %s26, 1
      %p105 = por %p103, %p104
      %p107 = scmp.ne.s32.totalorder %s92, %s106
      %p108 = scmp.eq.s32.totalorder %s26, 0
      %p109 = por %p107, %p108
      %s110 = ssub.s32 %s27, %s39
      %s111 = ssub.s32 %s28, %s35
      %s112 = sor.u32 %s110, %s111
      %p113 = scmp.eq.s32.totalorder %s112, 0
      %s115 = sadd.s32 %s114, 1
      %s116 = scalar_select %p113, %s114, %s115
      %p119 = pneg %p113
      %p120 = scmp.eq.s32.totalorder %s20, 1
      %p121 = por %p119, %p120
      %p122 = scmp.ne.s32.totalorder %s114, %s117
      %p123 = scmp.eq.s32.totalorder %s20, 0
      %p124 = por %p122, %p123
      %p125 = scmp.ne.s32.totalorder %s114, %s117
      %p126 = scmp.eq.s32.totalorder %s25, 1
      %p127 = por %p125, %p126
      %p128 = scmp.ne.s32.totalorder %s117, %s118
      %p129 = scmp.eq.s32.totalorder %s25, 0
      %p130 = por %p128, %p129
      %p131 = scmp.ne.s32.totalorder %s117, %s118
      %p132 = scmp.eq.s32.totalorder %s26, 1
      %p133 = por %p131, %p132
      %p135 = scmp.ne.s32.totalorder %s118, %s134
      %p136 = scmp.eq.s32.totalorder %s26, 0
      %p137 = por %p135, %p136
      %s138 = ssub.s32 %s27, %s39
      %s139 = ssub.s32 %s28, %s35
      %s140 = sor.u32 %s138, %s139
      %p141 = scmp.eq.s32.totalorder %s140, 0
      %s143 = sadd.s32 %s142, 1
      %s144 = scalar_select %p141, %s142, %s143
      %p147 = pneg %p141
      %p148 = scmp.eq.s32.totalorder %s20, 1
      %p149 = por %p147, %p148
      %p150 = scmp.ne.s32.totalorder %s142, %s145
      %p151 = scmp.eq.s32.totalorder %s20, 0
      %p152 = por %p150, %p151
      %p153 = scmp.ne.s32.totalorder %s142, %s145
      %p154 = scmp.eq.s32.totalorder %s25, 1
      %p155 = por %p153, %p154
      %p156 = scmp.ne.s32.totalorder %s145, %s146
      %p157 = scmp.eq.s32.totalorder %s25, 0
      %p158 = por %p156, %p157
      %p159 = scmp.ne.s32.totalorder %s145, %s146
      %p160 = scmp.eq.s32.totalorder %s26, 1
      %p161 = por %p159, %p160
      %p163 = scmp.ne.s32.totalorder %s146, %s162
      %p164 = scmp.eq.s32.totalorder %s26, 0
      %p165 = por %p163, %p164
      %p166 = scmp.le.s32.totalorder 1, %s20
      %p167 = scmp.lt.s32.totalorder %s20, 3
      %p168 = pnand %p166, %p167
      %p169 = pneg %p168
      // Predicated region
      $region9: #{tpu_custom_call.1} parent=5 // pred_check
        _
      $region10: #{tpu_custom_call.1} parent=5 // pred_check_branch
        %171 = sbr.rel (%p168) target = $region12
      $region11: #{tpu_custom_call.1} parent=5 // pred_region
        %s172 = ssub.s32 %s20, 1
        // Predicated region
        $region13: #{tpu_custom_call.1} parent=11 // pred_check
          %p173 = pneg %p81
        $region14: #{tpu_custom_call.1} parent=11 // pred_check_branch
          %175 = sbr.rel (%p173) target = $region16
        $region15: #{tpu_custom_call.1} parent=11 // pred_region
          _
        $region16: #{tpu_custom_call.1} parent=11 // pred_fallthru
          _
        // Predicated region
        $region17: #{tpu_custom_call.1} parent=11 // pred_check
          %p176 = pneg %p102
        $region18: #{tpu_custom_call.1} parent=11 // pred_check_branch
          %178 = sbr.rel (%p176) target = $region20
        $region19: #{tpu_custom_call.1} parent=11 // pred_region
          _
        $region20: #{tpu_custom_call.1} parent=11 // pred_fallthru
          _
      $region12: #{tpu_custom_call.1} parent=5 // pred_fallthru
        _
      %p179 = scmp.lt.s32.totalorder %s20, 2
      // Predicated region
      $region21: #{tpu_custom_call.1} parent=5 // pred_check
        %p180 = pneg %p179
      $region22: #{tpu_custom_call.1} parent=5 // pred_check_branch
        %182 = sbr.rel (%p180) target = $region24
      $region23: #{tpu_custom_call.1} parent=5 // pred_region
        // Predicated region
        $region25: #{tpu_custom_call.1} parent=23 // pred_check
          %p183 = pneg %p54
        $region26: #{tpu_custom_call.1} parent=23 // pred_check_branch
          %185 = sbr.rel (%p183) target = $region28
        $region27: #{tpu_custom_call.1} parent=23 // pred_region
          %s186 = sand.u32 %s44, 1
          %s187 = scalar_lea.sflag [#allocation3], %s186
          %s188 = sand.u32 %s44, 1
          %s189 = smul.addr %s188, 64
          %s190 = scalar_lea.vmem [#allocation2], %s189
          %s191 = smul.u32 16, %s28
          %s193 = ssub.s32 1024, 1024
          %194 = vsyncadd %s187, %s193
          %s195 = smul.addr %s27, 16
          %s196 = sadd.s32 %s191, %s195
          %s197 = smul.addr %s196, 64
          %s198 = scalar_lea.hbm %s0, %s197
          %s199 = sshll.u32 %s190, 4
          %s200 = int_to_ptr.vmem [resolvable:$true] %s199
          %205 = dma.hbm_to_vmem [thread:$0]  %s198, 1024, %s200, %s187, 64, 64, 4
        $region28: #{tpu_custom_call.1} parent=23 // pred_fallthru
          _
      $region24: #{tpu_custom_call.1} parent=5 // pred_fallthru
        _
      %p206 = scmp.le.s32.totalorder 1, %s20
      %p207 = scmp.lt.s32.totalorder %s20, 3
      %p208 = pnand %p206, %p207
      %p209 = pneg %p208
      // Predicated region
      $region29: #{tpu_custom_call.1} parent=5 // pred_check
        _
      $region30: #{tpu_custom_call.1} parent=5 // pred_check_branch
        %211 = sbr.rel (%p208) target = $region32
      $region31: #{tpu_custom_call.1} parent=5 // pred_region
        %s212 = ssub.s32 %s20, 1
        %s213 = sand.u32 %s47, 1
        %s214 = scalar_lea.sflag [#allocation3], %s213
        %s215 = sand.u32 %s47, 1
        %s216 = smul.addr %s215, 64
        %s217 = scalar_lea.vmem [#allocation2], %s216
        // Predicated region
        $region33: #{tpu_custom_call.1} parent=31 // pred_check
          %p218 = pneg %p60
        $region34: #{tpu_custom_call.1} parent=31 // pred_check_branch
          %220 = sbr.rel (%p218) target = $region36
        $region35: #{tpu_custom_call.1} parent=31 // pred_region
          %221 = dma.done %s214, 1024
        $region36: #{tpu_custom_call.1} parent=31 // pred_fallthru
          _
        %s222 = sand.u32 %s47, 1
        %s223 = scalar_lea.sflag [#allocation3], %s222
        %s224 = sand.u32 %s47, 1
        %s225 = smul.addr %s224, 64
        %s226 = scalar_lea.vmem [#allocation2], %s225
        %p227 = pneg %p60
        %p228 = pneg %p57
        %p229 = pneg %p81
        %p230 = pneg %p78
        %p231 = pneg %p102
        %p232 = pneg %p99
        %p233 = pneg %p130
        %p234 = pneg %p127
        %s235 = sand.u32 %s117, 1
        %s236 = scalar_lea.sflag [#allocation4], %s235
        %s237 = sand.u32 %s117, 1
        %s238 = smul.addr %s237, 256
        %s239 = scalar_lea.vmem [#allocation5], %s238
        %p240 = pneg %p158
        %p241 = pneg %p155
        %s242 = sand.u32 %s145, 1
        %s243 = scalar_lea.sflag [#allocation7], %s242
        %s244 = sand.u32 %s145, 1
        %s245 = smul.addr %s244, 16
        %s246 = scalar_lea.vmem [#allocation6], %s245
        %s247 = smul.u32 16, %s30
        %s248 = smul.u32 16, %s30
        %s249 = smul.u32 16, %s30
        %v250 = vld [vmem:[%s1] sm:$0xff]
        %v251 = vld [vmem:[%s1 + $0x8] sm:$0xff]
        %v252 = vld [vmem:[%s1 + $0x10] sm:$0xff]
        %v253 = vld [vmem:[%s1 + $0x18] sm:$0xff]
        %v254 = vld [vmem:[%s2] sm:$0xff]
        %v255 = vld [vmem:[%s2 + $0x8] sm:$0xff]
        %v256 = vld [vmem:[%s2 + $0x10] sm:$0xff]
        %v257 = vld [vmem:[%s2 + $0x18] sm:$0xff]
        %v258 = vld [vmem:[%s217] sm:$0xf]
        %v259 = vld [vmem:[%s217 + $0x4] sm:$0xf]
        %v260 = vld [vmem:[%s217 + $0x8] sm:$0xf]
        %v261 = vld [vmem:[%s217 + $0xc] sm:$0xf]
        %v262 = vld [vmem:[%s217 + $0x10] sm:$0xf]
        %v263 = vld [vmem:[%s217 + $0x14] sm:$0xf]
        %v264 = vld [vmem:[%s217 + $0x18] sm:$0xf]
        %v265 = vld [vmem:[%s217 + $0x1c] sm:$0xf]
        %v266 = vld [vmem:[%s217 + $0x20] sm:$0xf]
        %v267 = vld [vmem:[%s217 + $0x24] sm:$0xf]
        %v268 = vld [vmem:[%s217 + $0x28] sm:$0xf]
        %v269 = vld [vmem:[%s217 + $0x2c] sm:$0xf]
        %v270 = vld [vmem:[%s217 + $0x30] sm:$0xf]
        %v271 = vld [vmem:[%s217 + $0x34] sm:$0xf]
        %v272 = vld [vmem:[%s217 + $0x38] sm:$0xf]
        %v273 = vld [vmem:[%s217 + $0x3c] sm:$0xf]
        %275 = vset.pattern.permute.xlu0 0
        %276 = vperm.xlu0 %275, %v254
        %v277 = vpop.permute.xlu0 %276
        %280 = vset.pattern.permute.xlu0 0
        %281 = vperm.xlu0 %280, %v255
        %v282 = vpop.permute.xlu0 %281
        %285 = vset.pattern.permute.xlu0 0
        %286 = vperm.xlu0 %285, %v256
        %v287 = vpop.permute.xlu0 %286
        %290 = vset.pattern.permute.xlu0 0
        %291 = vperm.xlu0 %290, %v257
        %v292 = vpop.permute.xlu0 %291
        %vm294 = vcmask 31744
        %v296 = vsel %vm294, %v250, 0
        %v299 = vsel %vm294, %v251, 0
        %v302 = vsel %vm294, %v252, 0
        %v305 = vsel %vm294, %v253, 0
        %vm307 = vcmask 1043456
        %v309 = vsel %vm307, %v258, 0
        %311 = vmatprep.subr.mxu0 0.0
        %312 = vmatpush1.msra.mxu0 %v309
        %313 = vmatprep.subr.mxu0 0.0
        %314 = vmatpush1.msra.mxu0 0.0
        %315 = vmatprep.subr.mxu0 0.0
        %316 = vmatpush1.msra.mxu0 0.0
        %317 = vmatprep.subr.mxu0 0.0
        %318 = vmatpush1.msra.mxu0 0.0
        %319 = vmatprep.subr.mxu0 0.0
        %320 = vmatpush1.msra.mxu0 0.0
        %321 = vmatprep.subr.mxu0 0.0
        %322 = vmatpush1.msra.mxu0 0.0
        %323 = vmatprep.subr.mxu0 0.0
        %324 = vmatpush1.msra.mxu0 0.0
        %325 = vmatprep.subr.mxu0 0.0
        %326 = vmatpush1.msra.mxu0 0.0
        %327 = vmatprep.subr.mxu0 0.0
        %328 = vmatpush1.msra.mxu0 0.0
        %329 = vmatprep.subr.mxu0 0.0
        %330 = vmatpush1.msra.mxu0 0.0
        %331 = vmatprep.subr.mxu0 0.0
        %332 = vmatpush1.msra.mxu0 0.0
        %333 = vmatprep.subr.mxu0 0.0
        %334 = vmatpush1.msra.mxu0 0.0
        %335 = vmatprep.subr.mxu0 0.0
        %336 = vmatpush1.msra.mxu0 0.0
        %337 = vmatprep.subr.mxu0 0.0
        %338 = vmatpush1.msra.mxu0 0.0
        %339 = vmatprep.subr.mxu0 0.0
        %340 = vmatpush1.msra.mxu0 0.0
        %341 = vmatprep.subr.mxu0 0.0
        %342 = vmatpush1.msra.mxu0 0.0
        %343 = vmatprep.subr.mxu0 0.0
        %344 = vmatpush1.msra.mxu0 0.0
        %345 = vmatprep.subr.mxu0 0.0
        %346 = vmatpush1.msra.mxu0 0.0
        %347 = vmatprep.subr.mxu0 0.0
        %348 = vmatpush1.msra.mxu0 0.0
        %349 = vmatprep.subr.mxu0 0.0
        %350 = vmatpush1.msra.mxu0 0.0
        %351 = vmatprep.subr.mxu0 0.0
        %352 = vmatpush1.msra.mxu0 0.0
        %353 = vmatprep.subr.mxu0 0.0
        %354 = vmatpush1.msra.mxu0 0.0
        %355 = vmatprep.subr.mxu0 0.0
        %356 = vmatpush1.msra.mxu0 0.0
        %357 = vmatprep.subr.mxu0 0.0
        %358 = vmatpush1.msra.mxu0 0.0
        %359 = vmatprep.subr.mxu0 0.0
        %360 = vmatpush1.msra.mxu0 0.0
        %361 = vmatprep.subr.mxu0 0.0
        %362 = vmatpush1.msra.mxu0 0.0
        %363 = vmatprep.subr.mxu0 0.0
        %364 = vmatpush1.msra.mxu0 0.0
        %365 = vmatprep.subr.mxu0 0.0
        %366 = vmatpush1.msra.mxu0 0.0
        %367 = vmatprep.subr.mxu0 0.0
        %368 = vmatpush1.msra.mxu0 0.0
        %369 = vmatprep.subr.mxu0 0.0
        %370 = vmatpush1.msra.mxu0 0.0
        %371 = vmatprep.subr.mxu0 0.0
        %372 = vmatpush1.msra.mxu0 0.0
        %373 = vmatprep.subr.mxu0 0.0
        %374 = vmatpush1.msra.mxu0 0.0
        %375 = vmatprep.mubr.f32.mxu0 0.0
        %376 = vmatmul.mubr.f32.gmra.mrb[0].mxu0 %v296
        %v377 = vpop.f32.mrb[0].mxu0
        %v378 = vadd.f32 %v277, %v377
        %v379 = vpop.f32.mrb[0].mxu0
        %380 = vmatprep.mubr.f32.mxu0 0.0
        %381 = vmatmul.mubr.f32.gmra.mrb[0].mxu0 %v299
        %v382 = vpop.f32.mrb[0].mxu0
        %v383 = vadd.f32 %v282, %v382
        %v384 = vpop.f32.mrb[0].mxu0
        %385 = vmatprep.mubr.f32.mxu0 0.0
        %386 = vmatmul.mubr.f32.gmra.mrb[0].mxu0 %v302
        %v387 = vpop.f32.mrb[0].mxu0
        %v388 = vadd.f32 %v287, %v387
        %v389 = vpop.f32.mrb[0].mxu0
        %390 = vmatprep.mubr.f32.mxu0 0.0
        %391 = vmatmul.mubr.f32.gmra.mrb[0].mxu0 %v305
        %v392 = vpop.f32.mrb[0].mxu0
        %v393 = vadd.f32 %v292, %v392
        %v394 = vpop.f32.mrb[0].mxu0
        %395 = vdwg.mxu0
        %396 = vxpose.xlu0.b32.start [1/16] %v378, 128
        %397 = vxpose.xlu0.b32.cont [2/16] %v383, 128
        %398 = vxpose.xlu0.b32.cont [3/16] %v388, 128
        %399 = vxpose.xlu0.b32.cont [4/16] %v393, 128
        %400 = vxpose.xlu0.b32.cont [5/16] 0.0, 128
        %401 = vxpose.xlu0.b32.cont [6/16] 0.0, 128
        %402 = vxpose.xlu0.b32.cont [7/16] 0.0, 128
        %403 = vxpose.xlu0.b32.cont [8/16] 0.0, 128
        %404 = vxpose.xlu0.b32.cont [9/16] 0.0, 128
        %405 = vxpose.xlu0.b32.cont [10/16] 0.0, 128
        %406 = vxpose.xlu0.b32.cont [11/16] 0.0, 128
        %407 = vxpose.xlu0.b32.cont [12/16] 0.0, 128
        %408 = vxpose.xlu0.b32.cont [13/16] 0.0, 128
        %409 = vxpose.xlu0.b32.cont [14/16] 0.0, 128
        %410 = vxpose.xlu0.b32.cont [15/16] 0.0, 128
        %411 = vxpose.xlu0.b32.end [16/16] 0.0, 128
        %v412 = vpop.trf.xlu0
        %v413 = vpop.trf.xlu0
        %v414 = vpop.trf.xlu0
        %v415 = vpop.trf.xlu0
        %v416 = vpop.trf.xlu0
        %v417 = vpop.trf.xlu0
        %v418 = vpop.trf.xlu0
        %v419 = vpop.trf.xlu0
        %v420 = vpop.trf.xlu0
        %v421 = vpop.trf.xlu0
        %v422 = vpop.trf.xlu0
        %v423 = vpop.trf.xlu0
        %v424 = vpop.trf.xlu0
        %v425 = vpop.trf.xlu0
        %v426 = vpop.trf.xlu0
        %v427 = vpop.trf.xlu0
        %vm428 = vcmask 261120
        %v430 = vsel %vm428, %v412, 0
        %v433 = vsel %vm428, %v413, 0
        %435 = vmatprep.subr.mxu0 0.0
        %436 = vmatpush1.msra.mxu0 %v378
        %437 = vmatprep.subr.mxu0 0.0
        %438 = vmatpush1.msra.mxu0 %v383
        %439 = vmatprep.subr.mxu0 0.0
        %440 = vmatpush1.msra.mxu0 %v388
        %441 = vmatprep.subr.mxu0 0.0
        %442 = vmatpush1.msra.mxu0 %v393
        %443 = vmatprep.subr.mxu0 0.0
        %444 = vmatpush1.msra.mxu0 0.0
        %445 = vmatprep.subr.mxu0 0.0
        %446 = vmatpush1.msra.mxu0 0.0
        %447 = vmatprep.subr.mxu0 0.0
        %448 = vmatpush1.msra.mxu0 0.0
        %449 = vmatprep.subr.mxu0 0.0
        %450 = vmatpush1.msra.mxu0 0.0
        %451 = vmatprep.subr.mxu0 0.0
        %452 = vmatpush1.msra.mxu0 0.0
        %453 = vmatprep.subr.mxu0 0.0
        %454 = vmatpush1.msra.mxu0 0.0
        %455 = vmatprep.subr.mxu0 0.0
        %456 = vmatpush1.msra.mxu0 0.0
        %457 = vmatprep.subr.mxu0 0.0
        %458 = vmatpush1.msra.mxu0 0.0
        %459 = vmatprep.subr.mxu0 0.0
        %460 = vmatpush1.msra.mxu0 0.0
        %461 = vmatprep.subr.mxu0 0.0
        %462 = vmatpush1.msra.mxu0 0.0
        %463 = vmatprep.subr.mxu0 0.0
        %464 = vmatpush1.msra.mxu0 0.0
        %465 = vmatprep.subr.mxu0 0.0
        %466 = vmatpush1.msra.mxu0 0.0
        %467 = vmatprep.subr.mxu0 0.0
        %468 = vmatpush1.msra.mxu0 0.0
        %469 = vmatprep.subr.mxu0 0.0
        %470 = vmatpush1.msra.mxu0 0.0
        %471 = vmatprep.subr.mxu0 0.0
        %472 = vmatpush1.msra.mxu0 0.0
        %473 = vmatprep.subr.mxu0 0.0
        %474 = vmatpush1.msra.mxu0 0.0
        %475 = vmatprep.subr.mxu0 0.0
        %476 = vmatpush1.msra.mxu0 0.0
        %477 = vmatprep.subr.mxu0 0.0
        %478 = vmatpush1.msra.mxu0 0.0
        %479 = vmatprep.subr.mxu0 0.0
        %480 = vmatpush1.msra.mxu0 0.0
        %481 = vmatprep.subr.mxu0 0.0
        %482 = vmatpush1.msra.mxu0 0.0
        %483 = vmatprep.subr.mxu0 0.0
        %484 = vmatpush1.msra.mxu0 0.0
        %485 = vmatprep.subr.mxu0 0.0
        %486 = vmatpush1.msra.mxu0 0.0
        %487 = vmatprep.subr.mxu0 0.0
        %488 = vmatpush1.msra.mxu0 0.0
        %489 = vmatprep.subr.mxu0 0.0
        %490 = vmatpush1.msra.mxu0 0.0
        %491 = vmatprep.subr.mxu0 0.0
        %492 = vmatpush1.msra.mxu0 0.0
        %493 = vmatprep.subr.mxu0 0.0
        %494 = vmatpush1.msra.mxu0 0.0
        %495 = vmatprep.subr.mxu0 0.0
        %496 = vmatpush1.msra.mxu0 0.0
        %497 = vmatprep.subr.mxu0 0.0
        %498 = vmatpush1.msra.mxu0 0.0
        %499 = vmatprep.mubr.f32.mxu0 0.0
        %500 = vmatmul.mubr.f32.gmra.mrb[0].mxu0 %v430
        %v501 = vpop.f32.mrb[0].mxu0
        %v502 = vadd.f32 0.0, %v501
        %v503 = vpop.f32.mrb[0].mxu0
        %504 = vmatprep.mubr.f32.mxu0 0.0
        %505 = vmatmul.mubr.f32.gmra.mrb[0].mxu0 %v433
        %v506 = vpop.f32.mrb[0].mxu0
        %v507 = vadd.f32 0.0, %v506
        %v508 = vpop.f32.mrb[0].mxu0
        %509 = vdwg.mxu0
        %vm510 = vcmask 130048
        %511 = vst.msk [vmem:[%s239] sm:$0xff] %vm510, %v502
        %512 = vst.msk [vmem:[%s239 + $0x8] sm:$0xff] %vm510, %v507
        %v513 = vsel %vm510, %v378, 0.0
        %v514 = vsel %vm510, %v383, 0.0
        %v515 = vadd.f32 %v513, %v514
        %v516 = vsel %vm510, %v388, 0.0
        %v517 = vadd.f32 %v515, %v516
        %v518 = vsel %vm510, %v393, 0.0
        %v519 = vadd.f32 %v517, %v518
        %v520 = vrot.slane %v519, 4
        %v521 = vadd.f32 %v519, %v520
        %v522 = vrot.slane %v521, 2
        %v523 = vadd.f32 %v521, %v522
        %v524 = vrot.slane %v523, 1
        %v525 = vadd.f32 %v523, %v524
        %v526 = vrcp.pop 32.0
        %v527 = vmul.f32 %v525, %v526
        %vm528 = vcmask 122880
        %529 = vst.msk [vmem:[%s246] sm:$0x1] %vm528, %v527
        %v531 = vsel %vm307, %v259, 0
        %533 = vmatprep.subr.mxu0 0.0
        %534 = vmatpush1.msra.mxu0 %v531
        %535 = vmatprep.subr.mxu0 0.0
        %536 = vmatpush1.msra.mxu0 0.0
        %537 = vmatprep.subr.mxu0 0.0
        %538 = vmatpush1.msra.mxu0 0.0
        %539 = vmatprep.subr.mxu0 0.0
        %540 = vmatpush1.msra.mxu0 0.0
        %541 = vmatprep.subr.mxu0 0.0
        %542 = vmatpush1.msra.mxu0 0.0
        %543 = vmatprep.subr.mxu0 0.0
        %544 = vmatpush1.msra.mxu0 0.0
        %545 = vmatprep.subr.mxu0 0.0
        %546 = vmatpush1.msra.mxu0 0.0
        %547 = vmatprep.subr.mxu0 0.0
        %548 = vmatpush1.msra.mxu0 0.0
        %549 = vmatprep.subr.mxu0 0.0
        %550 = vmatpush1.msra.mxu0 0.0
        %551 = vmatprep.subr.mxu0 0.0
        %552 = vmatpush1.msra.mxu0 0.0
        %553 = vmatprep.subr.mxu0 0.0
        %554 = vmatpush1.msra.mxu0 0.0
        %555 = vmatprep.subr.mxu0 0.0
        %556 = vmatpush1.msra.mxu0 0.0
        %557 = vmatprep.subr.mxu0 0.0
        %558 = vmatpush1.msra.mxu0 0.0
        %559 = vmatprep.subr.mxu0 0.0
        %560 = vmatpush1.msra.mxu0 0.0
        %561 = vmatprep.subr.mxu0 0.0
        %562 = vmatpush1.msra.mxu0 0.0
        %563 = vmatprep.subr.mxu0 0.0
        %564 = vmatpush1.msra.mxu0 0.0
        %565 = vmatprep.subr.mxu0 0.0
        %566 = vmatpush1.msra.mxu0 0.0
        %567 = vmatprep.subr.mxu0 0.0
        %568 = vmatpush1.msra.mxu0 0.0
        %569 = vmatprep.subr.mxu0 0.0
        %570 = vmatpush1.msra.mxu0 0.0
        %571 = vmatprep.subr.mxu0 0.0
        %572 = vmatpush1.msra.mxu0 0.0
        %573 = vmatprep.subr.mxu0 0.0
        %574 = vmatpush1.msra.mxu0 0.0
        %575 = vmatprep.subr.mxu0 0.0
        %576 = vmatpush1.msra.mxu0 0.0
        %577 = vmatprep.subr.mxu0 0.0
        %578 = vmatpush1.msra.mxu0 0.0
        %579 = vmatprep.subr.mxu0 0.0
        %580 = vmatpush1.msra.mxu0 0.0
        %581 = vmatprep.subr.mxu0 0.0
        %582 = vmatpush1.msra.mxu0 0.0
        %583 = vmatprep.subr.mxu0 0.0
        %584 = vmatpush1.msra.mxu0 0.0
        %585 = vmatprep.subr.mxu0 0.0
        %586 = vmatpush1.msra.mxu0 0.0
        %587 = vmatprep.subr.mxu0 0.0
        %588 = vmatpush1.msra.mxu0 0.0
        %589 = vmatprep.subr.mxu0 0.0
        %590 = vmatpush1.msra.mxu0 0.0
        %591 = vmatprep.subr.mxu0 0.0
        %592 = vmatpush1.msra.mxu0 0.0
        %593 = vmatprep.subr.mxu0 0.0
        %594 = vmatpush1.msra.mxu0 0.0
        %595 = vmatprep.subr.mxu0 0.0
        %596 = vmatpush1.msra.mxu0 0.0
        %597 = vmatprep.mubr.f32.mxu0 0.0
        %598 = vmatmul.mubr.f32.gmra.mrb[0].mxu0 %v296
        %v599 = vpop.f32.mrb[0].mxu0
        %v600 = vadd.f32 %v277, %v599
        %v601 = vpop.f32.mrb[0].mxu0
        %602 = vmatprep.mubr.f32.mxu0 0.0
        %603 = vmatmul.mubr.f32.gmra.mrb[0].mxu0 %v299
        %v604 = vpop.f32.mrb[0].mxu0
        %v605 = vadd.f32 %v282, %v604
        %v606 = vpop.f32.mrb[0].mxu0
        %607 = vmatprep.mubr.f32.mxu0 0.0
        %608 = vmatmul.mubr.f32.gmra.mrb[0].mxu0 %v302
        %v609 = vpop.f32.mrb[0].mxu0
        %v610 = vadd.f32 %v287, %v609
        %v611 = vpop.f32.mrb[0].mxu0
        %612 = vmatprep.mubr.f32.mxu0 0.0
        %613 = vmatmul.mubr.f32.gmra.mrb[0].mxu0 %v305
        %v614 = vpop.f32.mrb[0].mxu0
        %v615 = vadd.f32 %v292, %v614
        %v616 = vpop.f32.mrb[0].mxu0
        %617 = vdwg.mxu0
        %618 = vxpose.xlu0.b32.start [1/16] %v600, 128
        %619 = vxpose.xlu0.b32.cont [2/16] %v605, 128
        %620 = vxpose.xlu0.b32.cont [3/16] %v610, 128
        %621 = vxpose.xlu0.b32.cont [4/16] %v615, 128
        %622 = vxpose.xlu0.b32.cont [5/16] 0.0, 128
        %623 = vxpose.xlu0.b32.cont [6/16] 0.0, 128
        %624 = vxpose.xlu0.b32.cont [7/16] 0.0, 128
        %625 = vxpose.xlu0.b32.cont [8/16] 0.0, 128
        %626 = vxpose.xlu0.b32.cont [9/16] 0.0, 128
        %627 = vxpose.xlu0.b32.cont [10/16] 0.0, 128
        %628 = vxpose.xlu0.b32.cont [11/16] 0.0, 128
        %629 = vxpose.xlu0.b32.cont [12/16] 0.0, 128
        %630 = vxpose.xlu0.b32.cont [13/16] 0.0, 128
        %631 = vxpose.xlu0.b32.cont [14/16] 0.0, 128
        %632 = vxpose.xlu0.b32.cont [15/16] 0.0, 128
        %633 = vxpose.xlu0.b32.end [16/16] 0.0, 128
        %v634 = vpop.trf.xlu0
        %v635 = vpop.trf.xlu0
        %v636 = vpop.trf.xlu0
        %v637 = vpop.trf.xlu0
        %v638 = vpop.trf.xlu0
        %v639 = vpop.trf.xlu0
        %v640 = vpop.trf.xlu0
        %v641 = vpop.trf.xlu0
        %v642 = vpop.trf.xlu0
        %v643 = vpop.trf.xlu0
        %v644 = vpop.trf.xlu0
        %v645 = vpop.trf.xlu0
        %v646 = vpop.trf.xlu0
        %v647 = vpop.trf.xlu0
        %v648 = vpop.trf.xlu0
        %v649 = vpop.trf.xlu0
        %v651 = vsel %vm428, %v634, 0
        %v654 = vsel %vm428, %v635, 0
        %656 = vmatprep.subr.mxu0 0.0
        %657 = vmatpush1.msra.mxu0 %v600
        %658 = vmatprep.subr.mxu0 0.0
        %659 = vmatpush1.msra.mxu0 %v605
        %660 = vmatprep.subr.mxu0 0.0
        %661 = vmatpush1.msra.mxu0 %v610
        %662 = vmatprep.subr.mxu0 0.0
        %663 = vmatpush1.msra.mxu0 %v615
        %664 = vmatprep.subr.mxu0 0.0
        %665 = vmatpush1.msra.mxu0 0.0
        %666 = vmatprep.subr.mxu0 0.0
        %667 = vmatpush1.msra.mxu0 0.0
        %668 = vmatprep.subr.mxu0 0.0
        %669 = vmatpush1.msra.mxu0 0.0
        %670 = vmatprep.subr.mxu0 0.0
        %671 = vmatpush1.msra.mxu0 0.0
        %672 = vmatprep.subr.mxu0 0.0
        %673 = vmatpush1.msra.mxu0 0.0
        %674 = vmatprep.subr.mxu0 0.0
        %675 = vmatpush1.msra.mxu0 0.0
        %676 = vmatprep.subr.mxu0 0.0
        %677 = vmatpush1.msra.mxu0 0.0
        %678 = vmatprep.subr.mxu0 0.0
        %679 = vmatpush1.msra.mxu0 0.0
        %680 = vmatprep.subr.mxu0 0.0
        %681 = vmatpush1.msra.mxu0 0.0
        %682 = vmatprep.subr.mxu0 0.0
        %683 = vmatpush1.msra.mxu0 0.0
        %684 = vmatprep.subr.mxu0 0.0
        %685 = vmatpush1.msra.mxu0 0.0
        %686 = vmatprep.subr.mxu0 0.0
        %687 = vmatpush1.msra.mxu0 0.0
        %688 = vmatprep.subr.mxu0 0.0
        %689 = vmatpush1.msra.mxu0 0.0
        %690 = vmatprep.subr.mxu0 0.0
        %691 = vmatpush1.msra.mxu0 0.0
        %692 = vmatprep.subr.mxu0 0.0
        %693 = vmatpush1.msra.mxu0 0.0
        %694 = vmatprep.subr.mxu0 0.0
        %695 = vmatpush1.msra.mxu0 0.0
        %696 = vmatprep.subr.mxu0 0.0
        %697 = vmatpush1.msra.mxu0 0.0
        %698 = vmatprep.subr.mxu0 0.0
        %699 = vmatpush1.msra.mxu0 0.0
        %700 = vmatprep.subr.mxu0 0.0
        %701 = vmatpush1.msra.mxu0 0.0
        %702 = vmatprep.subr.mxu0 0.0
        %703 = vmatpush1.msra.mxu0 0.0
        %704 = vmatprep.subr.mxu0 0.0
        %705 = vmatpush1.msra.mxu0 0.0
        %706 = vmatprep.subr.mxu0 0.0
        %707 = vmatpush1.msra.mxu0 0.0
        %708 = vmatprep.subr.mxu0 0.0
        %709 = vmatpush1.msra.mxu0 0.0
        %710 = vmatprep.subr.mxu0 0.0
        %711 = vmatpush1.msra.mxu0 0.0
        %712 = vmatprep.subr.mxu0 0.0
        %713 = vmatpush1.msra.mxu0 0.0
        %714 = vmatprep.subr.mxu0 0.0
        %715 = vmatpush1.msra.mxu0 0.0
        %716 = vmatprep.subr.mxu0 0.0
        %717 = vmatpush1.msra.mxu0 0.0
        %718 = vmatprep.subr.mxu0 0.0
        %719 = vmatpush1.msra.mxu0 0.0
        %720 = vmatprep.mubr.f32.mxu0 0.0
        %721 = vmatmul.mubr.f32.gmra.mrb[0].mxu0 %v651
        %v722 = vpop.f32.mrb[0].mxu0
        %v723 = vadd.f32 0.0, %v722
        %v724 = vpop.f32.mrb[0].mxu0
        %725 = vmatprep.mubr.f32.mxu0 0.0
        %726 = vmatmul.mubr.f32.gmra.mrb[0].mxu0 %v654
        %v727 = vpop.f32.mrb[0].mxu0
        %v728 = vadd.f32 0.0, %v727
        %v729 = vpop.f32.mrb[0].mxu0
        %730 = vdwg.mxu0
        %s731 = scalar_lea.vmem %s239, 16 [#allocation5]
        %732 = vst.msk [vmem:[%s731] sm:$0xff] %vm510, %v723
        %733 = vst.msk [vmem:[%s731 + $0x8] sm:$0xff] %vm510, %v728
        %v734 = vsel %vm510, %v600, 0.0
        %v735 = vsel %vm510, %v605, 0.0
        %v736 = vadd.f32 %v734, %v735
        %v737 = vsel %vm510, %v610, 0.0
        %v738 = vadd.f32 %v736, %v737
        %v739 = vsel %vm510, %v615, 0.0
        %v740 = vadd.f32 %v738, %v739
        %v741 = vrot.slane %v740, 4
        %v742 = vadd.f32 %v740, %v741
        %v743 = vrot.slane %v742, 2
        %v744 = vadd.f32 %v742, %v743
        %v745 = vrot.slane %v744, 1
        %v746 = vadd.f32 %v744, %v745
        %v747 = vmul.f32 %v746, %v526
        %s748 = scalar_lea.vmem %s246, 1 [#allocation6]
        %749 = vst.msk [vmem:[%s748] sm:$0x1] %vm528, %v747
        %v751 = vsel %vm307, %v260, 0
        %753 = vmatprep.subr.mxu0 0.0
        %754 = vmatpush1.msra.mxu0 %v751
        %755 = vmatprep.subr.mxu0 0.0
        %756 = vmatpush1.msra.mxu0 0.0
        %757 = vmatprep.subr.mxu0 0.0
        %758 = vmatpush1.msra.mxu0 0.0
        %759 = vmatprep.subr.mxu0 0.0
        %760 = vmatpush1.msra.mxu0 0.0
        %761 = vmatprep.subr.mxu0 0.0
        %762 = vmatpush1.msra.mxu0 0.0
        %763 = vmatprep.subr.mxu0 0.0
        %764 = vmatpush1.msra.mxu0 0.0
        %765 = vmatprep.subr.mxu0 0.0
        %766 = vmatpush1.msra.mxu0 0.0
        %767 = vmatprep.subr.mxu0 0.0
        %768 = vmatpush1.msra.mxu0 0.0
        %769 = vmatprep.subr.mxu0 0.0
        %770 = vmatpush1.msra.mxu0 0.0
        %771 = vmatprep.subr.mxu0 0.0
        %772 = vmatpush1.msra.mxu0 0.0
        %773 = vmatprep.subr.mxu0 0.0
        %774 = vmatpush1.msra.mxu0 0.0
        %775 = vmatprep.subr.mxu0 0.0
        %776 = vmatpush1.msra.mxu0 0.0
        %777 = vmatprep.subr.mxu0 0.0
        %778 = vmatpush1.msra.mxu0 0.0
        %779 = vmatprep.subr.mxu0 0.0
        %780 = vmatpush1.msra.mxu0 0.0
        %781 = vmatprep.subr.mxu0 0.0
        %782 = vmatpush1.msra.mxu0 0.0
        %783 = vmatprep.subr.mxu0 0.0
        %784 = vmatpush1.msra.mxu0 0.0
        %785 = vmatprep.subr.mxu0 0.0
        %786 = vmatpush1.msra.mxu0 0.0
        %787 = vmatprep.subr.mxu0 0.0
        %788 = vmatpush1.msra.mxu0 0.0
        %789 = vmatprep.subr.mxu0 0.0
        %790 = vmatpush1.msra.mxu0 0.0
        %791 = vmatprep.subr.mxu0 0.0
        %792 = vmatpush1.msra.mxu0 0.0
        %793 = vmatprep.subr.mxu0 0.0
        %794 = vmatpush1.msra.mxu0 0.0
        %795 = vmatprep.subr.mxu0 0.0
        %796 = vmatpush1.msra.mxu0 0.0
        %797 = vmatprep.subr.mxu0 0.0
        %798 = vmatpush1.msra.mxu0 0.0
        %799 = vmatprep.subr.mxu0 0.0
        %800 = vmatpush1.msra.mxu0 0.0
        %801 = vmatprep.subr.mxu0 0.0
        %802 = vmatpush1.msra.mxu0 0.0
        %803 = vmatprep.subr.mxu0 0.0
        %804 = vmatpush1.msra.mxu0 0.0
        %805 = vmatprep.subr.mxu0 0.0
        %806 = vmatpush1.msra.mxu0 0.0
        %807 = vmatprep.subr.mxu0 0.0
        %808 = vmatpush1.msra.mxu0 0.0
        %809 = vmatprep.subr.mxu0 0.0
        %810 = vmatpush1.msra.mxu0 0.0
        %811 = vmatprep.subr.mxu0 0.0
        %812 = vmatpush1.msra.mxu0 0.0
        %813 = vmatprep.subr.mxu0 0.0
        %814 = vmatpush1.msra.mxu0 0.0
        %815 = vmatprep.subr.mxu0 0.0
        %816 = vmatpush1.msra.mxu0 0.0
        %817 = vmatprep.mubr.f32.mxu0 0.0
        %818 = vmatmul.mubr.f32.gmra.mrb[0].mxu0 %v296
        %v819 = vpop.f32.mrb[0].mxu0
        %v820 = vadd.f32 %v277, %v819
        %v821 = vpop.f32.mrb[0].mxu0
        %822 = vmatprep.mubr.f32.mxu0 0.0
        %823 = vmatmul.mubr.f32.gmra.mrb[0].mxu0 %v299
        %v824 = vpop.f32.mrb[0].mxu0
        %v825 = vadd.f32 %v282, %v824
        %v826 = vpop.f32.mrb[0].mxu0
        %827 = vmatprep.mubr.f32.mxu0 0.0
        %828 = vmatmul.mubr.f32.gmra.mrb[0].mxu0 %v302
        %v829 = vpop.f32.mrb[0].mxu0
        %v830 = vadd.f32 %v287, %v829
        %v831 = vpop.f32.mrb[0].mxu0
        %832 = vmatprep.mubr.f32.mxu0 0.0
        %833 = vmatmul.mubr.f32.gmra.mrb[0].mxu0 %v305
        %v834 = vpop.f32.mrb[0].mxu0
        %v835 = vadd.f32 %v292, %v834
        %v836 = vpop.f32.mrb[0].mxu0
        %837 = vdwg.mxu0
        %838 = vxpose.xlu0.b32.start [1/16] %v820, 128
        %839 = vxpose.xlu0.b32.cont [2/16] %v825, 128
        %840 = vxpose.xlu0.b32.cont [3/16] %v830, 128
        %841 = vxpose.xlu0.b32.cont [4/16] %v835, 128
        %842 = vxpose.xlu0.b32.cont [5/16] 0.0, 128
        %843 = vxpose.xlu0.b32.cont [6/16] 0.0, 128
        %844 = vxpose.xlu0.b32.cont [7/16] 0.0, 128
        %845 = vxpose.xlu0.b32.cont [8/16] 0.0, 128
        %846 = vxpose.xlu0.b32.cont [9/16] 0.0, 128
        %847 = vxpose.xlu0.b32.cont [10/16] 0.0, 128
        %848 = vxpose.xlu0.b32.cont [11/16] 0.0, 128
        %849 = vxpose.xlu0.b32.cont [12/16] 0.0, 128
        %850 = vxpose.xlu0.b32.cont [13/16] 0.0, 128
        %851 = vxpose.xlu0.b32.cont [14/16] 0.0, 128
        %852 = vxpose.xlu0.b32.cont [15/16] 0.0, 128
        %853 = vxpose.xlu0.b32.end [16/16] 0.0, 128
        %v854 = vpop.trf.xlu0
        %v855 = vpop.trf.xlu0
        %v856 = vpop.trf.xlu0
        %v857 = vpop.trf.xlu0
        %v858 = vpop.trf.xlu0
        %v859 = vpop.trf.xlu0
        %v860 = vpop.trf.xlu0
        %v861 = vpop.trf.xlu0
        %v862 = vpop.trf.xlu0
        %v863 = vpop.trf.xlu0
        %v864 = vpop.trf.xlu0
        %v865 = vpop.trf.xlu0
        %v866 = vpop.trf.xlu0
        %v867 = vpop.trf.xlu0
        %v868 = vpop.trf.xlu0
        %v869 = vpop.trf.xlu0
        %v871 = vsel %vm428, %v854, 0
        %v874 = vsel %vm428, %v855, 0
        %876 = vmatprep.subr.mxu0 0.0
        %877 = vmatpush1.msra.mxu0 %v820
        %878 = vmatprep.subr.mxu0 0.0
        %879 = vmatpush1.msra.mxu0 %v825
        %880 = vmatprep.subr.mxu0 0.0
        %881 = vmatpush1.msra.mxu0 %v830
        %882 = vmatprep.subr.mxu0 0.0
        %883 = vmatpush1.msra.mxu0 %v835
        %884 = vmatprep.subr.mxu0 0.0
        %885 = vmatpush1.msra.mxu0 0.0
        %886 = vmatprep.subr.mxu0 0.0
        %887 = vmatpush1.msra.mxu0 0.0
        %888 = vmatprep.subr.mxu0 0.0
        %889 = vmatpush1.msra.mxu0 0.0
        %890 = vmatprep.subr.mxu0 0.0
        %891 = vmatpush1.msra.mxu0 0.0
        %892 = vmatprep.subr.mxu0 0.0
        %893 = vmatpush1.msra.mxu0 0.0
        %894 = vmatprep.subr.mxu0 0.0
        %895 = vmatpush1.msra.mxu0 0.0
        %896 = vmatprep.subr.mxu0 0.0
        %897 = vmatpush1.msra.mxu0 0.0
        %898 = vmatprep.subr.mxu0 0.0
        %899 = vmatpush1.msra.mxu0 0.0
        %900 = vmatprep.subr.mxu0 0.0
        %901 = vmatpush1.msra.mxu0 0.0
        %902 = vmatprep.subr.mxu0 0.0
        %903 = vmatpush1.msra.mxu0 0.0
        %904 = vmatprep.subr.mxu0 0.0
        %905 = vmatpush1.msra.mxu0 0.0
        %906 = vmatprep.subr.mxu0 0.0
        %907 = vmatpush1.msra.mxu0 0.0
        %908 = vmatprep.subr.mxu0 0.0
        %909 = vmatpush1.msra.mxu0 0.0
        %910 = vmatprep.subr.mxu0 0.0
        %911 = vmatpush1.msra.mxu0 0.0
        %912 = vmatprep.subr.mxu0 0.0
        %913 = vmatpush1.msra.mxu0 0.0
        %914 = vmatprep.subr.mxu0 0.0
        %915 = vmatpush1.msra.mxu0 0.0
        %916 = vmatprep.subr.mxu0 0.0
        %917 = vmatpush1.msra.mxu0 0.0
        %918 = vmatprep.subr.mxu0 0.0
        %919 = vmatpush1.msra.mxu0 0.0
        %920 = vmatprep.subr.mxu0 0.0
        %921 = vmatpush1.msra.mxu0 0.0
        %922 = vmatprep.subr.mxu0 0.0
        %923 = vmatpush1.msra.mxu0 0.0
        %924 = vmatprep.subr.mxu0 0.0
        %925 = vmatpush1.msra.mxu0 0.0
        %926 = vmatprep.subr.mxu0 0.0
        %927 = vmatpush1.msra.mxu0 0.0
        %928 = vmatprep.subr.mxu0 0.0
        %929 = vmatpush1.msra.mxu0 0.0
        %930 = vmatprep.subr.mxu0 0.0
        %931 = vmatpush1.msra.mxu0 0.0
        %932 = vmatprep.subr.mxu0 0.0
        %933 = vmatpush1.msra.mxu0 0.0
        %934 = vmatprep.subr.mxu0 0.0
        %935 = vmatpush1.msra.mxu0 0.0
        %936 = vmatprep.subr.mxu0 0.0
        %937 = vmatpush1.msra.mxu0 0.0
        %938 = vmatprep.subr.mxu0 0.0
        %939 = vmatpush1.msra.mxu0 0.0
        %940 = vmatprep.mubr.f32.mxu0 0.0
        %941 = vmatmul.mubr.f32.gmra.mrb[0].mxu0 %v871
        %v942 = vpop.f32.mrb[0].mxu0
        %v943 = vadd.f32 0.0, %v942
        %v944 = vpop.f32.mrb[0].mxu0
        %945 = vmatprep.mubr.f32.mxu0 0.0
        %946 = vmatmul.mubr.f32.gmra.mrb[0].mxu0 %v874
        %v947 = vpop.f32.mrb[0].mxu0
        %v948 = vadd.f32 0.0, %v947
        %v949 = vpop.f32.mrb[0].mxu0
        %950 = vdwg.mxu0
        %s951 = scalar_lea.vmem %s239, 32 [#allocation5]
        %952 = vst.msk [vmem:[%s951] sm:$0xff] %vm510, %v943
        %953 = vst.msk [vmem:[%s951 + $0x8] sm:$0xff] %vm510, %v948
        %v954 = vsel %vm510, %v820, 0.0
        %v955 = vsel %vm510, %v825, 0.0
        %v956 = vadd.f32 %v954, %v955
        %v957 = vsel %vm510, %v830, 0.0
        %v958 = vadd.f32 %v956, %v957
        %v959 = vsel %vm510, %v835, 0.0
        %v960 = vadd.f32 %v958, %v959
        %v961 = vrot.slane %v960, 4
        %v962 = vadd.f32 %v960, %v961
        %v963 = vrot.slane %v962, 2
        %v964 = vadd.f32 %v962, %v963
        %v965 = vrot.slane %v964, 1
        %v966 = vadd.f32 %v964, %v965
        %v967 = vmul.f32 %v966, %v526
        %s968 = scalar_lea.vmem %s246, 2 [#allocation6]
        %969 = vst.msk [vmem:[%s968] sm:$0x1] %vm528, %v967
        %v971 = vsel %vm307, %v261, 0
        %973 = vmatprep.subr.mxu0 0.0
        %974 = vmatpush1.msra.mxu0 %v971
        %975 = vmatprep.subr.mxu0 0.0
        %976 = vmatpush1.msra.mxu0 0.0
        %977 = vmatprep.subr.mxu0 0.0
        %978 = vmatpush1.msra.mxu0 0.0
        %979 = vmatprep.subr.mxu0 0.0
        %980 = vmatpush1.msra.mxu0 0.0
        %981 = vmatprep.subr.mxu0 0.0
        %982 = vmatpush1.msra.mxu0 0.0
        %983 = vmatprep.subr.mxu0 0.0
        %984 = vmatpush1.msra.mxu0 0.0
        %985 = vmatprep.subr.mxu0 0.0
        %986 = vmatpush1.msra.mxu0 0.0
        %987 = vmatprep.subr.mxu0 0.0
        %988 = vmatpush1.msra.mxu0 0.0
        %989 = vmatprep.subr.mxu0 0.0
        %990 = vmatpush1.msra.mxu0 0.0
        %991 = vmatprep.subr.mxu0 0.0
        %992 = vmatpush1.msra.mxu0 0.0
        %993 = vmatprep.subr.mxu0 0.0
        %994 = vmatpush1.msra.mxu0 0.0
        %995 = vmatprep.subr.mxu0 0.0
        %996 = vmatpush1.msra.mxu0 0.0
        %997 = vmatprep.subr.mxu0 0.0
        %998 = vmatpush1.msra.mxu0 0.0
        %999 = vmatprep.subr.mxu0 0.0
        %1000 = vmatpush1.msra.mxu0 0.0
        %1001 = vmatprep.subr.mxu0 0.0
        %1002 = vmatpush1.msra.mxu0 0.0
        %1003 = vmatprep.subr.mxu0 0.0
        %1004 = vmatpush1.msra.mxu0 0.0
        %1005 = vmatprep.subr.mxu0 0.0
        %1006 = vmatpush1.msra.mxu0 0.0
        %1007 = vmatprep.subr.mxu0 0.0
        %1008 = vmatpush1.msra.mxu0 0.0
        %1009 = vmatprep.subr.mxu0 0.0
        %1010 = vmatpush1.msra.mxu0 0.0
        %1011 = vmatprep.subr.mxu0 0.0
        %1012 = vmatpush1.msra.mxu0 0.0
        %1013 = vmatprep.subr.mxu0 0.0
        %1014 = vmatpush1.msra.mxu0 0.0
        %1015 = vmatprep.subr.mxu0 0.0
        %1016 = vmatpush1.msra.mxu0 0.0
        %1017 = vmatprep.subr.mxu0 0.0
        %1018 = vmatpush1.msra.mxu0 0.0
        %1019 = vmatprep.subr.mxu0 0.0
        %1020 = vmatpush1.msra.mxu0 0.0
        %1021 = vmatprep.subr.mxu0 0.0
        %1022 = vmatpush1.msra.mxu0 0.0
        %1023 = vmatprep.subr.mxu0 0.0
        %1024 = vmatpush1.msra.mxu0 0.0
        %1025 = vmatprep.subr.mxu0 0.0
        %1026 = vmatpush1.msra.mxu0 0.0
        %1027 = vmatprep.subr.mxu0 0.0
        %1028 = vmatpush1.msra.mxu0 0.0
        %1029 = vmatprep.subr.mxu0 0.0
        %1030 = vmatpush1.msra.mxu0 0.0
        %1031 = vmatprep.subr.mxu0 0.0
        %1032 = vmatpush1.msra.mxu0 0.0
        %1033 = vmatprep.subr.mxu0 0.0
        %1034 = vmatpush1.msra.mxu0 0.0
        %1035 = vmatprep.subr.mxu0 0.0
        %1036 = vmatpush1.msra.mxu0 0.0
        %1037 = vmatprep.mubr.f32.mxu0 0.0
        %1038 = vmatmul.mubr.f32.gmra.mrb[0].mxu0 %v296
        %v1039 = vpop.f32.mrb[0].mxu0
        %v1040 = vadd.f32 %v277, %v1039
        %v1041 = vpop.f32.mrb[0].mxu0
        %1042 = vmatprep.mubr.f32.mxu0 0.0
        %1043 = vmatmul.mubr.f32.gmra.mrb[0].mxu0 %v299
        %v1044 = vpop.f32.mrb[0].mxu0
        %v1045 = vadd.f32 %v282, %v1044
        %v1046 = vpop.f32.mrb[0].mxu0
        %1047 = vmatprep.mubr.f32.mxu0 0.0
        %1048 = vmatmul.mubr.f32.gmra.mrb[0].mxu0 %v302
        %v1049 = vpop.f32.mrb[0].mxu0
        %v1050 = vadd.f32 %v287, %v1049
        %v1051 = vpop.f32.mrb[0].mxu0
        %1052 = vmatprep.mubr.f32.mxu0 0.0
        %1053 = vmatmul.mubr.f32.gmra.mrb[0].mxu0 %v305
        %v1054 = vpop.f32.mrb[0].mxu0
        %v1055 = vadd.f32 %v292, %v1054
        %v1056 = vpop.f32.mrb[0].mxu0
        %1057 = vdwg.mxu0
        %1058 = vxpose.xlu0.b32.start [1/16] %v1040, 128
        %1059 = vxpose.xlu0.b32.cont [2/16] %v1045, 128
        %1060 = vxpose.xlu0.b32.cont [3/16] %v1050, 128
        %1061 = vxpose.xlu0.b32.cont [4/16] %v1055, 128
        %1062 = vxpose.xlu0.b32.cont [5/16] 0.0, 128
        %1063 = vxpose.xlu0.b32.cont [6/16] 0.0, 128
        %1064 = vxpose.xlu0.b32.cont [7/16] 0.0, 128
        %1065 = vxpose.xlu0.b32.cont [8/16] 0.0, 128
        %1066 = vxpose.xlu0.b32.cont [9/16] 0.0, 128
        %1067 = vxpose.xlu0.b32.cont [10/16] 0.0, 128
        %1068 = vxpose.xlu0.b32.cont [11/16] 0.0, 128
        %1069 = vxpose.xlu0.b32.cont [12/16] 0.0, 128
        %1070 = vxpose.xlu0.b32.cont [13/16] 0.0, 128
        %1071 = vxpose.xlu0.b32.cont [14/16] 0.0, 128
        %1072 = vxpose.xlu0.b32.cont [15/16] 0.0, 128
        %1073 = vxpose.xlu0.b32.end [16/16] 0.0, 128
        %v1074 = vpop.trf.xlu0
        %v1075 = vpop.trf.xlu0
        %v1076 = vpop.trf.xlu0
        %v1077 = vpop.trf.xlu0
        %v1078 = vpop.trf.xlu0
        %v1079 = vpop.trf.xlu0
        %v1080 = vpop.trf.xlu0
        %v1081 = vpop.trf.xlu0
        %v1082 = vpop.trf.xlu0
        %v1083 = vpop.trf.xlu0
        %v1084 = vpop.trf.xlu0
        %v1085 = vpop.trf.xlu0
        %v1086 = vpop.trf.xlu0
        %v1087 = vpop.trf.xlu0
        %v1088 = vpop.trf.xlu0
        %v1089 = vpop.trf.xlu0
        %v1091 = vsel %vm428, %v1074, 0
        %v1094 = vsel %vm428, %v1075, 0
        %1096 = vmatprep.subr.mxu0 0.0
        %1097 = vmatpush1.msra.mxu0 %v1040
        %1098 = vmatprep.subr.mxu0 0.0
        %1099 = vmatpush1.msra.mxu0 %v1045
        %1100 = vmatprep.subr.mxu0 0.0
        %1101 = vmatpush1.msra.mxu0 %v1050
        %1102 = vmatprep.subr.mxu0 0.0
        %1103 = vmatpush1.msra.mxu0 %v1055
        %1104 = vmatprep.subr.mxu0 0.0
        %1105 = vmatpush1.msra.mxu0 0.0
        %1106 = vmatprep.subr.mxu0 0.0
        %1107 = vmatpush1.msra.mxu0 0.0
        %1108 = vmatprep.subr.mxu0 0.0
        %1109 = vmatpush1.msra.mxu0 0.0
        %1110 = vmatprep.subr.mxu0 0.0
        %1111 = vmatpush1.msra.mxu0 0.0
        %1112 = vmatprep.subr.mxu0 0.0
        %1113 = vmatpush1.msra.mxu0 0.0
        %1114 = vmatprep.subr.mxu0 0.0
        %1115 = vmatpush1.msra.mxu0 0.0
        %1116 = vmatprep.subr.mxu0 0.0
        %1117 = vmatpush1.msra.mxu0 0.0
        %1118 = vmatprep.subr.mxu0 0.0
        %1119 = vmatpush1.msra.mxu0 0.0
        %1120 = vmatprep.subr.mxu0 0.0
        %1121 = vmatpush1.msra.mxu0 0.0
        %1122 = vmatprep.subr.mxu0 0.0
        %1123 = vmatpush1.msra.mxu0 0.0
        %1124 = vmatprep.subr.mxu0 0.0
        %1125 = vmatpush1.msra.mxu0 0.0
        %1126 = vmatprep.subr.mxu0 0.0
        %1127 = vmatpush1.msra.mxu0 0.0
        %1128 = vmatprep.subr.mxu0 0.0
        %1129 = vmatpush1.msra.mxu0 0.0
        %1130 = vmatprep.subr.mxu0 0.0
        %1131 = vmatpush1.msra.mxu0 0.0
        %1132 = vmatprep.subr.mxu0 0.0
        %1133 = vmatpush1.msra.mxu0 0.0
        %1134 = vmatprep.subr.mxu0 0.0
        %1135 = vmatpush1.msra.mxu0 0.0
        %1136 = vmatprep.subr.mxu0 0.0
        %1137 = vmatpush1.msra.mxu0 0.0
        %1138 = vmatprep.subr.mxu0 0.0
        %1139 = vmatpush1.msra.mxu0 0.0
        %1140 = vmatprep.subr.mxu0 0.0
        %1141 = vmatpush1.msra.mxu0 0.0
        %1142 = vmatprep.subr.mxu0 0.0
        %1143 = vmatpush1.msra.mxu0 0.0
        %1144 = vmatprep.subr.mxu0 0.0
        %1145 = vmatpush1.msra.mxu0 0.0
        %1146 = vmatprep.subr.mxu0 0.0
        %1147 = vmatpush1.msra.mxu0 0.0
        %1148 = vmatprep.subr.mxu0 0.0
        %1149 = vmatpush1.msra.mxu0 0.0
        %1150 = vmatprep.subr.mxu0 0.0
        %1151 = vmatpush1.msra.mxu0 0.0
        %1152 = vmatprep.subr.mxu0 0.0
        %1153 = vmatpush1.msra.mxu0 0.0
        %1154 = vmatprep.subr.mxu0 0.0
        %1155 = vmatpush1.msra.mxu0 0.0
        %1156 = vmatprep.subr.mxu0 0.0
        %1157 = vmatpush1.msra.mxu0 0.0
        %1158 = vmatprep.subr.mxu0 0.0
        %1159 = vmatpush1.msra.mxu0 0.0
        %1160 = vmatprep.mubr.f32.mxu0 0.0
        %1161 = vmatmul.mubr.f32.gmra.mrb[0].mxu0 %v1091
        %v1162 = vpop.f32.mrb[0].mxu0
        %v1163 = vadd.f32 0.0, %v1162
        %v1164 = vpop.f32.mrb[0].mxu0
        %1165 = vmatprep.mubr.f32.mxu0 0.0
        %1166 = vmatmul.mubr.f32.gmra.mrb[0].mxu0 %v1094
        %v1167 = vpop.f32.mrb[0].mxu0
        %v1168 = vadd.f32 0.0, %v1167
        %v1169 = vpop.f32.mrb[0].mxu0
        %1170 = vdwg.mxu0
        %s1171 = scalar_lea.vmem %s239, 48 [#allocation5]
        %1172 = vst.msk [vmem:[%s1171] sm:$0xff] %vm510, %v1163
        %1173 = vst.msk [vmem:[%s1171 + $0x8] sm:$0xff] %vm510, %v1168
        %v1174 = vsel %vm510, %v1040, 0.0
        %v1175 = vsel %vm510, %v1045, 0.0
        %v1176 = vadd.f32 %v1174, %v1175
        %v1177 = vsel %vm510, %v1050, 0.0
        %v1178 = vadd.f32 %v1176, %v1177
        %v1179 = vsel %vm510, %v1055, 0.0
        %v1180 = vadd.f32 %v1178, %v1179
        %v1181 = vrot.slane %v1180, 4
        %v1182 = vadd.f32 %v1180, %v1181
        %v1183 = vrot.slane %v1182, 2
        %v1184 = vadd.f32 %v1182, %v1183
        %v1185 = vrot.slane %v1184, 1
        %v1186 = vadd.f32 %v1184, %v1185
        %v1187 = vmul.f32 %v1186, %v526
        %s1188 = scalar_lea.vmem %s246, 3 [#allocation6]
        %1189 = vst.msk [vmem:[%s1188] sm:$0x1] %vm528, %v1187
        %v1191 = vsel %vm307, %v262, 0
        %1193 = vmatprep.subr.mxu0 0.0
        %1194 = vmatpush1.msra.mxu0 %v1191
        %1195 = vmatprep.subr.mxu0 0.0
        %1196 = vmatpush1.msra.mxu0 0.0
        %1197 = vmatprep.subr.mxu0 0.0
        %1198 = vmatpush1.msra.mxu0 0.0
        %1199 = vmatprep.subr.mxu0 0.0
        %1200 = vmatpush1.msra.mxu0 0.0
        %1201 = vmatprep.subr.mxu0 0.0
        %1202 = vmatpush1.msra.mxu0 0.0
        %1203 = vmatprep.subr.mxu0 0.0
        %1204 = vmatpush1.msra.mxu0 0.0
        %1205 = vmatprep.subr.mxu0 0.0
        %1206 = vmatpush1.msra.mxu0 0.0
        %1207 = vmatprep.subr.mxu0 0.0
        %1208 = vmatpush1.msra.mxu0 0.0
        %1209 = vmatprep.subr.mxu0 0.0
        %1210 = vmatpush1.msra.mxu0 0.0
        %1211 = vmatprep.subr.mxu0 0.0
        %1212 = vmatpush1.msra.mxu0 0.0
        %1213 = vmatprep.subr.mxu0 0.0
        %1214 = vmatpush1.msra.mxu0 0.0
        %1215 = vmatprep.subr.mxu0 0.0
        %1216 = vmatpush1.msra.mxu0 0.0
        %1217 = vmatprep.subr.mxu0 0.0
        %1218 = vmatpush1.msra.mxu0 0.0
        %1219 = vmatprep.subr.mxu0 0.0
        %1220 = vmatpush1.msra.mxu0 0.0
        %1221 = vmatprep.subr.mxu0 0.0
        %1222 = vmatpush1.msra.mxu0 0.0
        %1223 = vmatprep.subr.mxu0 0.0
        %1224 = vmatpush1.msra.mxu0 0.0
        %1225 = vmatprep.subr.mxu0 0.0
        %1226 = vmatpush1.msra.mxu0 0.0
        %1227 = vmatprep.subr.mxu0 0.0
        %1228 = vmatpush1.msra.mxu0 0.0
        %1229 = vmatprep.subr.mxu0 0.0
        %1230 = vmatpush1.msra.mxu0 0.0
        %1231 = vmatprep.subr.mxu0 0.0
        %1232 = vmatpush1.msra.mxu0 0.0
        %1233 = vmatprep.subr.mxu0 0.0
        %1234 = vmatpush1.msra.mxu0 0.0
        %1235 = vmatprep.subr.mxu0 0.0
        %1236 = vmatpush1.msra.mxu0 0.0
        %1237 = vmatprep.subr.mxu0 0.0
        %1238 = vmatpush1.msra.mxu0 0.0
        %1239 = vmatprep.subr.mxu0 0.0
        %1240 = vmatpush1.msra.mxu0 0.0
        %1241 = vmatprep.subr.mxu0 0.0
        %1242 = vmatpush1.msra.mxu0 0.0
        %1243 = vmatprep.subr.mxu0 0.0
        %1244 = vmatpush1.msra.mxu0 0.0
        %1245 = vmatprep.subr.mxu0 0.0
        %1246 = vmatpush1.msra.mxu0 0.0
        %1247 = vmatprep.subr.mxu0 0.0
        %1248 = vmatpush1.msra.mxu0 0.0
        %1249 = vmatprep.subr.mxu0 0.0
        %1250 = vmatpush1.msra.mxu0 0.0
        %1251 = vmatprep.subr.mxu0 0.0
        %1252 = vmatpush1.msra.mxu0 0.0
        %1253 = vmatprep.subr.mxu0 0.0
        %1254 = vmatpush1.msra.mxu0 0.0
        %1255 = vmatprep.subr.mxu0 0.0
        %1256 = vmatpush1.msra.mxu0 0.0
        %1257 = vmatprep.mubr.f32.mxu0 0.0
        %1258 = vmatmul.mubr.f32.gmra.mrb[0].mxu0 %v296
        %v1259 = vpop.f32.mrb[0].mxu0
        %v1260 = vadd.f32 %v277, %v1259
        %v1261 = vpop.f32.mrb[0].mxu0
        %1262 = vmatprep.mubr.f32.mxu0 0.0
        %1263 = vmatmul.mubr.f32.gmra.mrb[0].mxu0 %v299
        %v1264 = vpop.f32.mrb[0].mxu0
        %v1265 = vadd.f32 %v282, %v1264
        %v1266 = vpop.f32.mrb[0].mxu0
        %1267 = vmatprep.mubr.f32.mxu0 0.0
        %1268 = vmatmul.mubr.f32.gmra.mrb[0].mxu0 %v302
        %v1269 = vpop.f32.mrb[0].mxu0
        %v1270 = vadd.f32 %v287, %v1269
        %v1271 = vpop.f32.mrb[0].mxu0
        %1272 = vmatprep.mubr.f32.mxu0 0.0
        %1273 = vmatmul.mubr.f32.gmra.mrb[0].mxu0 %v305
        %v1274 = vpop.f32.mrb[0].mxu0
        %v1275 = vadd.f32 %v292, %v1274
        %v1276 = vpop.f32.mrb[0].mxu0
        %1277 = vdwg.mxu0
        %1278 = vxpose.xlu0.b32.start [1/16] %v1260, 128
        %1279 = vxpose.xlu0.b32.cont [2/16] %v1265, 128
        %1280 = vxpose.xlu0.b32.cont [3/16] %v1270, 128
        %1281 = vxpose.xlu0.b32.cont [4/16] %v1275, 128
        %1282 = vxpose.xlu0.b32.cont [5/16] 0.0, 128
        %1283 = vxpose.xlu0.b32.cont [6/16] 0.0, 128
        %1284 = vxpose.xlu0.b32.cont [7/16] 0.0, 128
        %1285 = vxpose.xlu0.b32.cont [8/16] 0.0, 128
        %1286 = vxpose.xlu0.b32.cont [9/16] 0.0, 128
        %1287 = vxpose.xlu0.b32.cont [10/16] 0.0, 128
        %1288 = vxpose.xlu0.b32.cont [11/16] 0.0, 128
        %1289 = vxpose.xlu0.b32.cont [12/16] 0.0, 128
        %1290 = vxpose.xlu0.b32.cont [13/16] 0.0, 128
        %1291 = vxpose.xlu0.b32.cont [14/16] 0.0, 128
        %1292 = vxpose.xlu0.b32.cont [15/16] 0.0, 128
        %1293 = vxpose.xlu0.b32.end [16/16] 0.0, 128
        %v1294 = vpop.trf.xlu0
        %v1295 = vpop.trf.xlu0
        %v1296 = vpop.trf.xlu0
        %v1297 = vpop.trf.xlu0
        %v1298 = vpop.trf.xlu0
        %v1299 = vpop.trf.xlu0
        %v1300 = vpop.trf.xlu0
        %v1301 = vpop.trf.xlu0
        %v1302 = vpop.trf.xlu0
        %v1303 = vpop.trf.xlu0
        %v1304 = vpop.trf.xlu0
        %v1305 = vpop.trf.xlu0
        %v1306 = vpop.trf.xlu0
        %v1307 = vpop.trf.xlu0
        %v1308 = vpop.trf.xlu0
        %v1309 = vpop.trf.xlu0
        %v1311 = vsel %vm428, %v1294, 0
        %v1314 = vsel %vm428, %v1295, 0
        %1316 = vmatprep.subr.mxu0 0.0
        %1317 = vmatpush1.msra.mxu0 %v1260
        %1318 = vmatprep.subr.mxu0 0.0
        %1319 = vmatpush1.msra.mxu0 %v1265
        %1320 = vmatprep.subr.mxu0 0.0
        %1321 = vmatpush1.msra.mxu0 %v1270
        %1322 = vmatprep.subr.mxu0 0.0
        %1323 = vmatpush1.msra.mxu0 %v1275
        %1324 = vmatprep.subr.mxu0 0.0
        %1325 = vmatpush1.msra.mxu0 0.0
        %1326 = vmatprep.subr.mxu0 0.0
        %1327 = vmatpush1.msra.mxu0 0.0
        %1328 = vmatprep.subr.mxu0 0.0
        %1329 = vmatpush1.msra.mxu0 0.0
        %1330 = vmatprep.subr.mxu0 0.0
        %1331 = vmatpush1.msra.mxu0 0.0
        %1332 = vmatprep.subr.mxu0 0.0
        %1333 = vmatpush1.msra.mxu0 0.0
        %1334 = vmatprep.subr.mxu0 0.0
        %1335 = vmatpush1.msra.mxu0 0.0
        %1336 = vmatprep.subr.mxu0 0.0
        %1337 = vmatpush1.msra.mxu0 0.0
        %1338 = vmatprep.subr.mxu0 0.0
        %1339 = vmatpush1.msra.mxu0 0.0
        %1340 = vmatprep.subr.mxu0 0.0
        %1341 = vmatpush1.msra.mxu0 0.0
        %1342 = vmatprep.subr.mxu0 0.0
        %1343 = vmatpush1.msra.mxu0 0.0
        %1344 = vmatprep.subr.mxu0 0.0
        %1345 = vmatpush1.msra.mxu0 0.0
        %1346 = vmatprep.subr.mxu0 0.0
        %1347 = vmatpush1.msra.mxu0 0.0
        %1348 = vmatprep.subr.mxu0 0.0
        %1349 = vmatpush1.msra.mxu0 0.0
        %1350 = vmatprep.subr.mxu0 0.0
        %1351 = vmatpush1.msra.mxu0 0.0
        %1352 = vmatprep.subr.mxu0 0.0
        %1353 = vmatpush1.msra.mxu0 0.0
        %1354 = vmatprep.subr.mxu0 0.0
        %1355 = vmatpush1.msra.mxu0 0.0
        %1356 = vmatprep.subr.mxu0 0.0
        %1357 = vmatpush1.msra.mxu0 0.0
        %1358 = vmatprep.subr.mxu0 0.0
        %1359 = vmatpush1.msra.mxu0 0.0
        %1360 = vmatprep.subr.mxu0 0.0
        %1361 = vmatpush1.msra.mxu0 0.0
        %1362 = vmatprep.subr.mxu0 0.0
        %1363 = vmatpush1.msra.mxu0 0.0
        %1364 = vmatprep.subr.mxu0 0.0
        %1365 = vmatpush1.msra.mxu0 0.0
        %1366 = vmatprep.subr.mxu0 0.0
        %1367 = vmatpush1.msra.mxu0 0.0
        %1368 = vmatprep.subr.mxu0 0.0
        %1369 = vmatpush1.msra.mxu0 0.0
        %1370 = vmatprep.subr.mxu0 0.0
        %1371 = vmatpush1.msra.mxu0 0.0
        %1372 = vmatprep.subr.mxu0 0.0
        %1373 = vmatpush1.msra.mxu0 0.0
        %1374 = vmatprep.subr.mxu0 0.0
        %1375 = vmatpush1.msra.mxu0 0.0
        %1376 = vmatprep.subr.mxu0 0.0
        %1377 = vmatpush1.msra.mxu0 0.0
        %1378 = vmatprep.subr.mxu0 0.0
        %1379 = vmatpush1.msra.mxu0 0.0
        %1380 = vmatprep.mubr.f32.mxu0 0.0
        %1381 = vmatmul.mubr.f32.gmra.mrb[0].mxu0 %v1311
        %v1382 = vpop.f32.mrb[0].mxu0
        %v1383 = vadd.f32 0.0, %v1382
        %v1384 = vpop.f32.mrb[0].mxu0
        %1385 = vmatprep.mubr.f32.mxu0 0.0
        %1386 = vmatmul.mubr.f32.gmra.mrb[0].mxu0 %v1314
        %v1387 = vpop.f32.mrb[0].mxu0
        %v1388 = vadd.f32 0.0, %v1387
        %v1389 = vpop.f32.mrb[0].mxu0
        %1390 = vdwg.mxu0
        %s1391 = scalar_lea.vmem %s239, 64 [#allocation5]
        %1392 = vst.msk [vmem:[%s1391] sm:$0xff] %vm510, %v1383
        %1393 = vst.msk [vmem:[%s1391 + $0x8] sm:$0xff] %vm510, %v1388
        %v1394 = vsel %vm510, %v1260, 0.0
        %v1395 = vsel %vm510, %v1265, 0.0
        %v1396 = vadd.f32 %v1394, %v1395
        %v1397 = vsel %vm510, %v1270, 0.0
        %v1398 = vadd.f32 %v1396, %v1397
        %v1399 = vsel %vm510, %v1275, 0.0
        %v1400 = vadd.f32 %v1398, %v1399
        %v1401 = vrot.slane %v1400, 4
        %v1402 = vadd.f32 %v1400, %v1401
        %v1403 = vrot.slane %v1402, 2
        %v1404 = vadd.f32 %v1402, %v1403
        %v1405 = vrot.slane %v1404, 1
        %v1406 = vadd.f32 %v1404, %v1405
        %v1407 = vmul.f32 %v1406, %v526
        %s1408 = scalar_lea.vmem %s246, 4 [#allocation6]
        %1409 = vst.msk [vmem:[%s1408] sm:$0x1] %vm528, %v1407
        %v1411 = vsel %vm307, %v263, 0
        %1413 = vmatprep.subr.mxu0 0.0
        %1414 = vmatpush1.msra.mxu0 %v1411
        %1415 = vmatprep.subr.mxu0 0.0
        %1416 = vmatpush1.msra.mxu0 0.0
        %1417 = vmatprep.subr.mxu0 0.0
        %1418 = vmatpush1.msra.mxu0 0.0
        %1419 = vmatprep.subr.mxu0 0.0
        %1420 = vmatpush1.msra.mxu0 0.0
        %1421 = vmatprep.subr.mxu0 0.0
        %1422 = vmatpush1.msra.mxu0 0.0
        %1423 = vmatprep.subr.mxu0 0.0
        %1424 = vmatpush1.msra.mxu0 0.0
        %1425 = vmatprep.subr.mxu0 0.0
        %1426 = vmatpush1.msra.mxu0 0.0
        %1427 = vmatprep.subr.mxu0 0.0
        %1428 = vmatpush1.msra.mxu0 0.0
        %1429 = vmatprep.subr.mxu0 0.0
        %1430 = vmatpush1.msra.mxu0 0.0
        %1431 = vmatprep.subr.mxu0 0.0
        %1432 = vmatpush1.msra.mxu0 0.0
        %1433 = vmatprep.subr.mxu0 0.0
        %1434 = vmatpush1.msra.mxu0 0.0
        %1435 = vmatprep.subr.mxu0 0.0
        %1436 = vmatpush1.msra.mxu0 0.0
        %1437 = vmatprep.subr.mxu0 0.0
        %1438 = vmatpush1.msra.mxu0 0.0
        %1439 = vmatprep.subr.mxu0 0.0
        %1440 = vmatpush1.msra.mxu0 0.0
        %1441 = vmatprep.subr.mxu0 0.0
        %1442 = vmatpush1.msra.mxu0 0.0
        %1443 = vmatprep.subr.mxu0 0.0
        %1444 = vmatpush1.msra.mxu0 0.0
        %1445 = vmatprep.subr.mxu0 0.0
        %1446 = vmatpush1.msra.mxu0 0.0
        %1447 = vmatprep.subr.mxu0 0.0
        %1448 = vmatpush1.msra.mxu0 0.0
        %1449 = vmatprep.subr.mxu0 0.0
        %1450 = vmatpush1.msra.mxu0 0.0
        %1451 = vmatprep.subr.mxu0 0.0
        %1452 = vmatpush1.msra.mxu0 0.0
        %1453 = vmatprep.subr.mxu0 0.0
        %1454 = vmatpush1.msra.mxu0 0.0
        %1455 = vmatprep.subr.mxu0 0.0
        %1456 = vmatpush1.msra.mxu0 0.0
        %1457 = vmatprep.subr.mxu0 0.0
        %1458 = vmatpush1.msra.mxu0 0.0
        %1459 = vmatprep.subr.mxu0 0.0
        %1460 = vmatpush1.msra.mxu0 0.0
        %1461 = vmatprep.subr.mxu0 0.0
        %1462 = vmatpush1.msra.mxu0 0.0
        %1463 = vmatprep.subr.mxu0 0.0
        %1464 = vmatpush1.msra.mxu0 0.0
        %1465 = vmatprep.subr.mxu0 0.0
        %1466 = vmatpush1.msra.mxu0 0.0
        %1467 = vmatprep.subr.mxu0 0.0
        %1468 = vmatpush1.msra.mxu0 0.0
        %1469 = vmatprep.subr.mxu0 0.0
        %1470 = vmatpush1.msra.mxu0 0.0
        %1471 = vmatprep.subr.mxu0 0.0
        %1472 = vmatpush1.msra.mxu0 0.0
        %1473 = vmatprep.subr.mxu0 0.0
        %1474 = vmatpush1.msra.mxu0 0.0
        %1475 = vmatprep.subr.mxu0 0.0
        %1476 = vmatpush1.msra.mxu0 0.0
        %1477 = vmatprep.mubr.f32.mxu0 0.0
        %1478 = vmatmul.mubr.f32.gmra.mrb[0].mxu0 %v296
        %v1479 = vpop.f32.mrb[0].mxu0
        %v1480 = vadd.f32 %v277, %v1479
        %v1481 = vpop.f32.mrb[0].mxu0
        %1482 = vmatprep.mubr.f32.mxu0 0.0
        %1483 = vmatmul.mubr.f32.gmra.mrb[0].mxu0 %v299
        %v1484 = vpop.f32.mrb[0].mxu0
        %v1485 = vadd.f32 %v282, %v1484
        %v1486 = vpop.f32.mrb[0].mxu0
        %1487 = vmatprep.mubr.f32.mxu0 0.0
        %1488 = vmatmul.mubr.f32.gmra.mrb[0].mxu0 %v302
        %v1489 = vpop.f32.mrb[0].mxu0
        %v1490 = vadd.f32 %v287, %v1489
        %v1491 = vpop.f32.mrb[0].mxu0
        %1492 = vmatprep.mubr.f32.mxu0 0.0
        %1493 = vmatmul.mubr.f32.gmra.mrb[0].mxu0 %v305
        %v1494 = vpop.f32.mrb[0].mxu0
        %v1495 = vadd.f32 %v292, %v1494
        %v1496 = vpop.f32.mrb[0].mxu0
        %1497 = vdwg.mxu0
        %1498 = vxpose.xlu0.b32.start [1/16] %v1480, 128
        %1499 = vxpose.xlu0.b32.cont [2/16] %v1485, 128
        %1500 = vxpose.xlu0.b32.cont [3/16] %v1490, 128
        %1501 = vxpose.xlu0.b32.cont [4/16] %v1495, 128
        %1502 = vxpose.xlu0.b32.cont [5/16] 0.0, 128
        %1503 = vxpose.xlu0.b32.cont [6/16] 0.0, 128
        %1504 = vxpose.xlu0.b32.cont [7/16] 0.0, 128
        %1505 = vxpose.xlu0.b32.cont [8/16] 0.0, 128
        %1506 = vxpose.xlu0.b32.cont [9/16] 0.0, 128
        %1507 = vxpose.xlu0.b32.cont [10/16] 0.0, 128
        %1508 = vxpose.xlu0.b32.cont [11/16] 0.0, 128
        %1509 = vxpose.xlu0.b32.cont [12/16] 0.0, 128
        %1510 = vxpose.xlu0.b32.cont [13/16] 0.0, 128
        %1511 = vxpose.xlu0.b32.cont [14/16] 0.0, 128
        %1512 = vxpose.xlu0.b32.cont [15/16] 0.0, 128
        %1513 = vxpose.xlu0.b32.end [16/16] 0.0, 128
        %v1514 = vpop.trf.xlu0
        %v1515 = vpop.trf.xlu0
        %v1516 = vpop.trf.xlu0
        %v1517 = vpop.trf.xlu0
        %v1518 = vpop.trf.xlu0
        %v1519 = vpop.trf.xlu0
        %v1520 = vpop.trf.xlu0
        %v1521 = vpop.trf.xlu0
        %v1522 = vpop.trf.xlu0
        %v1523 = vpop.trf.xlu0
        %v1524 = vpop.trf.xlu0
        %v1525 = vpop.trf.xlu0
        %v1526 = vpop.trf.xlu0
        %v1527 = vpop.trf.xlu0
        %v1528 = vpop.trf.xlu0
        %v1529 = vpop.trf.xlu0
        %v1531 = vsel %vm428, %v1514, 0
        %v1534 = vsel %vm428, %v1515, 0
        %1536 = vmatprep.subr.mxu0 0.0
        %1537 = vmatpush1.msra.mxu0 %v1480
        %1538 = vmatprep.subr.mxu0 0.0
        %1539 = vmatpush1.msra.mxu0 %v1485
        %1540 = vmatprep.subr.mxu0 0.0
        %1541 = vmatpush1.msra.mxu0 %v1490
        %1542 = vmatprep.subr.mxu0 0.0
        %1543 = vmatpush1.msra.mxu0 %v1495
        %1544 = vmatprep.subr.mxu0 0.0
        %1545 = vmatpush1.msra.mxu0 0.0
        %1546 = vmatprep.subr.mxu0 0.0
        %1547 = vmatpush1.msra.mxu0 0.0
        %1548 = vmatprep.subr.mxu0 0.0
        %1549 = vmatpush1.msra.mxu0 0.0
        %1550 = vmatprep.subr.mxu0 0.0
        %1551 = vmatpush1.msra.mxu0 0.0
        %1552 = vmatprep.subr.mxu0 0.0
        %1553 = vmatpush1.msra.mxu0 0.0
        %1554 = vmatprep.subr.mxu0 0.0
        %1555 = vmatpush1.msra.mxu0 0.0
        %1556 = vmatprep.subr.mxu0 0.0
        %1557 = vmatpush1.msra.mxu0 0.0
        %1558 = vmatprep.subr.mxu0 0.0
        %1559 = vmatpush1.msra.mxu0 0.0
        %1560 = vmatprep.subr.mxu0 0.0
        %1561 = vmatpush1.msra.mxu0 0.0
        %1562 = vmatprep.subr.mxu0 0.0
        %1563 = vmatpush1.msra.mxu0 0.0
        %1564 = vmatprep.subr.mxu0 0.0
        %1565 = vmatpush1.msra.mxu0 0.0
        %1566 = vmatprep.subr.mxu0 0.0
        %1567 = vmatpush1.msra.mxu0 0.0
        %1568 = vmatprep.subr.mxu0 0.0
        %1569 = vmatpush1.msra.mxu0 0.0
        %1570 = vmatprep.subr.mxu0 0.0
        %1571 = vmatpush1.msra.mxu0 0.0
        %1572 = vmatprep.subr.mxu0 0.0
        %1573 = vmatpush1.msra.mxu0 0.0
        %1574 = vmatprep.subr.mxu0 0.0
        %1575 = vmatpush1.msra.mxu0 0.0
        %1576 = vmatprep.subr.mxu0 0.0
        %1577 = vmatpush1.msra.mxu0 0.0
        %1578 = vmatprep.subr.mxu0 0.0
        %1579 = vmatpush1.msra.mxu0 0.0
        %1580 = vmatprep.subr.mxu0 0.0
        %1581 = vmatpush1.msra.mxu0 0.0
        %1582 = vmatprep.subr.mxu0 0.0
        %1583 = vmatpush1.msra.mxu0 0.0
        %1584 = vmatprep.subr.mxu0 0.0
        %1585 = vmatpush1.msra.mxu0 0.0
        %1586 = vmatprep.subr.mxu0 0.0
        %1587 = vmatpush1.msra.mxu0 0.0
        %1588 = vmatprep.subr.mxu0 0.0
        %1589 = vmatpush1.msra.mxu0 0.0
        %1590 = vmatprep.subr.mxu0 0.0
        %1591 = vmatpush1.msra.mxu0 0.0
        %1592 = vmatprep.subr.mxu0 0.0
        %1593 = vmatpush1.msra.mxu0 0.0
        %1594 = vmatprep.subr.mxu0 0.0
        %1595 = vmatpush1.msra.mxu0 0.0
        %1596 = vmatprep.subr.mxu0 0.0
        %1597 = vmatpush1.msra.mxu0 0.0
        %1598 = vmatprep.subr.mxu0 0.0
        %1599 = vmatpush1.msra.mxu0 0.0
        %1600 = vmatprep.mubr.f32.mxu0 0.0
        %1601 = vmatmul.mubr.f32.gmra.mrb[0].mxu0 %v1531
        %v1602 = vpop.f32.mrb[0].mxu0
        %v1603 = vadd.f32 0.0, %v1602
        %v1604 = vpop.f32.mrb[0].mxu0
        %1605 = vmatprep.mubr.f32.mxu0 0.0
        %1606 = vmatmul.mubr.f32.gmra.mrb[0].mxu0 %v1534
        %v1607 = vpop.f32.mrb[0].mxu0
        %v1608 = vadd.f32 0.0, %v1607
        %v1609 = vpop.f32.mrb[0].mxu0
        %1610 = vdwg.mxu0
        %s1611 = scalar_lea.vmem %s239, 80 [#allocation5]
        %1612 = vst.msk [vmem:[%s1611] sm:$0xff] %vm510, %v1603
        %1613 = vst.msk [vmem:[%s1611 + $0x8] sm:$0xff] %vm510, %v1608
        %v1614 = vsel %vm510, %v1480, 0.0
        %v1615 = vsel %vm510, %v1485, 0.0
        %v1616 = vadd.f32 %v1614, %v1615
        %v1617 = vsel %vm510, %v1490, 0.0
        %v1618 = vadd.f32 %v1616, %v1617
        %v1619 = vsel %vm510, %v1495, 0.0
        %v1620 = vadd.f32 %v1618, %v1619
        %v1621 = vrot.slane %v1620, 4
        %v1622 = vadd.f32 %v1620, %v1621
        %v1623 = vrot.slane %v1622, 2
        %v1624 = vadd.f32 %v1622, %v1623
        %v1625 = vrot.slane %v1624, 1
        %v1626 = vadd.f32 %v1624, %v1625
        %v1627 = vmul.f32 %v1626, %v526
        %s1628 = scalar_lea.vmem %s246, 5 [#allocation6]
        %1629 = vst.msk [vmem:[%s1628] sm:$0x1] %vm528, %v1627
        %v1631 = vsel %vm307, %v264, 0
        %1633 = vmatprep.subr.mxu0 0.0
        %1634 = vmatpush1.msra.mxu0 %v1631
        %1635 = vmatprep.subr.mxu0 0.0
        %1636 = vmatpush1.msra.mxu0 0.0
        %1637 = vmatprep.subr.mxu0 0.0
        %1638 = vmatpush1.msra.mxu0 0.0
        %1639 = vmatprep.subr.mxu0 0.0
        %1640 = vmatpush1.msra.mxu0 0.0
        %1641 = vmatprep.subr.mxu0 0.0
        %1642 = vmatpush1.msra.mxu0 0.0
        %1643 = vmatprep.subr.mxu0 0.0
        %1644 = vmatpush1.msra.mxu0 0.0
        %1645 = vmatprep.subr.mxu0 0.0
        %1646 = vmatpush1.msra.mxu0 0.0
        %1647 = vmatprep.subr.mxu0 0.0
        %1648 = vmatpush1.msra.mxu0 0.0
        %1649 = vmatprep.subr.mxu0 0.0
        %1650 = vmatpush1.msra.mxu0 0.0
        %1651 = vmatprep.subr.mxu0 0.0
        %1652 = vmatpush1.msra.mxu0 0.0
        %1653 = vmatprep.subr.mxu0 0.0
        %1654 = vmatpush1.msra.mxu0 0.0
        %1655 = vmatprep.subr.mxu0 0.0
        %1656 = vmatpush1.msra.mxu0 0.0
        %1657 = vmatprep.subr.mxu0 0.0
        %1658 = vmatpush1.msra.mxu0 0.0
        %1659 = vmatprep.subr.mxu0 0.0
        %1660 = vmatpush1.msra.mxu0 0.0
        %1661 = vmatprep.subr.mxu0 0.0
        %1662 = vmatpush1.msra.mxu0 0.0
        %1663 = vmatprep.subr.mxu0 0.0
        %1664 = vmatpush1.msra.mxu0 0.0
        %1665 = vmatprep.subr.mxu0 0.0
        %1666 = vmatpush1.msra.mxu0 0.0
        %1667 = vmatprep.subr.mxu0 0.0
        %1668 = vmatpush1.msra.mxu0 0.0
        %1669 = vmatprep.subr.mxu0 0.0
        %1670 = vmatpush1.msra.mxu0 0.0
        %1671 = vmatprep.subr.mxu0 0.0
        %1672 = vmatpush1.msra.mxu0 0.0
        %1673 = vmatprep.subr.mxu0 0.0
        %1674 = vmatpush1.msra.mxu0 0.0
        %1675 = vmatprep.subr.mxu0 0.0
        %1676 = vmatpush1.msra.mxu0 0.0
        %1677 = vmatprep.subr.mxu0 0.0
        %1678 = vmatpush1.msra.mxu0 0.0
        %1679 = vmatprep.subr.mxu0 0.0
        %1680 = vmatpush1.msra.mxu0 0.0
        %1681 = vmatprep.subr.mxu0 0.0
        %1682 = vmatpush1.msra.mxu0 0.0
        %1683 = vmatprep.subr.mxu0 0.0
        %1684 = vmatpush1.msra.mxu0 0.0
        %1685 = vmatprep.subr.mxu0 0.0
        %1686 = vmatpush1.msra.mxu0 0.0
        %1687 = vmatprep.subr.mxu0 0.0
        %1688 = vmatpush1.msra.mxu0 0.0
        %1689 = vmatprep.subr.mxu0 0.0
        %1690 = vmatpush1.msra.mxu0 0.0
        %1691 = vmatprep.subr.mxu0 0.0
        %1692 = vmatpush1.msra.mxu0 0.0
        %1693 = vmatprep.subr.mxu0 0.0
        %1694 = vmatpush1.msra.mxu0 0.0
        %1695 = vmatprep.subr.mxu0 0.0
        %1696 = vmatpush1.msra.mxu0 0.0
        %1697 = vmatprep.mubr.f32.mxu0 0.0
        %1698 = vmatmul.mubr.f32.gmra.mrb[0].mxu0 %v296
        %v1699 = vpop.f32.mrb[0].mxu0
        %v1700 = vadd.f32 %v277, %v1699
        %v1701 = vpop.f32.mrb[0].mxu0
        %1702 = vmatprep.mubr.f32.mxu0 0.0
        %1703 = vmatmul.mubr.f32.gmra.mrb[0].mxu0 %v299
        %v1704 = vpop.f32.mrb[0].mxu0
        %v1705 = vadd.f32 %v282, %v1704
        %v1706 = vpop.f32.mrb[0].mxu0
        %1707 = vmatprep.mubr.f32.mxu0 0.0
        %1708 = vmatmul.mubr.f32.gmra.mrb[0].mxu0 %v302
        %v1709 = vpop.f32.mrb[0].mxu0
        %v1710 = vadd.f32 %v287, %v1709
        %v1711 = vpop.f32.mrb[0].mxu0
        %1712 = vmatprep.mubr.f32.mxu0 0.0
        %1713 = vmatmul.mubr.f32.gmra.mrb[0].mxu0 %v305
        %v1714 = vpop.f32.mrb[0].mxu0
        %v1715 = vadd.f32 %v292, %v1714
        %v1716 = vpop.f32.mrb[0].mxu0
        %1717 = vdwg.mxu0
        %1718 = vxpose.xlu0.b32.start [1/16] %v1700, 128
        %1719 = vxpose.xlu0.b32.cont [2/16] %v1705, 128
        %1720 = vxpose.xlu0.b32.cont [3/16] %v1710, 128
        %1721 = vxpose.xlu0.b32.cont [4/16] %v1715, 128
        %1722 = vxpose.xlu0.b32.cont [5/16] 0.0, 128
        %1723 = vxpose.xlu0.b32.cont [6/16] 0.0, 128
        %1724 = vxpose.xlu0.b32.cont [7/16] 0.0, 128
        %1725 = vxpose.xlu0.b32.cont [8/16] 0.0, 128
        %1726 = vxpose.xlu0.b32.cont [9/16] 0.0, 128
        %1727 = vxpose.xlu0.b32.cont [10/16] 0.0, 128
        %1728 = vxpose.xlu0.b32.cont [11/16] 0.0, 128
        %1729 = vxpose.xlu0.b32.cont [12/16] 0.0, 128
        %1730 = vxpose.xlu0.b32.cont [13/16] 0.0, 128
        %1731 = vxpose.xlu0.b32.cont [14/16] 0.0, 128
        %1732 = vxpose.xlu0.b32.cont [15/16] 0.0, 128
        %1733 = vxpose.xlu0.b32.end [16/16] 0.0, 128
        %v1734 = vpop.trf.xlu0
        %v1735 = vpop.trf.xlu0
        %v1736 = vpop.trf.xlu0
        %v1737 = vpop.trf.xlu0
        %v1738 = vpop.trf.xlu0
        %v1739 = vpop.trf.xlu0
        %v1740 = vpop.trf.xlu0
        %v1741 = vpop.trf.xlu0
        %v1742 = vpop.trf.xlu0
        %v1743 = vpop.trf.xlu0
        %v1744 = vpop.trf.xlu0
        %v1745 = vpop.trf.xlu0
        %v1746 = vpop.trf.xlu0
        %v1747 = vpop.trf.xlu0
        %v1748 = vpop.trf.xlu0
        %v1749 = vpop.trf.xlu0
        %v1751 = vsel %vm428, %v1734, 0
        %v1754 = vsel %vm428, %v1735, 0
        %1756 = vmatprep.subr.mxu0 0.0
        %1757 = vmatpush1.msra.mxu0 %v1700
        %1758 = vmatprep.subr.mxu0 0.0
        %1759 = vmatpush1.msra.mxu0 %v1705
        %1760 = vmatprep.subr.mxu0 0.0
        %1761 = vmatpush1.msra.mxu0 %v1710
        %1762 = vmatprep.subr.mxu0 0.0
        %1763 = vmatpush1.msra.mxu0 %v1715
        %1764 = vmatprep.subr.mxu0 0.0
        %1765 = vmatpush1.msra.mxu0 0.0
        %1766 = vmatprep.subr.mxu0 0.0
        %1767 = vmatpush1.msra.mxu0 0.0
        %1768 = vmatprep.subr.mxu0 0.0
        %1769 = vmatpush1.msra.mxu0 0.0
        %1770 = vmatprep.subr.mxu0 0.0
        %1771 = vmatpush1.msra.mxu0 0.0
        %1772 = vmatprep.subr.mxu0 0.0
        %1773 = vmatpush1.msra.mxu0 0.0
        %1774 = vmatprep.subr.mxu0 0.0
        %1775 = vmatpush1.msra.mxu0 0.0
        %1776 = vmatprep.subr.mxu0 0.0
        %1777 = vmatpush1.msra.mxu0 0.0
        %1778 = vmatprep.subr.mxu0 0.0
        %1779 = vmatpush1.msra.mxu0 0.0
        %1780 = vmatprep.subr.mxu0 0.0
        %1781 = vmatpush1.msra.mxu0 0.0
        %1782 = vmatprep.subr.mxu0 0.0
        %1783 = vmatpush1.msra.mxu0 0.0
        %1784 = vmatprep.subr.mxu0 0.0
        %1785 = vmatpush1.msra.mxu0 0.0
        %1786 = vmatprep.subr.mxu0 0.0
        %1787 = vmatpush1.msra.mxu0 0.0
        %1788 = vmatprep.subr.mxu0 0.0
        %1789 = vmatpush1.msra.mxu0 0.0
        %1790 = vmatprep.subr.mxu0 0.0
        %1791 = vmatpush1.msra.mxu0 0.0
        %1792 = vmatprep.subr.mxu0 0.0
        %1793 = vmatpush1.msra.mxu0 0.0
        %1794 = vmatprep.subr.mxu0 0.0
        %1795 = vmatpush1.msra.mxu0 0.0
        %1796 = vmatprep.subr.mxu0 0.0
        %1797 = vmatpush1.msra.mxu0 0.0
        %1798 = vmatprep.subr.mxu0 0.0
        %1799 = vmatpush1.msra.mxu0 0.0
        %1800 = vmatprep.subr.mxu0 0.0
        %1801 = vmatpush1.msra.mxu0 0.0
        %1802 = vmatprep.subr.mxu0 0.0
        %1803 = vmatpush1.msra.mxu0 0.0
        %1804 = vmatprep.subr.mxu0 0.0
        %1805 = vmatpush1.msra.mxu0 0.0
        %1806 = vmatprep.subr.mxu0 0.0
        %1807 = vmatpush1.msra.mxu0 0.0
        %1808 = vmatprep.subr.mxu0 0.0
        %1809 = vmatpush1.msra.mxu0 0.0
        %1810 = vmatprep.subr.mxu0 0.0
        %1811 = vmatpush1.msra.mxu0 0.0
        %1812 = vmatprep.subr.mxu0 0.0
        %1813 = vmatpush1.msra.mxu0 0.0
        %1814 = vmatprep.subr.mxu0 0.0
        %1815 = vmatpush1.msra.mxu0 0.0
        %1816 = vmatprep.subr.mxu0 0.0
        %1817 = vmatpush1.msra.mxu0 0.0
        %1818 = vmatprep.subr.mxu0 0.0
        %1819 = vmatpush1.msra.mxu0 0.0
        %1820 = vmatprep.mubr.f32.mxu0 0.0
        %1821 = vmatmul.mubr.f32.gmra.mrb[0].mxu0 %v1751
        %v1822 = vpop.f32.mrb[0].mxu0
        %v1823 = vadd.f32 0.0, %v1822
        %v1824 = vpop.f32.mrb[0].mxu0
        %1825 = vmatprep.mubr.f32.mxu0 0.0
        %1826 = vmatmul.mubr.f32.gmra.mrb[0].mxu0 %v1754
        %v1827 = vpop.f32.mrb[0].mxu0
        %v1828 = vadd.f32 0.0, %v1827
        %v1829 = vpop.f32.mrb[0].mxu0
        %1830 = vdwg.mxu0
        %s1831 = scalar_lea.vmem %s239, 96 [#allocation5]
        %1832 = vst.msk [vmem:[%s1831] sm:$0xff] %vm510, %v1823
        %1833 = vst.msk [vmem:[%s1831 + $0x8] sm:$0xff] %vm510, %v1828
        %v1834 = vsel %vm510, %v1700, 0.0
        %v1835 = vsel %vm510, %v1705, 0.0
        %v1836 = vadd.f32 %v1834, %v1835
        %v1837 = vsel %vm510, %v1710, 0.0
        %v1838 = vadd.f32 %v1836, %v1837
        %v1839 = vsel %vm510, %v1715, 0.0
        %v1840 = vadd.f32 %v1838, %v1839
        %v1841 = vrot.slane %v1840, 4
        %v1842 = vadd.f32 %v1840, %v1841
        %v1843 = vrot.slane %v1842, 2
        %v1844 = vadd.f32 %v1842, %v1843
        %v1845 = vrot.slane %v1844, 1
        %v1846 = vadd.f32 %v1844, %v1845
        %v1847 = vmul.f32 %v1846, %v526
        %s1848 = scalar_lea.vmem %s246, 6 [#allocation6]
        %1849 = vst.msk [vmem:[%s1848] sm:$0x1] %vm528, %v1847
        %v1851 = vsel %vm307, %v265, 0
        %1853 = vmatprep.subr.mxu0 0.0
        %1854 = vmatpush1.msra.mxu0 %v1851
        %1855 = vmatprep.subr.mxu0 0.0
        %1856 = vmatpush1.msra.mxu0 0.0
        %1857 = vmatprep.subr.mxu0 0.0
        %1858 = vmatpush1.msra.mxu0 0.0
        %1859 = vmatprep.subr.mxu0 0.0
        %1860 = vmatpush1.msra.mxu0 0.0
        %1861 = vmatprep.subr.mxu0 0.0
        %1862 = vmatpush1.msra.mxu0 0.0
        %1863 = vmatprep.subr.mxu0 0.0
        %1864 = vmatpush1.msra.mxu0 0.0
        %1865 = vmatprep.subr.mxu0 0.0
        %1866 = vmatpush1.msra.mxu0 0.0
        %1867 = vmatprep.subr.mxu0 0.0
        %1868 = vmatpush1.msra.mxu0 0.0
        %1869 = vmatprep.subr.mxu0 0.0
        %1870 = vmatpush1.msra.mxu0 0.0
        %1871 = vmatprep.subr.mxu0 0.0
        %1872 = vmatpush1.msra.mxu0 0.0
        %1873 = vmatprep.subr.mxu0 0.0
        %1874 = vmatpush1.msra.mxu0 0.0
        %1875 = vmatprep.subr.mxu0 0.0
        %1876 = vmatpush1.msra.mxu0 0.0
        %1877 = vmatprep.subr.mxu0 0.0
        %1878 = vmatpush1.msra.mxu0 0.0
        %1879 = vmatprep.subr.mxu0 0.0
        %1880 = vmatpush1.msra.mxu0 0.0
        %1881 = vmatprep.subr.mxu0 0.0
        %1882 = vmatpush1.msra.mxu0 0.0
        %1883 = vmatprep.subr.mxu0 0.0
        %1884 = vmatpush1.msra.mxu0 0.0
        %1885 = vmatprep.subr.mxu0 0.0
        %1886 = vmatpush1.msra.mxu0 0.0
        %1887 = vmatprep.subr.mxu0 0.0
        %1888 = vmatpush1.msra.mxu0 0.0
        %1889 = vmatprep.subr.mxu0 0.0
        %1890 = vmatpush1.msra.mxu0 0.0
        %1891 = vmatprep.subr.mxu0 0.0
        %1892 = vmatpush1.msra.mxu0 0.0
        %1893 = vmatprep.subr.mxu0 0.0
        %1894 = vmatpush1.msra.mxu0 0.0
        %1895 = vmatprep.subr.mxu0 0.0
        %1896 = vmatpush1.msra.mxu0 0.0
        %1897 = vmatprep.subr.mxu0 0.0
        %1898 = vmatpush1.msra.mxu0 0.0
        %1899 = vmatprep.subr.mxu0 0.0
        %1900 = vmatpush1.msra.mxu0 0.0
        %1901 = vmatprep.subr.mxu0 0.0
        %1902 = vmatpush1.msra.mxu0 0.0
        %1903 = vmatprep.subr.mxu0 0.0
        %1904 = vmatpush1.msra.mxu0 0.0
        %1905 = vmatprep.subr.mxu0 0.0
        %1906 = vmatpush1.msra.mxu0 0.0
        %1907 = vmatprep.subr.mxu0 0.0
        %1908 = vmatpush1.msra.mxu0 0.0
        %1909 = vmatprep.subr.mxu0 0.0
        %1910 = vmatpush1.msra.mxu0 0.0
        %1911 = vmatprep.subr.mxu0 0.0
        %1912 = vmatpush1.msra.mxu0 0.0
        %1913 = vmatprep.subr.mxu0 0.0
        %1914 = vmatpush1.msra.mxu0 0.0
        %1915 = vmatprep.subr.mxu0 0.0
        %1916 = vmatpush1.msra.mxu0 0.0
        %1917 = vmatprep.mubr.f32.mxu0 0.0
        %1918 = vmatmul.mubr.f32.gmra.mrb[0].mxu0 %v296
        %v1919 = vpop.f32.mrb[0].mxu0
        %v1920 = vadd.f32 %v277, %v1919
        %v1921 = vpop.f32.mrb[0].mxu0
        %1922 = vmatprep.mubr.f32.mxu0 0.0
        %1923 = vmatmul.mubr.f32.gmra.mrb[0].mxu0 %v299
        %v1924 = vpop.f32.mrb[0].mxu0
        %v1925 = vadd.f32 %v282, %v1924
        %v1926 = vpop.f32.mrb[0].mxu0
        %1927 = vmatprep.mubr.f32.mxu0 0.0
        %1928 = vmatmul.mubr.f32.gmra.mrb[0].mxu0 %v302
        %v1929 = vpop.f32.mrb[0].mxu0
        %v1930 = vadd.f32 %v287, %v1929
        %v1931 = vpop.f32.mrb[0].mxu0
        %1932 = vmatprep.mubr.f32.mxu0 0.0
        %1933 = vmatmul.mubr.f32.gmra.mrb[0].mxu0 %v305
        %v1934 = vpop.f32.mrb[0].mxu0
        %v1935 = vadd.f32 %v292, %v1934
        %v1936 = vpop.f32.mrb[0].mxu0
        %1937 = vdwg.mxu0
        %1938 = vxpose.xlu0.b32.start [1/16] %v1920, 128
        %1939 = vxpose.xlu0.b32.cont [2/16] %v1925, 128
        %1940 = vxpose.xlu0.b32.cont [3/16] %v1930, 128
        %1941 = vxpose.xlu0.b32.cont [4/16] %v1935, 128
        %1942 = vxpose.xlu0.b32.cont [5/16] 0.0, 128
        %1943 = vxpose.xlu0.b32.cont [6/16] 0.0, 128
        %1944 = vxpose.xlu0.b32.cont [7/16] 0.0, 128
        %1945 = vxpose.xlu0.b32.cont [8/16] 0.0, 128
        %1946 = vxpose.xlu0.b32.cont [9/16] 0.0, 128
        %1947 = vxpose.xlu0.b32.cont [10/16] 0.0, 128
        %1948 = vxpose.xlu0.b32.cont [11/16] 0.0, 128
        %1949 = vxpose.xlu0.b32.cont [12/16] 0.0, 128
        %1950 = vxpose.xlu0.b32.cont [13/16] 0.0, 128
        %1951 = vxpose.xlu0.b32.cont [14/16] 0.0, 128
        %1952 = vxpose.xlu0.b32.cont [15/16] 0.0, 128
        %1953 = vxpose.xlu0.b32.end [16/16] 0.0, 128
        %v1954 = vpop.trf.xlu0
        %v1955 = vpop.trf.xlu0
        %v1956 = vpop.trf.xlu0
        %v1957 = vpop.trf.xlu0
        %v1958 = vpop.trf.xlu0
        %v1959 = vpop.trf.xlu0
        %v1960 = vpop.trf.xlu0
        %v1961 = vpop.trf.xlu0
        %v1962 = vpop.trf.xlu0
        %v1963 = vpop.trf.xlu0
        %v1964 = vpop.trf.xlu0
        %v1965 = vpop.trf.xlu0
        %v1966 = vpop.trf.xlu0
        %v1967 = vpop.trf.xlu0
        %v1968 = vpop.trf.xlu0
        %v1969 = vpop.trf.xlu0
        %v1971 = vsel %vm428, %v1954, 0
        %v1974 = vsel %vm428, %v1955, 0
        %1976 = vmatprep.subr.mxu0 0.0
        %1977 = vmatpush1.msra.mxu0 %v1920
        %1978 = vmatprep.subr.mxu0 0.0
        %1979 = vmatpush1.msra.mxu0 %v1925
        %1980 = vmatprep.subr.mxu0 0.0
        %1981 = vmatpush1.msra.mxu0 %v1930
        %1982 = vmatprep.subr.mxu0 0.0
        %1983 = vmatpush1.msra.mxu0 %v1935
        %1984 = vmatprep.subr.mxu0 0.0
        %1985 = vmatpush1.msra.mxu0 0.0
        %1986 = vmatprep.subr.mxu0 0.0
        %1987 = vmatpush1.msra.mxu0 0.0
        %1988 = vmatprep.subr.mxu0 0.0
        %1989 = vmatpush1.msra.mxu0 0.0
        %1990 = vmatprep.subr.mxu0 0.0
        %1991 = vmatpush1.msra.mxu0 0.0
        %1992 = vmatprep.subr.mxu0 0.0
        %1993 = vmatpush1.msra.mxu0 0.0
        %1994 = vmatprep.subr.mxu0 0.0
        %1995 = vmatpush1.msra.mxu0 0.0
        %1996 = vmatprep.subr.mxu0 0.0
        %1997 = vmatpush1.msra.mxu0 0.0
        %1998 = vmatprep.subr.mxu0 0.0
        %1999 = vmatpush1.msra.mxu0 0.0
        %2000 = vmatprep.subr.mxu0 0.0
        %2001 = vmatpush1.msra.mxu0 0.0
        %2002 = vmatprep.subr.mxu0 0.0
        %2003 = vmatpush1.msra.mxu0 0.0
        %2004 = vmatprep.subr.mxu0 0.0
        %2005 = vmatpush1.msra.mxu0 0.0
        %2006 = vmatprep.subr.mxu0 0.0
        %2007 = vmatpush1.msra.mxu0 0.0
        %2008 = vmatprep.subr.mxu0 0.0
        %2009 = vmatpush1.msra.mxu0 0.0
        %2010 = vmatprep.subr.mxu0 0.0
        %2011 = vmatpush1.msra.mxu0 0.0
        %2012 = vmatprep.subr.mxu0 0.0
        %2013 = vmatpush1.msra.mxu0 0.0
        %2014 = vmatprep.subr.mxu0 0.0
        %2015 = vmatpush1.msra.mxu0 0.0
        %2016 = vmatprep.subr.mxu0 0.0
        %2017 = vmatpush1.msra.mxu0 0.0
        %2018 = vmatprep.subr.mxu0 0.0
        %2019 = vmatpush1.msra.mxu0 0.0
        %2020 = vmatprep.subr.mxu0 0.0
        %2021 = vmatpush1.msra.mxu0 0.0
        %2022 = vmatprep.subr.mxu0 0.0
        %2023 = vmatpush1.msra.mxu0 0.0
        %2024 = vmatprep.subr.mxu0 0.0
        %2025 = vmatpush1.msra.mxu0 0.0
        %2026 = vmatprep.subr.mxu0 0.0
        %2027 = vmatpush1.msra.mxu0 0.0
        %2028 = vmatprep.subr.mxu0 0.0
        %2029 = vmatpush1.msra.mxu0 0.0
        %2030 = vmatprep.subr.mxu0 0.0
        %2031 = vmatpush1.msra.mxu0 0.0
        %2032 = vmatprep.subr.mxu0 0.0
        %2033 = vmatpush1.msra.mxu0 0.0
        %2034 = vmatprep.subr.mxu0 0.0
        %2035 = vmatpush1.msra.mxu0 0.0
        %2036 = vmatprep.subr.mxu0 0.0
        %2037 = vmatpush1.msra.mxu0 0.0
        %2038 = vmatprep.subr.mxu0 0.0
        %2039 = vmatpush1.msra.mxu0 0.0
        %2040 = vmatprep.mubr.f32.mxu0 0.0
        %2041 = vmatmul.mubr.f32.gmra.mrb[0].mxu0 %v1971
        %v2042 = vpop.f32.mrb[0].mxu0
        %v2043 = vadd.f32 0.0, %v2042
        %v2044 = vpop.f32.mrb[0].mxu0
        %2045 = vmatprep.mubr.f32.mxu0 0.0
        %2046 = vmatmul.mubr.f32.gmra.mrb[0].mxu0 %v1974
        %v2047 = vpop.f32.mrb[0].mxu0
        %v2048 = vadd.f32 0.0, %v2047
        %v2049 = vpop.f32.mrb[0].mxu0
        %2050 = vdwg.mxu0
        %s2051 = scalar_lea.vmem %s239, 112 [#allocation5]
        %2052 = vst.msk [vmem:[%s2051] sm:$0xff] %vm510, %v2043
        %2053 = vst.msk [vmem:[%s2051 + $0x8] sm:$0xff] %vm510, %v2048
        %v2054 = vsel %vm510, %v1920, 0.0
        %v2055 = vsel %vm510, %v1925, 0.0
        %v2056 = vadd.f32 %v2054, %v2055
        %v2057 = vsel %vm510, %v1930, 0.0
        %v2058 = vadd.f32 %v2056, %v2057
        %v2059 = vsel %vm510, %v1935, 0.0
        %v2060 = vadd.f32 %v2058, %v2059
        %v2061 = vrot.slane %v2060, 4
        %v2062 = vadd.f32 %v2060, %v2061
        %v2063 = vrot.slane %v2062, 2
        %v2064 = vadd.f32 %v2062, %v2063
        %v2065 = vrot.slane %v2064, 1
        %v2066 = vadd.f32 %v2064, %v2065
        %v2067 = vmul.f32 %v2066, %v526
        %s2068 = scalar_lea.vmem %s246, 7 [#allocation6]
        %2069 = vst.msk [vmem:[%s2068] sm:$0x1] %vm528, %v2067
        %v2071 = vsel %vm307, %v266, 0
        %2073 = vmatprep.subr.mxu0 0.0
        %2074 = vmatpush1.msra.mxu0 %v2071
        %2075 = vmatprep.subr.mxu0 0.0
        %2076 = vmatpush1.msra.mxu0 0.0
        %2077 = vmatprep.subr.mxu0 0.0
        %2078 = vmatpush1.msra.mxu0 0.0
        %2079 = vmatprep.subr.mxu0 0.0
        %2080 = vmatpush1.msra.mxu0 0.0
        %2081 = vmatprep.subr.mxu0 0.0
        %2082 = vmatpush1.msra.mxu0 0.0
        %2083 = vmatprep.subr.mxu0 0.0
        %2084 = vmatpush1.msra.mxu0 0.0
        %2085 = vmatprep.subr.mxu0 0.0
        %2086 = vmatpush1.msra.mxu0 0.0
        %2087 = vmatprep.subr.mxu0 0.0
        %2088 = vmatpush1.msra.mxu0 0.0
        %2089 = vmatprep.subr.mxu0 0.0
        %2090 = vmatpush1.msra.mxu0 0.0
        %2091 = vmatprep.subr.mxu0 0.0
        %2092 = vmatpush1.msra.mxu0 0.0
        %2093 = vmatprep.subr.mxu0 0.0
        %2094 = vmatpush1.msra.mxu0 0.0
        %2095 = vmatprep.subr.mxu0 0.0
        %2096 = vmatpush1.msra.mxu0 0.0
        %2097 = vmatprep.subr.mxu0 0.0
        %2098 = vmatpush1.msra.mxu0 0.0
        %2099 = vmatprep.subr.mxu0 0.0
        %2100 = vmatpush1.msra.mxu0 0.0
        %2101 = vmatprep.subr.mxu0 0.0
        %2102 = vmatpush1.msra.mxu0 0.0
        %2103 = vmatprep.subr.mxu0 0.0
        %2104 = vmatpush1.msra.mxu0 0.0
        %2105 = vmatprep.subr.mxu0 0.0
        %2106 = vmatpush1.msra.mxu0 0.0
        %2107 = vmatprep.subr.mxu0 0.0
        %2108 = vmatpush1.msra.mxu0 0.0
        %2109 = vmatprep.subr.mxu0 0.0
        %2110 = vmatpush1.msra.mxu0 0.0
        %2111 = vmatprep.subr.mxu0 0.0
        %2112 = vmatpush1.msra.mxu0 0.0
        %2113 = vmatprep.subr.mxu0 0.0
        %2114 = vmatpush1.msra.mxu0 0.0
        %2115 = vmatprep.subr.mxu0 0.0
        %2116 = vmatpush1.msra.mxu0 0.0
        %2117 = vmatprep.subr.mxu0 0.0
        %2118 = vmatpush1.msra.mxu0 0.0
        %2119 = vmatprep.subr.mxu0 0.0
        %2120 = vmatpush1.msra.mxu0 0.0
        %2121 = vmatprep.subr.mxu0 0.0
        %2122 = vmatpush1.msra.mxu0 0.0
        %2123 = vmatprep.subr.mxu0 0.0
        %2124 = vmatpush1.msra.mxu0 0.0
        %2125 = vmatprep.subr.mxu0 0.0
        %2126 = vmatpush1.msra.mxu0 0.0
        %2127 = vmatprep.subr.mxu0 0.0
        %2128 = vmatpush1.msra.mxu0 0.0
        %2129 = vmatprep.subr.mxu0 0.0
        %2130 = vmatpush1.msra.mxu0 0.0
        %2131 = vmatprep.subr.mxu0 0.0
        %2132 = vmatpush1.msra.mxu0 0.0
        %2133 = vmatprep.subr.mxu0 0.0
        %2134 = vmatpush1.msra.mxu0 0.0
        %2135 = vmatprep.subr.mxu0 0.0
        %2136 = vmatpush1.msra.mxu0 0.0
        %2137 = vmatprep.mubr.f32.mxu0 0.0
        %2138 = vmatmul.mubr.f32.gmra.mrb[0].mxu0 %v296
        %v2139 = vpop.f32.mrb[0].mxu0
        %v2140 = vadd.f32 %v277, %v2139
        %v2141 = vpop.f32.mrb[0].mxu0
        %2142 = vmatprep.mubr.f32.mxu0 0.0
        %2143 = vmatmul.mubr.f32.gmra.mrb[0].mxu0 %v299
        %v2144 = vpop.f32.mrb[0].mxu0
        %v2145 = vadd.f32 %v282, %v2144
        %v2146 = vpop.f32.mrb[0].mxu0
        %2147 = vmatprep.mubr.f32.mxu0 0.0
        %2148 = vmatmul.mubr.f32.gmra.mrb[0].mxu0 %v302
        %v2149 = vpop.f32.mrb[0].mxu0
        %v2150 = vadd.f32 %v287, %v2149
        %v2151 = vpop.f32.mrb[0].mxu0
        %2152 = vmatprep.mubr.f32.mxu0 0.0
        %2153 = vmatmul.mubr.f32.gmra.mrb[0].mxu0 %v305
        %v2154 = vpop.f32.mrb[0].mxu0
        %v2155 = vadd.f32 %v292, %v2154
        %v2156 = vpop.f32.mrb[0].mxu0
        %2157 = vdwg.mxu0
        %2158 = vxpose.xlu0.b32.start [1/16] %v2140, 128
        %2159 = vxpose.xlu0.b32.cont [2/16] %v2145, 128
        %2160 = vxpose.xlu0.b32.cont [3/16] %v2150, 128
        %2161 = vxpose.xlu0.b32.cont [4/16] %v2155, 128
        %2162 = vxpose.xlu0.b32.cont [5/16] 0.0, 128
        %2163 = vxpose.xlu0.b32.cont [6/16] 0.0, 128
        %2164 = vxpose.xlu0.b32.cont [7/16] 0.0, 128
        %2165 = vxpose.xlu0.b32.cont [8/16] 0.0, 128
        %2166 = vxpose.xlu0.b32.cont [9/16] 0.0, 128
        %2167 = vxpose.xlu0.b32.cont [10/16] 0.0, 128
        %2168 = vxpose.xlu0.b32.cont [11/16] 0.0, 128
        %2169 = vxpose.xlu0.b32.cont [12/16] 0.0, 128
        %2170 = vxpose.xlu0.b32.cont [13/16] 0.0, 128
        %2171 = vxpose.xlu0.b32.cont [14/16] 0.0, 128
        %2172 = vxpose.xlu0.b32.cont [15/16] 0.0, 128
        %2173 = vxpose.xlu0.b32.end [16/16] 0.0, 128
        %v2174 = vpop.trf.xlu0
        %v2175 = vpop.trf.xlu0
        %v2176 = vpop.trf.xlu0
        %v2177 = vpop.trf.xlu0
        %v2178 = vpop.trf.xlu0
        %v2179 = vpop.trf.xlu0
        %v2180 = vpop.trf.xlu0
        %v2181 = vpop.trf.xlu0
        %v2182 = vpop.trf.xlu0
        %v2183 = vpop.trf.xlu0
        %v2184 = vpop.trf.xlu0
        %v2185 = vpop.trf.xlu0
        %v2186 = vpop.trf.xlu0
        %v2187 = vpop.trf.xlu0
        %v2188 = vpop.trf.xlu0
        %v2189 = vpop.trf.xlu0
        %v2191 = vsel %vm428, %v2174, 0
        %v2194 = vsel %vm428, %v2175, 0
        %2196 = vmatprep.subr.mxu0 0.0
        %2197 = vmatpush1.msra.mxu0 %v2140
        %2198 = vmatprep.subr.mxu0 0.0
        %2199 = vmatpush1.msra.mxu0 %v2145
        %2200 = vmatprep.subr.mxu0 0.0
        %2201 = vmatpush1.msra.mxu0 %v2150
        %2202 = vmatprep.subr.mxu0 0.0
        %2203 = vmatpush1.msra.mxu0 %v2155
        %2204 = vmatprep.subr.mxu0 0.0
        %2205 = vmatpush1.msra.mxu0 0.0
        %2206 = vmatprep.subr.mxu0 0.0
        %2207 = vmatpush1.msra.mxu0 0.0
        %2208 = vmatprep.subr.mxu0 0.0
        %2209 = vmatpush1.msra.mxu0 0.0
        %2210 = vmatprep.subr.mxu0 0.0
        %2211 = vmatpush1.msra.mxu0 0.0
        %2212 = vmatprep.subr.mxu0 0.0
        %2213 = vmatpush1.msra.mxu0 0.0
        %2214 = vmatprep.subr.mxu0 0.0
        %2215 = vmatpush1.msra.mxu0 0.0
        %2216 = vmatprep.subr.mxu0 0.0
        %2217 = vmatpush1.msra.mxu0 0.0
        %2218 = vmatprep.subr.mxu0 0.0
        %2219 = vmatpush1.msra.mxu0 0.0
        %2220 = vmatprep.subr.mxu0 0.0
        %2221 = vmatpush1.msra.mxu0 0.0
        %2222 = vmatprep.subr.mxu0 0.0
        %2223 = vmatpush1.msra.mxu0 0.0
        %2224 = vmatprep.subr.mxu0 0.0
        %2225 = vmatpush1.msra.mxu0 0.0
        %2226 = vmatprep.subr.mxu0 0.0
        %2227 = vmatpush1.msra.mxu0 0.0
        %2228 = vmatprep.subr.mxu0 0.0
        %2229 = vmatpush1.msra.mxu0 0.0
        %2230 = vmatprep.subr.mxu0 0.0
        %2231 = vmatpush1.msra.mxu0 0.0
        %2232 = vmatprep.subr.mxu0 0.0
        %2233 = vmatpush1.msra.mxu0 0.0
        %2234 = vmatprep.subr.mxu0 0.0
        %2235 = vmatpush1.msra.mxu0 0.0
        %2236 = vmatprep.subr.mxu0 0.0
        %2237 = vmatpush1.msra.mxu0 0.0
        %2238 = vmatprep.subr.mxu0 0.0
        %2239 = vmatpush1.msra.mxu0 0.0
        %2240 = vmatprep.subr.mxu0 0.0
        %2241 = vmatpush1.msra.mxu0 0.0
        %2242 = vmatprep.subr.mxu0 0.0
        %2243 = vmatpush1.msra.mxu0 0.0
        %2244 = vmatprep.subr.mxu0 0.0
        %2245 = vmatpush1.msra.mxu0 0.0
        %2246 = vmatprep.subr.mxu0 0.0
        %2247 = vmatpush1.msra.mxu0 0.0
        %2248 = vmatprep.subr.mxu0 0.0
        %2249 = vmatpush1.msra.mxu0 0.0
        %2250 = vmatprep.subr.mxu0 0.0
        %2251 = vmatpush1.msra.mxu0 0.0
        %2252 = vmatprep.subr.mxu0 0.0
        %2253 = vmatpush1.msra.mxu0 0.0
        %2254 = vmatprep.subr.mxu0 0.0
        %2255 = vmatpush1.msra.mxu0 0.0
        %2256 = vmatprep.subr.mxu0 0.0
        %2257 = vmatpush1.msra.mxu0 0.0
        %2258 = vmatprep.subr.mxu0 0.0
        %2259 = vmatpush1.msra.mxu0 0.0
        %2260 = vmatprep.mubr.f32.mxu0 0.0
        %2261 = vmatmul.mubr.f32.gmra.mrb[0].mxu0 %v2191
        %v2262 = vpop.f32.mrb[0].mxu0
        %v2263 = vadd.f32 0.0, %v2262
        %v2264 = vpop.f32.mrb[0].mxu0
        %2265 = vmatprep.mubr.f32.mxu0 0.0
        %2266 = vmatmul.mubr.f32.gmra.mrb[0].mxu0 %v2194
        %v2267 = vpop.f32.mrb[0].mxu0
        %v2268 = vadd.f32 0.0, %v2267
        %v2269 = vpop.f32.mrb[0].mxu0
        %2270 = vdwg.mxu0
        %s2271 = scalar_lea.vmem %s239, 128 [#allocation5]
        %2272 = vst.msk [vmem:[%s2271] sm:$0xff] %vm510, %v2263
        %2273 = vst.msk [vmem:[%s2271 + $0x8] sm:$0xff] %vm510, %v2268
        %v2274 = vsel %vm510, %v2140, 0.0
        %v2275 = vsel %vm510, %v2145, 0.0
        %v2276 = vadd.f32 %v2274, %v2275
        %v2277 = vsel %vm510, %v2150, 0.0
        %v2278 = vadd.f32 %v2276, %v2277
        %v2279 = vsel %vm510, %v2155, 0.0
        %v2280 = vadd.f32 %v2278, %v2279
        %v2281 = vrot.slane %v2280, 4
        %v2282 = vadd.f32 %v2280, %v2281
        %v2283 = vrot.slane %v2282, 2
        %v2284 = vadd.f32 %v2282, %v2283
        %v2285 = vrot.slane %v2284, 1
        %v2286 = vadd.f32 %v2284, %v2285
        %v2287 = vmul.f32 %v2286, %v526
        %s2288 = scalar_lea.vmem %s246, 8 [#allocation6]
        %2289 = vst.msk [vmem:[%s2288] sm:$0x1] %vm528, %v2287
        %v2291 = vsel %vm307, %v267, 0
        %2293 = vmatprep.subr.mxu0 0.0
        %2294 = vmatpush1.msra.mxu0 %v2291
        %2295 = vmatprep.subr.mxu0 0.0
        %2296 = vmatpush1.msra.mxu0 0.0
        %2297 = vmatprep.subr.mxu0 0.0
        %2298 = vmatpush1.msra.mxu0 0.0
        %2299 = vmatprep.subr.mxu0 0.0
        %2300 = vmatpush1.msra.mxu0 0.0
        %2301 = vmatprep.subr.mxu0 0.0
        %2302 = vmatpush1.msra.mxu0 0.0
        %2303 = vmatprep.subr.mxu0 0.0
        %2304 = vmatpush1.msra.mxu0 0.0
        %2305 = vmatprep.subr.mxu0 0.0
        %2306 = vmatpush1.msra.mxu0 0.0
        %2307 = vmatprep.subr.mxu0 0.0
        %2308 = vmatpush1.msra.mxu0 0.0
        %2309 = vmatprep.subr.mxu0 0.0
        %2310 = vmatpush1.msra.mxu0 0.0
        %2311 = vmatprep.subr.mxu0 0.0
        %2312 = vmatpush1.msra.mxu0 0.0
        %2313 = vmatprep.subr.mxu0 0.0
        %2314 = vmatpush1.msra.mxu0 0.0
        %2315 = vmatprep.subr.mxu0 0.0
        %2316 = vmatpush1.msra.mxu0 0.0
        %2317 = vmatprep.subr.mxu0 0.0
        %2318 = vmatpush1.msra.mxu0 0.0
        %2319 = vmatprep.subr.mxu0 0.0
        %2320 = vmatpush1.msra.mxu0 0.0
        %2321 = vmatprep.subr.mxu0 0.0
        %2322 = vmatpush1.msra.mxu0 0.0
        %2323 = vmatprep.subr.mxu0 0.0
        %2324 = vmatpush1.msra.mxu0 0.0
        %2325 = vmatprep.subr.mxu0 0.0
        %2326 = vmatpush1.msra.mxu0 0.0
        %2327 = vmatprep.subr.mxu0 0.0
        %2328 = vmatpush1.msra.mxu0 0.0
        %2329 = vmatprep.subr.mxu0 0.0
        %2330 = vmatpush1.msra.mxu0 0.0
        %2331 = vmatprep.subr.mxu0 0.0
        %2332 = vmatpush1.msra.mxu0 0.0
        %2333 = vmatprep.subr.mxu0 0.0
        %2334 = vmatpush1.msra.mxu0 0.0
        %2335 = vmatprep.subr.mxu0 0.0
        %2336 = vmatpush1.msra.mxu0 0.0
        %2337 = vmatprep.subr.mxu0 0.0
        %2338 = vmatpush1.msra.mxu0 0.0
        %2339 = vmatprep.subr.mxu0 0.0
        %2340 = vmatpush1.msra.mxu0 0.0
        %2341 = vmatprep.subr.mxu0 0.0
        %2342 = vmatpush1.msra.mxu0 0.0
        %2343 = vmatprep.subr.mxu0 0.0
        %2344 = vmatpush1.msra.mxu0 0.0
        %2345 = vmatprep.subr.mxu0 0.0
        %2346 = vmatpush1.msra.mxu0 0.0
        %2347 = vmatprep.subr.mxu0 0.0
        %2348 = vmatpush1.msra.mxu0 0.0
        %2349 = vmatprep.subr.mxu0 0.0
        %2350 = vmatpush1.msra.mxu0 0.0
        %2351 = vmatprep.subr.mxu0 0.0
        %2352 = vmatpush1.msra.mxu0 0.0
        %2353 = vmatprep.subr.mxu0 0.0
        %2354 = vmatpush1.msra.mxu0 0.0
        %2355 = vmatprep.subr.mxu0 0.0
        %2356 = vmatpush1.msra.mxu0 0.0
        %2357 = vmatprep.mubr.f32.mxu0 0.0
        %2358 = vmatmul.mubr.f32.gmra.mrb[0].mxu0 %v296
        %v2359 = vpop.f32.mrb[0].mxu0
        %v2360 = vadd.f32 %v277, %v2359
        %v2361 = vpop.f32.mrb[0].mxu0
        %2362 = vmatprep.mubr.f32.mxu0 0.0
        %2363 = vmatmul.mubr.f32.gmra.mrb[0].mxu0 %v299
        %v2364 = vpop.f32.mrb[0].mxu0
        %v2365 = vadd.f32 %v282, %v2364
        %v2366 = vpop.f32.mrb[0].mxu0
        %2367 = vmatprep.mubr.f32.mxu0 0.0
        %2368 = vmatmul.mubr.f32.gmra.mrb[0].mxu0 %v302
        %v2369 = vpop.f32.mrb[0].mxu0
        %v2370 = vadd.f32 %v287, %v2369
        %v2371 = vpop.f32.mrb[0].mxu0
        %2372 = vmatprep.mubr.f32.mxu0 0.0
        %2373 = vmatmul.mubr.f32.gmra.mrb[0].mxu0 %v305
        %v2374 = vpop.f32.mrb[0].mxu0
        %v2375 = vadd.f32 %v292, %v2374
        %v2376 = vpop.f32.mrb[0].mxu0
        %2377 = vdwg.mxu0
        %2378 = vxpose.xlu0.b32.start [1/16] %v2360, 128
        %2379 = vxpose.xlu0.b32.cont [2/16] %v2365, 128
        %2380 = vxpose.xlu0.b32.cont [3/16] %v2370, 128
        %2381 = vxpose.xlu0.b32.cont [4/16] %v2375, 128
        %2382 = vxpose.xlu0.b32.cont [5/16] 0.0, 128
        %2383 = vxpose.xlu0.b32.cont [6/16] 0.0, 128
        %2384 = vxpose.xlu0.b32.cont [7/16] 0.0, 128
        %2385 = vxpose.xlu0.b32.cont [8/16] 0.0, 128
        %2386 = vxpose.xlu0.b32.cont [9/16] 0.0, 128
        %2387 = vxpose.xlu0.b32.cont [10/16] 0.0, 128
        %2388 = vxpose.xlu0.b32.cont [11/16] 0.0, 128
        %2389 = vxpose.xlu0.b32.cont [12/16] 0.0, 128
        %2390 = vxpose.xlu0.b32.cont [13/16] 0.0, 128
        %2391 = vxpose.xlu0.b32.cont [14/16] 0.0, 128
        %2392 = vxpose.xlu0.b32.cont [15/16] 0.0, 128
        %2393 = vxpose.xlu0.b32.end [16/16] 0.0, 128
        %v2394 = vpop.trf.xlu0
        %v2395 = vpop.trf.xlu0
        %v2396 = vpop.trf.xlu0
        %v2397 = vpop.trf.xlu0
        %v2398 = vpop.trf.xlu0
        %v2399 = vpop.trf.xlu0
        %v2400 = vpop.trf.xlu0
        %v2401 = vpop.trf.xlu0
        %v2402 = vpop.trf.xlu0
        %v2403 = vpop.trf.xlu0
        %v2404 = vpop.trf.xlu0
        %v2405 = vpop.trf.xlu0
        %v2406 = vpop.trf.xlu0
        %v2407 = vpop.trf.xlu0
        %v2408 = vpop.trf.xlu0
        %v2409 = vpop.trf.xlu0
        %v2411 = vsel %vm428, %v2394, 0
        %v2414 = vsel %vm428, %v2395, 0
        %2416 = vmatprep.subr.mxu0 0.0
        %2417 = vmatpush1.msra.mxu0 %v2360
        %2418 = vmatprep.subr.mxu0 0.0
        %2419 = vmatpush1.msra.mxu0 %v2365
        %2420 = vmatprep.subr.mxu0 0.0
        %2421 = vmatpush1.msra.mxu0 %v2370
        %2422 = vmatprep.subr.mxu0 0.0
        %2423 = vmatpush1.msra.mxu0 %v2375
        %2424 = vmatprep.subr.mxu0 0.0
        %2425 = vmatpush1.msra.mxu0 0.0
        %2426 = vmatprep.subr.mxu0 0.0
        %2427 = vmatpush1.msra.mxu0 0.0
        %2428 = vmatprep.subr.mxu0 0.0
        %2429 = vmatpush1.msra.mxu0 0.0
        %2430 = vmatprep.subr.mxu0 0.0
        %2431 = vmatpush1.msra.mxu0 0.0
        %2432 = vmatprep.subr.mxu0 0.0
        %2433 = vmatpush1.msra.mxu0 0.0
        %2434 = vmatprep.subr.mxu0 0.0
        %2435 = vmatpush1.msra.mxu0 0.0
        %2436 = vmatprep.subr.mxu0 0.0
        %2437 = vmatpush1.msra.mxu0 0.0
        %2438 = vmatprep.subr.mxu0 0.0
        %2439 = vmatpush1.msra.mxu0 0.0
        %2440 = vmatprep.subr.mxu0 0.0
        %2441 = vmatpush1.msra.mxu0 0.0
        %2442 = vmatprep.subr.mxu0 0.0
        %2443 = vmatpush1.msra.mxu0 0.0
        %2444 = vmatprep.subr.mxu0 0.0
        %2445 = vmatpush1.msra.mxu0 0.0
        %2446 = vmatprep.subr.mxu0 0.0
        %2447 = vmatpush1.msra.mxu0 0.0
        %2448 = vmatprep.subr.mxu0 0.0
        %2449 = vmatpush1.msra.mxu0 0.0
        %2450 = vmatprep.subr.mxu0 0.0
        %2451 = vmatpush1.msra.mxu0 0.0
        %2452 = vmatprep.subr.mxu0 0.0
        %2453 = vmatpush1.msra.mxu0 0.0
        %2454 = vmatprep.subr.mxu0 0.0
        %2455 = vmatpush1.msra.mxu0 0.0
        %2456 = vmatprep.subr.mxu0 0.0
        %2457 = vmatpush1.msra.mxu0 0.0
        %2458 = vmatprep.subr.mxu0 0.0
        %2459 = vmatpush1.msra.mxu0 0.0
        %2460 = vmatprep.subr.mxu0 0.0
        %2461 = vmatpush1.msra.mxu0 0.0
        %2462 = vmatprep.subr.mxu0 0.0
        %2463 = vmatpush1.msra.mxu0 0.0
        %2464 = vmatprep.subr.mxu0 0.0
        %2465 = vmatpush1.msra.mxu0 0.0
        %2466 = vmatprep.subr.mxu0 0.0
        %2467 = vmatpush1.msra.mxu0 0.0
        %2468 = vmatprep.subr.mxu0 0.0
        %2469 = vmatpush1.msra.mxu0 0.0
        %2470 = vmatprep.subr.mxu0 0.0
        %2471 = vmatpush1.msra.mxu0 0.0
        %2472 = vmatprep.subr.mxu0 0.0
        %2473 = vmatpush1.msra.mxu0 0.0
        %2474 = vmatprep.subr.mxu0 0.0
        %2475 = vmatpush1.msra.mxu0 0.0
        %2476 = vmatprep.subr.mxu0 0.0
        %2477 = vmatpush1.msra.mxu0 0.0
        %2478 = vmatprep.subr.mxu0 0.0
        %2479 = vmatpush1.msra.mxu0 0.0
        %2480 = vmatprep.mubr.f32.mxu0 0.0
        %2481 = vmatmul.mubr.f32.gmra.mrb[0].mxu0 %v2411
        %v2482 = vpop.f32.mrb[0].mxu0
        %v2483 = vadd.f32 0.0, %v2482
        %v2484 = vpop.f32.mrb[0].mxu0
        %2485 = vmatprep.mubr.f32.mxu0 0.0
        %2486 = vmatmul.mubr.f32.gmra.mrb[0].mxu0 %v2414
        %v2487 = vpop.f32.mrb[0].mxu0
        %v2488 = vadd.f32 0.0, %v2487
        %v2489 = vpop.f32.mrb[0].mxu0
        %2490 = vdwg.mxu0
        %s2491 = scalar_lea.vmem %s239, 144 [#allocation5]
        %2492 = vst.msk [vmem:[%s2491] sm:$0xff] %vm510, %v2483
        %2493 = vst.msk [vmem:[%s2491 + $0x8] sm:$0xff] %vm510, %v2488
        %v2494 = vsel %vm510, %v2360, 0.0
        %v2495 = vsel %vm510, %v2365, 0.0
        %v2496 = vadd.f32 %v2494, %v2495
        %v2497 = vsel %vm510, %v2370, 0.0
        %v2498 = vadd.f32 %v2496, %v2497
        %v2499 = vsel %vm510, %v2375, 0.0
        %v2500 = vadd.f32 %v2498, %v2499
        %v2501 = vrot.slane %v2500, 4
        %v2502 = vadd.f32 %v2500, %v2501
        %v2503 = vrot.slane %v2502, 2
        %v2504 = vadd.f32 %v2502, %v2503
        %v2505 = vrot.slane %v2504, 1
        %v2506 = vadd.f32 %v2504, %v2505
        %v2507 = vmul.f32 %v2506, %v526
        %s2508 = scalar_lea.vmem %s246, 9 [#allocation6]
        %2509 = vst.msk [vmem:[%s2508] sm:$0x1] %vm528, %v2507
        %v2511 = vsel %vm307, %v268, 0
        %2513 = vmatprep.subr.mxu0 0.0
        %2514 = vmatpush1.msra.mxu0 %v2511
        %2515 = vmatprep.subr.mxu0 0.0
        %2516 = vmatpush1.msra.mxu0 0.0
        %2517 = vmatprep.subr.mxu0 0.0
        %2518 = vmatpush1.msra.mxu0 0.0
        %2519 = vmatprep.subr.mxu0 0.0
        %2520 = vmatpush1.msra.mxu0 0.0
        %2521 = vmatprep.subr.mxu0 0.0
        %2522 = vmatpush1.msra.mxu0 0.0
        %2523 = vmatprep.subr.mxu0 0.0
        %2524 = vmatpush1.msra.mxu0 0.0
        %2525 = vmatprep.subr.mxu0 0.0
        %2526 = vmatpush1.msra.mxu0 0.0
        %2527 = vmatprep.subr.mxu0 0.0
        %2528 = vmatpush1.msra.mxu0 0.0
        %2529 = vmatprep.subr.mxu0 0.0
        %2530 = vmatpush1.msra.mxu0 0.0
        %2531 = vmatprep.subr.mxu0 0.0
        %2532 = vmatpush1.msra.mxu0 0.0
        %2533 = vmatprep.subr.mxu0 0.0
        %2534 = vmatpush1.msra.mxu0 0.0
        %2535 = vmatprep.subr.mxu0 0.0
        %2536 = vmatpush1.msra.mxu0 0.0
        %2537 = vmatprep.subr.mxu0 0.0
        %2538 = vmatpush1.msra.mxu0 0.0
        %2539 = vmatprep.subr.mxu0 0.0
        %2540 = vmatpush1.msra.mxu0 0.0
        %2541 = vmatprep.subr.mxu0 0.0
        %2542 = vmatpush1.msra.mxu0 0.0
        %2543 = vmatprep.subr.mxu0 0.0
        %2544 = vmatpush1.msra.mxu0 0.0
        %2545 = vmatprep.subr.mxu0 0.0
        %2546 = vmatpush1.msra.mxu0 0.0
        %2547 = vmatprep.subr.mxu0 0.0
        %2548 = vmatpush1.msra.mxu0 0.0
        %2549 = vmatprep.subr.mxu0 0.0
        %2550 = vmatpush1.msra.mxu0 0.0
        %2551 = vmatprep.subr.mxu0 0.0
        %2552 = vmatpush1.msra.mxu0 0.0
        %2553 = vmatprep.subr.mxu0 0.0
        %2554 = vmatpush1.msra.mxu0 0.0
        %2555 = vmatprep.subr.mxu0 0.0
        %2556 = vmatpush1.msra.mxu0 0.0
        %2557 = vmatprep.subr.mxu0 0.0
        %2558 = vmatpush1.msra.mxu0 0.0
        %2559 = vmatprep.subr.mxu0 0.0
        %2560 = vmatpush1.msra.mxu0 0.0
        %2561 = vmatprep.subr.mxu0 0.0
        %2562 = vmatpush1.msra.mxu0 0.0
        %2563 = vmatprep.subr.mxu0 0.0
        %2564 = vmatpush1.msra.mxu0 0.0
        %2565 = vmatprep.subr.mxu0 0.0
        %2566 = vmatpush1.msra.mxu0 0.0
        %2567 = vmatprep.subr.mxu0 0.0
        %2568 = vmatpush1.msra.mxu0 0.0
        %2569 = vmatprep.subr.mxu0 0.0
        %2570 = vmatpush1.msra.mxu0 0.0
        %2571 = vmatprep.subr.mxu0 0.0
        %2572 = vmatpush1.msra.mxu0 0.0
        %2573 = vmatprep.subr.mxu0 0.0
        %2574 = vmatpush1.msra.mxu0 0.0
        %2575 = vmatprep.subr.mxu0 0.0
        %2576 = vmatpush1.msra.mxu0 0.0
        %2577 = vmatprep.mubr.f32.mxu0 0.0
        %2578 = vmatmul.mubr.f32.gmra.mrb[0].mxu0 %v296
        %v2579 = vpop.f32.mrb[0].mxu0
        %v2580 = vadd.f32 %v277, %v2579
        %v2581 = vpop.f32.mrb[0].mxu0
        %2582 = vmatprep.mubr.f32.mxu0 0.0
        %2583 = vmatmul.mubr.f32.gmra.mrb[0].mxu0 %v299
        %v2584 = vpop.f32.mrb[0].mxu0
        %v2585 = vadd.f32 %v282, %v2584
        %v2586 = vpop.f32.mrb[0].mxu0
        %2587 = vmatprep.mubr.f32.mxu0 0.0
        %2588 = vmatmul.mubr.f32.gmra.mrb[0].mxu0 %v302
        %v2589 = vpop.f32.mrb[0].mxu0
        %v2590 = vadd.f32 %v287, %v2589
        %v2591 = vpop.f32.mrb[0].mxu0
        %2592 = vmatprep.mubr.f32.mxu0 0.0
        %2593 = vmatmul.mubr.f32.gmra.mrb[0].mxu0 %v305
        %v2594 = vpop.f32.mrb[0].mxu0
        %v2595 = vadd.f32 %v292, %v2594
        %v2596 = vpop.f32.mrb[0].mxu0
        %2597 = vdwg.mxu0
        %2598 = vxpose.xlu0.b32.start [1/16] %v2580, 128
        %2599 = vxpose.xlu0.b32.cont [2/16] %v2585, 128
        %2600 = vxpose.xlu0.b32.cont [3/16] %v2590, 128
        %2601 = vxpose.xlu0.b32.cont [4/16] %v2595, 128
        %2602 = vxpose.xlu0.b32.cont [5/16] 0.0, 128
        %2603 = vxpose.xlu0.b32.cont [6/16] 0.0, 128
        %2604 = vxpose.xlu0.b32.cont [7/16] 0.0, 128
        %2605 = vxpose.xlu0.b32.cont [8/16] 0.0, 128
        %2606 = vxpose.xlu0.b32.cont [9/16] 0.0, 128
        %2607 = vxpose.xlu0.b32.cont [10/16] 0.0, 128
        %2608 = vxpose.xlu0.b32.cont [11/16] 0.0, 128
        %2609 = vxpose.xlu0.b32.cont [12/16] 0.0, 128
        %2610 = vxpose.xlu0.b32.cont [13/16] 0.0, 128
        %2611 = vxpose.xlu0.b32.cont [14/16] 0.0, 128
        %2612 = vxpose.xlu0.b32.cont [15/16] 0.0, 128
        %2613 = vxpose.xlu0.b32.end [16/16] 0.0, 128
        %v2614 = vpop.trf.xlu0
        %v2615 = vpop.trf.xlu0
        %v2616 = vpop.trf.xlu0
        %v2617 = vpop.trf.xlu0
        %v2618 = vpop.trf.xlu0
        %v2619 = vpop.trf.xlu0
        %v2620 = vpop.trf.xlu0
        %v2621 = vpop.trf.xlu0
        %v2622 = vpop.trf.xlu0
        %v2623 = vpop.trf.xlu0
        %v2624 = vpop.trf.xlu0
        %v2625 = vpop.trf.xlu0
        %v2626 = vpop.trf.xlu0
        %v2627 = vpop.trf.xlu0
        %v2628 = vpop.trf.xlu0
        %v2629 = vpop.trf.xlu0
        %v2631 = vsel %vm428, %v2614, 0
        %v2634 = vsel %vm428, %v2615, 0
        %2636 = vmatprep.subr.mxu0 0.0
        %2637 = vmatpush1.msra.mxu0 %v2580
        %2638 = vmatprep.subr.mxu0 0.0
        %2639 = vmatpush1.msra.mxu0 %v2585
        %2640 = vmatprep.subr.mxu0 0.0
        %2641 = vmatpush1.msra.mxu0 %v2590
        %2642 = vmatprep.subr.mxu0 0.0
        %2643 = vmatpush1.msra.mxu0 %v2595
        %2644 = vmatprep.subr.mxu0 0.0
        %2645 = vmatpush1.msra.mxu0 0.0
        %2646 = vmatprep.subr.mxu0 0.0
        %2647 = vmatpush1.msra.mxu0 0.0
        %2648 = vmatprep.subr.mxu0 0.0
        %2649 = vmatpush1.msra.mxu0 0.0
        %2650 = vmatprep.subr.mxu0 0.0
        %2651 = vmatpush1.msra.mxu0 0.0
        %2652 = vmatprep.subr.mxu0 0.0
        %2653 = vmatpush1.msra.mxu0 0.0
        %2654 = vmatprep.subr.mxu0 0.0
        %2655 = vmatpush1.msra.mxu0 0.0
        %2656 = vmatprep.subr.mxu0 0.0
        %2657 = vmatpush1.msra.mxu0 0.0
        %2658 = vmatprep.subr.mxu0 0.0
        %2659 = vmatpush1.msra.mxu0 0.0
        %2660 = vmatprep.subr.mxu0 0.0
        %2661 = vmatpush1.msra.mxu0 0.0
        %2662 = vmatprep.subr.mxu0 0.0
        %2663 = vmatpush1.msra.mxu0 0.0
        %2664 = vmatprep.subr.mxu0 0.0
        %2665 = vmatpush1.msra.mxu0 0.0
        %2666 = vmatprep.subr.mxu0 0.0
        %2667 = vmatpush1.msra.mxu0 0.0
        %2668 = vmatprep.subr.mxu0 0.0
        %2669 = vmatpush1.msra.mxu0 0.0
        %2670 = vmatprep.subr.mxu0 0.0
        %2671 = vmatpush1.msra.mxu0 0.0
        %2672 = vmatprep.subr.mxu0 0.0
        %2673 = vmatpush1.msra.mxu0 0.0
        %2674 = vmatprep.subr.mxu0 0.0
        %2675 = vmatpush1.msra.mxu0 0.0
        %2676 = vmatprep.subr.mxu0 0.0
        %2677 = vmatpush1.msra.mxu0 0.0
        %2678 = vmatprep.subr.mxu0 0.0
        %2679 = vmatpush1.msra.mxu0 0.0
        %2680 = vmatprep.subr.mxu0 0.0
        %2681 = vmatpush1.msra.mxu0 0.0
        %2682 = vmatprep.subr.mxu0 0.0
        %2683 = vmatpush1.msra.mxu0 0.0
        %2684 = vmatprep.subr.mxu0 0.0
        %2685 = vmatpush1.msra.mxu0 0.0
        %2686 = vmatprep.subr.mxu0 0.0
        %2687 = vmatpush1.msra.mxu0 0.0
        %2688 = vmatprep.subr.mxu0 0.0
        %2689 = vmatpush1.msra.mxu0 0.0
        %2690 = vmatprep.subr.mxu0 0.0
        %2691 = vmatpush1.msra.mxu0 0.0
        %2692 = vmatprep.subr.mxu0 0.0
        %2693 = vmatpush1.msra.mxu0 0.0
        %2694 = vmatprep.subr.mxu0 0.0
        %2695 = vmatpush1.msra.mxu0 0.0
        %2696 = vmatprep.subr.mxu0 0.0
        %2697 = vmatpush1.msra.mxu0 0.0
        %2698 = vmatprep.subr.mxu0 0.0
        %2699 = vmatpush1.msra.mxu0 0.0
        %2700 = vmatprep.mubr.f32.mxu0 0.0
        %2701 = vmatmul.mubr.f32.gmra.mrb[0].mxu0 %v2631
        %v2702 = vpop.f32.mrb[0].mxu0
        %v2703 = vadd.f32 0.0, %v2702
        %v2704 = vpop.f32.mrb[0].mxu0
        %2705 = vmatprep.mubr.f32.mxu0 0.0
        %2706 = vmatmul.mubr.f32.gmra.mrb[0].mxu0 %v2634
        %v2707 = vpop.f32.mrb[0].mxu0
        %v2708 = vadd.f32 0.0, %v2707
        %v2709 = vpop.f32.mrb[0].mxu0
        %2710 = vdwg.mxu0
        %s2711 = scalar_lea.vmem %s239, 160 [#allocation5]
        %2712 = vst.msk [vmem:[%s2711] sm:$0xff] %vm510, %v2703
        %2713 = vst.msk [vmem:[%s2711 + $0x8] sm:$0xff] %vm510, %v2708
        %v2714 = vsel %vm510, %v2580, 0.0
        %v2715 = vsel %vm510, %v2585, 0.0
        %v2716 = vadd.f32 %v2714, %v2715
        %v2717 = vsel %vm510, %v2590, 0.0
        %v2718 = vadd.f32 %v2716, %v2717
        %v2719 = vsel %vm510, %v2595, 0.0
        %v2720 = vadd.f32 %v2718, %v2719
        %v2721 = vrot.slane %v2720, 4
        %v2722 = vadd.f32 %v2720, %v2721
        %v2723 = vrot.slane %v2722, 2
        %v2724 = vadd.f32 %v2722, %v2723
        %v2725 = vrot.slane %v2724, 1
        %v2726 = vadd.f32 %v2724, %v2725
        %v2727 = vmul.f32 %v2726, %v526
        %s2728 = scalar_lea.vmem %s246, 10 [#allocation6]
        %2729 = vst.msk [vmem:[%s2728] sm:$0x1] %vm528, %v2727
        %v2731 = vsel %vm307, %v269, 0
        %2733 = vmatprep.subr.mxu0 0.0
        %2734 = vmatpush1.msra.mxu0 %v2731
        %2735 = vmatprep.subr.mxu0 0.0
        %2736 = vmatpush1.msra.mxu0 0.0
        %2737 = vmatprep.subr.mxu0 0.0
        %2738 = vmatpush1.msra.mxu0 0.0
        %2739 = vmatprep.subr.mxu0 0.0
        %2740 = vmatpush1.msra.mxu0 0.0
        %2741 = vmatprep.subr.mxu0 0.0
        %2742 = vmatpush1.msra.mxu0 0.0
        %2743 = vmatprep.subr.mxu0 0.0
        %2744 = vmatpush1.msra.mxu0 0.0
        %2745 = vmatprep.subr.mxu0 0.0
        %2746 = vmatpush1.msra.mxu0 0.0
        %2747 = vmatprep.subr.mxu0 0.0
        %2748 = vmatpush1.msra.mxu0 0.0
        %2749 = vmatprep.subr.mxu0 0.0
        %2750 = vmatpush1.msra.mxu0 0.0
        %2751 = vmatprep.subr.mxu0 0.0
        %2752 = vmatpush1.msra.mxu0 0.0
        %2753 = vmatprep.subr.mxu0 0.0
        %2754 = vmatpush1.msra.mxu0 0.0
        %2755 = vmatprep.subr.mxu0 0.0
        %2756 = vmatpush1.msra.mxu0 0.0
        %2757 = vmatprep.subr.mxu0 0.0
        %2758 = vmatpush1.msra.mxu0 0.0
        %2759 = vmatprep.subr.mxu0 0.0
        %2760 = vmatpush1.msra.mxu0 0.0
        %2761 = vmatprep.subr.mxu0 0.0
        %2762 = vmatpush1.msra.mxu0 0.0
        %2763 = vmatprep.subr.mxu0 0.0
        %2764 = vmatpush1.msra.mxu0 0.0
        %2765 = vmatprep.subr.mxu0 0.0
        %2766 = vmatpush1.msra.mxu0 0.0
        %2767 = vmatprep.subr.mxu0 0.0
        %2768 = vmatpush1.msra.mxu0 0.0
        %2769 = vmatprep.subr.mxu0 0.0
        %2770 = vmatpush1.msra.mxu0 0.0
        %2771 = vmatprep.subr.mxu0 0.0
        %2772 = vmatpush1.msra.mxu0 0.0
        %2773 = vmatprep.subr.mxu0 0.0
        %2774 = vmatpush1.msra.mxu0 0.0
        %2775 = vmatprep.subr.mxu0 0.0
        %2776 = vmatpush1.msra.mxu0 0.0
        %2777 = vmatprep.subr.mxu0 0.0
        %2778 = vmatpush1.msra.mxu0 0.0
        %2779 = vmatprep.subr.mxu0 0.0
        %2780 = vmatpush1.msra.mxu0 0.0
        %2781 = vmatprep.subr.mxu0 0.0
        %2782 = vmatpush1.msra.mxu0 0.0
        %2783 = vmatprep.subr.mxu0 0.0
        %2784 = vmatpush1.msra.mxu0 0.0
        %2785 = vmatprep.subr.mxu0 0.0
        %2786 = vmatpush1.msra.mxu0 0.0
        %2787 = vmatprep.subr.mxu0 0.0
        %2788 = vmatpush1.msra.mxu0 0.0
        %2789 = vmatprep.subr.mxu0 0.0
        %2790 = vmatpush1.msra.mxu0 0.0
        %2791 = vmatprep.subr.mxu0 0.0
        %2792 = vmatpush1.msra.mxu0 0.0
        %2793 = vmatprep.subr.mxu0 0.0
        %2794 = vmatpush1.msra.mxu0 0.0
        %2795 = vmatprep.subr.mxu0 0.0
        %2796 = vmatpush1.msra.mxu0 0.0
        %2797 = vmatprep.mubr.f32.mxu0 0.0
        %2798 = vmatmul.mubr.f32.gmra.mrb[0].mxu0 %v296
        %v2799 = vpop.f32.mrb[0].mxu0
        %v2800 = vadd.f32 %v277, %v2799
        %v2801 = vpop.f32.mrb[0].mxu0
        %2802 = vmatprep.mubr.f32.mxu0 0.0
        %2803 = vmatmul.mubr.f32.gmra.mrb[0].mxu0 %v299
        %v2804 = vpop.f32.mrb[0].mxu0
        %v2805 = vadd.f32 %v282, %v2804
        %v2806 = vpop.f32.mrb[0].mxu0
        %2807 = vmatprep.mubr.f32.mxu0 0.0
        %2808 = vmatmul.mubr.f32.gmra.mrb[0].mxu0 %v302
        %v2809 = vpop.f32.mrb[0].mxu0
        %v2810 = vadd.f32 %v287, %v2809
        %v2811 = vpop.f32.mrb[0].mxu0
        %2812 = vmatprep.mubr.f32.mxu0 0.0
        %2813 = vmatmul.mubr.f32.gmra.mrb[0].mxu0 %v305
        %v2814 = vpop.f32.mrb[0].mxu0
        %v2815 = vadd.f32 %v292, %v2814
        %v2816 = vpop.f32.mrb[0].mxu0
        %2817 = vdwg.mxu0
        %2818 = vxpose.xlu0.b32.start [1/16] %v2800, 128
        %2819 = vxpose.xlu0.b32.cont [2/16] %v2805, 128
        %2820 = vxpose.xlu0.b32.cont [3/16] %v2810, 128
        %2821 = vxpose.xlu0.b32.cont [4/16] %v2815, 128
        %2822 = vxpose.xlu0.b32.cont [5/16] 0.0, 128
        %2823 = vxpose.xlu0.b32.cont [6/16] 0.0, 128
        %2824 = vxpose.xlu0.b32.cont [7/16] 0.0, 128
        %2825 = vxpose.xlu0.b32.cont [8/16] 0.0, 128
        %2826 = vxpose.xlu0.b32.cont [9/16] 0.0, 128
        %2827 = vxpose.xlu0.b32.cont [10/16] 0.0, 128
        %2828 = vxpose.xlu0.b32.cont [11/16] 0.0, 128
        %2829 = vxpose.xlu0.b32.cont [12/16] 0.0, 128
        %2830 = vxpose.xlu0.b32.cont [13/16] 0.0, 128
        %2831 = vxpose.xlu0.b32.cont [14/16] 0.0, 128
        %2832 = vxpose.xlu0.b32.cont [15/16] 0.0, 128
        %2833 = vxpose.xlu0.b32.end [16/16] 0.0, 128
        %v2834 = vpop.trf.xlu0
        %v2835 = vpop.trf.xlu0
        %v2836 = vpop.trf.xlu0
        %v2837 = vpop.trf.xlu0
        %v2838 = vpop.trf.xlu0
        %v2839 = vpop.trf.xlu0
        %v2840 = vpop.trf.xlu0
        %v2841 = vpop.trf.xlu0
        %v2842 = vpop.trf.xlu0
        %v2843 = vpop.trf.xlu0
        %v2844 = vpop.trf.xlu0
        %v2845 = vpop.trf.xlu0
        %v2846 = vpop.trf.xlu0
        %v2847 = vpop.trf.xlu0
        %v2848 = vpop.trf.xlu0
        %v2849 = vpop.trf.xlu0
        %v2851 = vsel %vm428, %v2834, 0
        %v2854 = vsel %vm428, %v2835, 0
        %2856 = vmatprep.subr.mxu0 0.0
        %2857 = vmatpush1.msra.mxu0 %v2800
        %2858 = vmatprep.subr.mxu0 0.0
        %2859 = vmatpush1.msra.mxu0 %v2805
        %2860 = vmatprep.subr.mxu0 0.0
        %2861 = vmatpush1.msra.mxu0 %v2810
        %2862 = vmatprep.subr.mxu0 0.0
        %2863 = vmatpush1.msra.mxu0 %v2815
        %2864 = vmatprep.subr.mxu0 0.0
        %2865 = vmatpush1.msra.mxu0 0.0
        %2866 = vmatprep.subr.mxu0 0.0
        %2867 = vmatpush1.msra.mxu0 0.0
        %2868 = vmatprep.subr.mxu0 0.0
        %2869 = vmatpush1.msra.mxu0 0.0
        %2870 = vmatprep.subr.mxu0 0.0
        %2871 = vmatpush1.msra.mxu0 0.0
        %2872 = vmatprep.subr.mxu0 0.0
        %2873 = vmatpush1.msra.mxu0 0.0
        %2874 = vmatprep.subr.mxu0 0.0
        %2875 = vmatpush1.msra.mxu0 0.0
        %2876 = vmatprep.subr.mxu0 0.0
        %2877 = vmatpush1.msra.mxu0 0.0
        %2878 = vmatprep.subr.mxu0 0.0
        %2879 = vmatpush1.msra.mxu0 0.0
        %2880 = vmatprep.subr.mxu0 0.0
        %2881 = vmatpush1.msra.mxu0 0.0
        %2882 = vmatprep.subr.mxu0 0.0
        %2883 = vmatpush1.msra.mxu0 0.0
        %2884 = vmatprep.subr.mxu0 0.0
        %2885 = vmatpush1.msra.mxu0 0.0
        %2886 = vmatprep.subr.mxu0 0.0
        %2887 = vmatpush1.msra.mxu0 0.0
        %2888 = vmatprep.subr.mxu0 0.0
        %2889 = vmatpush1.msra.mxu0 0.0
        %2890 = vmatprep.subr.mxu0 0.0
        %2891 = vmatpush1.msra.mxu0 0.0
        %2892 = vmatprep.subr.mxu0 0.0
        %2893 = vmatpush1.msra.mxu0 0.0
        %2894 = vmatprep.subr.mxu0 0.0
        %2895 = vmatpush1.msra.mxu0 0.0
        %2896 = vmatprep.subr.mxu0 0.0
        %2897 = vmatpush1.msra.mxu0 0.0
        %2898 = vmatprep.subr.mxu0 0.0
        %2899 = vmatpush1.msra.mxu0 0.0
        %2900 = vmatprep.subr.mxu0 0.0
        %2901 = vmatpush1.msra.mxu0 0.0
        %2902 = vmatprep.subr.mxu0 0.0
        %2903 = vmatpush1.msra.mxu0 0.0
        %2904 = vmatprep.subr.mxu0 0.0
        %2905 = vmatpush1.msra.mxu0 0.0
        %2906 = vmatprep.subr.mxu0 0.0
        %2907 = vmatpush1.msra.mxu0 0.0
        %2908 = vmatprep.subr.mxu0 0.0
        %2909 = vmatpush1.msra.mxu0 0.0
        %2910 = vmatprep.subr.mxu0 0.0
        %2911 = vmatpush1.msra.mxu0 0.0
        %2912 = vmatprep.subr.mxu0 0.0
        %2913 = vmatpush1.msra.mxu0 0.0
        %2914 = vmatprep.subr.mxu0 0.0
        %2915 = vmatpush1.msra.mxu0 0.0
        %2916 = vmatprep.subr.mxu0 0.0
        %2917 = vmatpush1.msra.mxu0 0.0
        %2918 = vmatprep.subr.mxu0 0.0
        %2919 = vmatpush1.msra.mxu0 0.0
        %2920 = vmatprep.mubr.f32.mxu0 0.0
        %2921 = vmatmul.mubr.f32.gmra.mrb[0].mxu0 %v2851
        %v2922 = vpop.f32.mrb[0].mxu0
        %v2923 = vadd.f32 0.0, %v2922
        %v2924 = vpop.f32.mrb[0].mxu0
        %2925 = vmatprep.mubr.f32.mxu0 0.0
        %2926 = vmatmul.mubr.f32.gmra.mrb[0].mxu0 %v2854
        %v2927 = vpop.f32.mrb[0].mxu0
        %v2928 = vadd.f32 0.0, %v2927
        %v2929 = vpop.f32.mrb[0].mxu0
        %2930 = vdwg.mxu0
        %s2931 = scalar_lea.vmem %s239, 176 [#allocation5]
        %2932 = vst.msk [vmem:[%s2931] sm:$0xff] %vm510, %v2923
        %2933 = vst.msk [vmem:[%s2931 + $0x8] sm:$0xff] %vm510, %v2928
        %v2934 = vsel %vm510, %v2800, 0.0
        %v2935 = vsel %vm510, %v2805, 0.0
        %v2936 = vadd.f32 %v2934, %v2935
        %v2937 = vsel %vm510, %v2810, 0.0
        %v2938 = vadd.f32 %v2936, %v2937
        %v2939 = vsel %vm510, %v2815, 0.0
        %v2940 = vadd.f32 %v2938, %v2939
        %v2941 = vrot.slane %v2940, 4
        %v2942 = vadd.f32 %v2940, %v2941
        %v2943 = vrot.slane %v2942, 2
        %v2944 = vadd.f32 %v2942, %v2943
        %v2945 = vrot.slane %v2944, 1
        %v2946 = vadd.f32 %v2944, %v2945
        %v2947 = vmul.f32 %v2946, %v526
        %s2948 = scalar_lea.vmem %s246, 11 [#allocation6]
        %2949 = vst.msk [vmem:[%s2948] sm:$0x1] %vm528, %v2947
        %v2951 = vsel %vm307, %v270, 0
        %2953 = vmatprep.subr.mxu0 0.0
        %2954 = vmatpush1.msra.mxu0 %v2951
        %2955 = vmatprep.subr.mxu0 0.0
        %2956 = vmatpush1.msra.mxu0 0.0
        %2957 = vmatprep.subr.mxu0 0.0
        %2958 = vmatpush1.msra.mxu0 0.0
        %2959 = vmatprep.subr.mxu0 0.0
        %2960 = vmatpush1.msra.mxu0 0.0
        %2961 = vmatprep.subr.mxu0 0.0
        %2962 = vmatpush1.msra.mxu0 0.0
        %2963 = vmatprep.subr.mxu0 0.0
        %2964 = vmatpush1.msra.mxu0 0.0
        %2965 = vmatprep.subr.mxu0 0.0
        %2966 = vmatpush1.msra.mxu0 0.0
        %2967 = vmatprep.subr.mxu0 0.0
        %2968 = vmatpush1.msra.mxu0 0.0
        %2969 = vmatprep.subr.mxu0 0.0
        %2970 = vmatpush1.msra.mxu0 0.0
        %2971 = vmatprep.subr.mxu0 0.0
        %2972 = vmatpush1.msra.mxu0 0.0
        %2973 = vmatprep.subr.mxu0 0.0
        %2974 = vmatpush1.msra.mxu0 0.0
        %2975 = vmatprep.subr.mxu0 0.0
        %2976 = vmatpush1.msra.mxu0 0.0
        %2977 = vmatprep.subr.mxu0 0.0
        %2978 = vmatpush1.msra.mxu0 0.0
        %2979 = vmatprep.subr.mxu0 0.0
        %2980 = vmatpush1.msra.mxu0 0.0
        %2981 = vmatprep.subr.mxu0 0.0
        %2982 = vmatpush1.msra.mxu0 0.0
        %2983 = vmatprep.subr.mxu0 0.0
        %2984 = vmatpush1.msra.mxu0 0.0
        %2985 = vmatprep.subr.mxu0 0.0
        %2986 = vmatpush1.msra.mxu0 0.0
        %2987 = vmatprep.subr.mxu0 0.0
        %2988 = vmatpush1.msra.mxu0 0.0
        %2989 = vmatprep.subr.mxu0 0.0
        %2990 = vmatpush1.msra.mxu0 0.0
        %2991 = vmatprep.subr.mxu0 0.0
        %2992 = vmatpush1.msra.mxu0 0.0
        %2993 = vmatprep.subr.mxu0 0.0
        %2994 = vmatpush1.msra.mxu0 0.0
        %2995 = vmatprep.subr.mxu0 0.0
        %2996 = vmatpush1.msra.mxu0 0.0
        %2997 = vmatprep.subr.mxu0 0.0
        %2998 = vmatpush1.msra.mxu0 0.0
        %2999 = vmatprep.subr.mxu0 0.0
        %3000 = vmatpush1.msra.mxu0 0.0
        %3001 = vmatprep.subr.mxu0 0.0
        %3002 = vmatpush1.msra.mxu0 0.0
        %3003 = vmatprep.subr.mxu0 0.0
        %3004 = vmatpush1.msra.mxu0 0.0
        %3005 = vmatprep.subr.mxu0 0.0
        %3006 = vmatpush1.msra.mxu0 0.0
        %3007 = vmatprep.subr.mxu0 0.0
        %3008 = vmatpush1.msra.mxu0 0.0
        %3009 = vmatprep.subr.mxu0 0.0
        %3010 = vmatpush1.msra.mxu0 0.0
        %3011 = vmatprep.subr.mxu0 0.0
        %3012 = vmatpush1.msra.mxu0 0.0
        %3013 = vmatprep.subr.mxu0 0.0
        %3014 = vmatpush1.msra.mxu0 0.0
        %3015 = vmatprep.subr.mxu0 0.0
        %3016 = vmatpush1.msra.mxu0 0.0
        %3017 = vmatprep.mubr.f32.mxu0 0.0
        %3018 = vmatmul.mubr.f32.gmra.mrb[0].mxu0 %v296
        %v3019 = vpop.f32.mrb[0].mxu0
        %v3020 = vadd.f32 %v277, %v3019
        %v3021 = vpop.f32.mrb[0].mxu0
        %3022 = vmatprep.mubr.f32.mxu0 0.0
        %3023 = vmatmul.mubr.f32.gmra.mrb[0].mxu0 %v299
        %v3024 = vpop.f32.mrb[0].mxu0
        %v3025 = vadd.f32 %v282, %v3024
        %v3026 = vpop.f32.mrb[0].mxu0
        %3027 = vmatprep.mubr.f32.mxu0 0.0
        %3028 = vmatmul.mubr.f32.gmra.mrb[0].mxu0 %v302
        %v3029 = vpop.f32.mrb[0].mxu0
        %v3030 = vadd.f32 %v287, %v3029
        %v3031 = vpop.f32.mrb[0].mxu0
        %3032 = vmatprep.mubr.f32.mxu0 0.0
        %3033 = vmatmul.mubr.f32.gmra.mrb[0].mxu0 %v305
        %v3034 = vpop.f32.mrb[0].mxu0
        %v3035 = vadd.f32 %v292, %v3034
        %v3036 = vpop.f32.mrb[0].mxu0
        %3037 = vdwg.mxu0
        %3038 = vxpose.xlu0.b32.start [1/16] %v3020, 128
        %3039 = vxpose.xlu0.b32.cont [2/16] %v3025, 128
        %3040 = vxpose.xlu0.b32.cont [3/16] %v3030, 128
        %3041 = vxpose.xlu0.b32.cont [4/16] %v3035, 128
        %3042 = vxpose.xlu0.b32.cont [5/16] 0.0, 128
        %3043 = vxpose.xlu0.b32.cont [6/16] 0.0, 128
        %3044 = vxpose.xlu0.b32.cont [7/16] 0.0, 128
        %3045 = vxpose.xlu0.b32.cont [8/16] 0.0, 128
        %3046 = vxpose.xlu0.b32.cont [9/16] 0.0, 128
        %3047 = vxpose.xlu0.b32.cont [10/16] 0.0, 128
        %3048 = vxpose.xlu0.b32.cont [11/16] 0.0, 128
        %3049 = vxpose.xlu0.b32.cont [12/16] 0.0, 128
        %3050 = vxpose.xlu0.b32.cont [13/16] 0.0, 128
        %3051 = vxpose.xlu0.b32.cont [14/16] 0.0, 128
        %3052 = vxpose.xlu0.b32.cont [15/16] 0.0, 128
        %3053 = vxpose.xlu0.b32.end [16/16] 0.0, 128
        %v3054 = vpop.trf.xlu0
        %v3055 = vpop.trf.xlu0
        %v3056 = vpop.trf.xlu0
        %v3057 = vpop.trf.xlu0
        %v3058 = vpop.trf.xlu0
        %v3059 = vpop.trf.xlu0
        %v3060 = vpop.trf.xlu0
        %v3061 = vpop.trf.xlu0
        %v3062 = vpop.trf.xlu0
        %v3063 = vpop.trf.xlu0
        %v3064 = vpop.trf.xlu0
        %v3065 = vpop.trf.xlu0
        %v3066 = vpop.trf.xlu0
        %v3067 = vpop.trf.xlu0
        %v3068 = vpop.trf.xlu0
        %v3069 = vpop.trf.xlu0
        %v3071 = vsel %vm428, %v3054, 0
        %v3074 = vsel %vm428, %v3055, 0
        %3076 = vmatprep.subr.mxu0 0.0
        %3077 = vmatpush1.msra.mxu0 %v3020
        %3078 = vmatprep.subr.mxu0 0.0
        %3079 = vmatpush1.msra.mxu0 %v3025
        %3080 = vmatprep.subr.mxu0 0.0
        %3081 = vmatpush1.msra.mxu0 %v3030
        %3082 = vmatprep.subr.mxu0 0.0
        %3083 = vmatpush1.msra.mxu0 %v3035
        %3084 = vmatprep.subr.mxu0 0.0
        %3085 = vmatpush1.msra.mxu0 0.0
        %3086 = vmatprep.subr.mxu0 0.0
        %3087 = vmatpush1.msra.mxu0 0.0
        %3088 = vmatprep.subr.mxu0 0.0
        %3089 = vmatpush1.msra.mxu0 0.0
        %3090 = vmatprep.subr.mxu0 0.0
        %3091 = vmatpush1.msra.mxu0 0.0
        %3092 = vmatprep.subr.mxu0 0.0
        %3093 = vmatpush1.msra.mxu0 0.0
        %3094 = vmatprep.subr.mxu0 0.0
        %3095 = vmatpush1.msra.mxu0 0.0
        %3096 = vmatprep.subr.mxu0 0.0
        %3097 = vmatpush1.msra.mxu0 0.0
        %3098 = vmatprep.subr.mxu0 0.0
        %3099 = vmatpush1.msra.mxu0 0.0
        %3100 = vmatprep.subr.mxu0 0.0
        %3101 = vmatpush1.msra.mxu0 0.0
        %3102 = vmatprep.subr.mxu0 0.0
        %3103 = vmatpush1.msra.mxu0 0.0
        %3104 = vmatprep.subr.mxu0 0.0
        %3105 = vmatpush1.msra.mxu0 0.0
        %3106 = vmatprep.subr.mxu0 0.0
        %3107 = vmatpush1.msra.mxu0 0.0
        %3108 = vmatprep.subr.mxu0 0.0
        %3109 = vmatpush1.msra.mxu0 0.0
        %3110 = vmatprep.subr.mxu0 0.0
        %3111 = vmatpush1.msra.mxu0 0.0
        %3112 = vmatprep.subr.mxu0 0.0
        %3113 = vmatpush1.msra.mxu0 0.0
        %3114 = vmatprep.subr.mxu0 0.0
        %3115 = vmatpush1.msra.mxu0 0.0
        %3116 = vmatprep.subr.mxu0 0.0
        %3117 = vmatpush1.msra.mxu0 0.0
        %3118 = vmatprep.subr.mxu0 0.0
        %3119 = vmatpush1.msra.mxu0 0.0
        %3120 = vmatprep.subr.mxu0 0.0
        %3121 = vmatpush1.msra.mxu0 0.0
        %3122 = vmatprep.subr.mxu0 0.0
        %3123 = vmatpush1.msra.mxu0 0.0
        %3124 = vmatprep.subr.mxu0 0.0
        %3125 = vmatpush1.msra.mxu0 0.0
        %3126 = vmatprep.subr.mxu0 0.0
        %3127 = vmatpush1.msra.mxu0 0.0
        %3128 = vmatprep.subr.mxu0 0.0
        %3129 = vmatpush1.msra.mxu0 0.0
        %3130 = vmatprep.subr.mxu0 0.0
        %3131 = vmatpush1.msra.mxu0 0.0
        %3132 = vmatprep.subr.mxu0 0.0
        %3133 = vmatpush1.msra.mxu0 0.0
        %3134 = vmatprep.subr.mxu0 0.0
        %3135 = vmatpush1.msra.mxu0 0.0
        %3136 = vmatprep.subr.mxu0 0.0
        %3137 = vmatpush1.msra.mxu0 0.0
        %3138 = vmatprep.subr.mxu0 0.0
        %3139 = vmatpush1.msra.mxu0 0.0
        %3140 = vmatprep.mubr.f32.mxu0 0.0
        %3141 = vmatmul.mubr.f32.gmra.mrb[0].mxu0 %v3071
        %v3142 = vpop.f32.mrb[0].mxu0
        %v3143 = vadd.f32 0.0, %v3142
        %v3144 = vpop.f32.mrb[0].mxu0
        %3145 = vmatprep.mubr.f32.mxu0 0.0
        %3146 = vmatmul.mubr.f32.gmra.mrb[0].mxu0 %v3074
        %v3147 = vpop.f32.mrb[0].mxu0
        %v3148 = vadd.f32 0.0, %v3147
        %v3149 = vpop.f32.mrb[0].mxu0
        %3150 = vdwg.mxu0
        %s3151 = scalar_lea.vmem %s239, 192 [#allocation5]
        %3152 = vst.msk [vmem:[%s3151] sm:$0xff] %vm510, %v3143
        %3153 = vst.msk [vmem:[%s3151 + $0x8] sm:$0xff] %vm510, %v3148
        %v3154 = vsel %vm510, %v3020, 0.0
        %v3155 = vsel %vm510, %v3025, 0.0
        %v3156 = vadd.f32 %v3154, %v3155
        %v3157 = vsel %vm510, %v3030, 0.0
        %v3158 = vadd.f32 %v3156, %v3157
        %v3159 = vsel %vm510, %v3035, 0.0
        %v3160 = vadd.f32 %v3158, %v3159
        %v3161 = vrot.slane %v3160, 4
        %v3162 = vadd.f32 %v3160, %v3161
        %v3163 = vrot.slane %v3162, 2
        %v3164 = vadd.f32 %v3162, %v3163
        %v3165 = vrot.slane %v3164, 1
        %v3166 = vadd.f32 %v3164, %v3165
        %v3167 = vmul.f32 %v3166, %v526
        %s3168 = scalar_lea.vmem %s246, 12 [#allocation6]
        %3169 = vst.msk [vmem:[%s3168] sm:$0x1] %vm528, %v3167
        %v3171 = vsel %vm307, %v271, 0
        %3173 = vmatprep.subr.mxu0 0.0
        %3174 = vmatpush1.msra.mxu0 %v3171
        %3175 = vmatprep.subr.mxu0 0.0
        %3176 = vmatpush1.msra.mxu0 0.0
        %3177 = vmatprep.subr.mxu0 0.0
        %3178 = vmatpush1.msra.mxu0 0.0
        %3179 = vmatprep.subr.mxu0 0.0
        %3180 = vmatpush1.msra.mxu0 0.0
        %3181 = vmatprep.subr.mxu0 0.0
        %3182 = vmatpush1.msra.mxu0 0.0
        %3183 = vmatprep.subr.mxu0 0.0
        %3184 = vmatpush1.msra.mxu0 0.0
        %3185 = vmatprep.subr.mxu0 0.0
        %3186 = vmatpush1.msra.mxu0 0.0
        %3187 = vmatprep.subr.mxu0 0.0
        %3188 = vmatpush1.msra.mxu0 0.0
        %3189 = vmatprep.subr.mxu0 0.0
        %3190 = vmatpush1.msra.mxu0 0.0
        %3191 = vmatprep.subr.mxu0 0.0
        %3192 = vmatpush1.msra.mxu0 0.0
        %3193 = vmatprep.subr.mxu0 0.0
        %3194 = vmatpush1.msra.mxu0 0.0
        %3195 = vmatprep.subr.mxu0 0.0
        %3196 = vmatpush1.msra.mxu0 0.0
        %3197 = vmatprep.subr.mxu0 0.0
        %3198 = vmatpush1.msra.mxu0 0.0
        %3199 = vmatprep.subr.mxu0 0.0
        %3200 = vmatpush1.msra.mxu0 0.0
        %3201 = vmatprep.subr.mxu0 0.0
        %3202 = vmatpush1.msra.mxu0 0.0
        %3203 = vmatprep.subr.mxu0 0.0
        %3204 = vmatpush1.msra.mxu0 0.0
        %3205 = vmatprep.subr.mxu0 0.0
        %3206 = vmatpush1.msra.mxu0 0.0
        %3207 = vmatprep.subr.mxu0 0.0
        %3208 = vmatpush1.msra.mxu0 0.0
        %3209 = vmatprep.subr.mxu0 0.0
        %3210 = vmatpush1.msra.mxu0 0.0
        %3211 = vmatprep.subr.mxu0 0.0
        %3212 = vmatpush1.msra.mxu0 0.0
        %3213 = vmatprep.subr.mxu0 0.0
        %3214 = vmatpush1.msra.mxu0 0.0
        %3215 = vmatprep.subr.mxu0 0.0
        %3216 = vmatpush1.msra.mxu0 0.0
        %3217 = vmatprep.subr.mxu0 0.0
        %3218 = vmatpush1.msra.mxu0 0.0
        %3219 = vmatprep.subr.mxu0 0.0
        %3220 = vmatpush1.msra.mxu0 0.0
        %3221 = vmatprep.subr.mxu0 0.0
        %3222 = vmatpush1.msra.mxu0 0.0
        %3223 = vmatprep.subr.mxu0 0.0
        %3224 = vmatpush1.msra.mxu0 0.0
        %3225 = vmatprep.subr.mxu0 0.0
        %3226 = vmatpush1.msra.mxu0 0.0
        %3227 = vmatprep.subr.mxu0 0.0
        %3228 = vmatpush1.msra.mxu0 0.0
        %3229 = vmatprep.subr.mxu0 0.0
        %3230 = vmatpush1.msra.mxu0 0.0
        %3231 = vmatprep.subr.mxu0 0.0
        %3232 = vmatpush1.msra.mxu0 0.0
        %3233 = vmatprep.subr.mxu0 0.0
        %3234 = vmatpush1.msra.mxu0 0.0
        %3235 = vmatprep.subr.mxu0 0.0
        %3236 = vmatpush1.msra.mxu0 0.0
        %3237 = vmatprep.mubr.f32.mxu0 0.0
        %3238 = vmatmul.mubr.f32.gmra.mrb[0].mxu0 %v296
        %v3239 = vpop.f32.mrb[0].mxu0
        %v3240 = vadd.f32 %v277, %v3239
        %v3241 = vpop.f32.mrb[0].mxu0
        %3242 = vmatprep.mubr.f32.mxu0 0.0
        %3243 = vmatmul.mubr.f32.gmra.mrb[0].mxu0 %v299
        %v3244 = vpop.f32.mrb[0].mxu0
        %v3245 = vadd.f32 %v282, %v3244
        %v3246 = vpop.f32.mrb[0].mxu0
        %3247 = vmatprep.mubr.f32.mxu0 0.0
        %3248 = vmatmul.mubr.f32.gmra.mrb[0].mxu0 %v302
        %v3249 = vpop.f32.mrb[0].mxu0
        %v3250 = vadd.f32 %v287, %v3249
        %v3251 = vpop.f32.mrb[0].mxu0
        %3252 = vmatprep.mubr.f32.mxu0 0.0
        %3253 = vmatmul.mubr.f32.gmra.mrb[0].mxu0 %v305
        %v3254 = vpop.f32.mrb[0].mxu0
        %v3255 = vadd.f32 %v292, %v3254
        %v3256 = vpop.f32.mrb[0].mxu0
        %3257 = vdwg.mxu0
        %3258 = vxpose.xlu0.b32.start [1/16] %v3240, 128
        %3259 = vxpose.xlu0.b32.cont [2/16] %v3245, 128
        %3260 = vxpose.xlu0.b32.cont [3/16] %v3250, 128
        %3261 = vxpose.xlu0.b32.cont [4/16] %v3255, 128
        %3262 = vxpose.xlu0.b32.cont [5/16] 0.0, 128
        %3263 = vxpose.xlu0.b32.cont [6/16] 0.0, 128
        %3264 = vxpose.xlu0.b32.cont [7/16] 0.0, 128
        %3265 = vxpose.xlu0.b32.cont [8/16] 0.0, 128
        %3266 = vxpose.xlu0.b32.cont [9/16] 0.0, 128
        %3267 = vxpose.xlu0.b32.cont [10/16] 0.0, 128
        %3268 = vxpose.xlu0.b32.cont [11/16] 0.0, 128
        %3269 = vxpose.xlu0.b32.cont [12/16] 0.0, 128
        %3270 = vxpose.xlu0.b32.cont [13/16] 0.0, 128
        %3271 = vxpose.xlu0.b32.cont [14/16] 0.0, 128
        %3272 = vxpose.xlu0.b32.cont [15/16] 0.0, 128
        %3273 = vxpose.xlu0.b32.end [16/16] 0.0, 128
        %v3274 = vpop.trf.xlu0
        %v3275 = vpop.trf.xlu0
        %v3276 = vpop.trf.xlu0
        %v3277 = vpop.trf.xlu0
        %v3278 = vpop.trf.xlu0
        %v3279 = vpop.trf.xlu0
        %v3280 = vpop.trf.xlu0
        %v3281 = vpop.trf.xlu0
        %v3282 = vpop.trf.xlu0
        %v3283 = vpop.trf.xlu0
        %v3284 = vpop.trf.xlu0
        %v3285 = vpop.trf.xlu0
        %v3286 = vpop.trf.xlu0
        %v3287 = vpop.trf.xlu0
        %v3288 = vpop.trf.xlu0
        %v3289 = vpop.trf.xlu0
        %v3291 = vsel %vm428, %v3274, 0
        %v3294 = vsel %vm428, %v3275, 0
        %3296 = vmatprep.subr.mxu0 0.0
        %3297 = vmatpush1.msra.mxu0 %v3240
        %3298 = vmatprep.subr.mxu0 0.0
        %3299 = vmatpush1.msra.mxu0 %v3245
        %3300 = vmatprep.subr.mxu0 0.0
        %3301 = vmatpush1.msra.mxu0 %v3250
        %3302 = vmatprep.subr.mxu0 0.0
        %3303 = vmatpush1.msra.mxu0 %v3255
        %3304 = vmatprep.subr.mxu0 0.0
        %3305 = vmatpush1.msra.mxu0 0.0
        %3306 = vmatprep.subr.mxu0 0.0
        %3307 = vmatpush1.msra.mxu0 0.0
        %3308 = vmatprep.subr.mxu0 0.0
        %3309 = vmatpush1.msra.mxu0 0.0
        %3310 = vmatprep.subr.mxu0 0.0
        %3311 = vmatpush1.msra.mxu0 0.0
        %3312 = vmatprep.subr.mxu0 0.0
        %3313 = vmatpush1.msra.mxu0 0.0
        %3314 = vmatprep.subr.mxu0 0.0
        %3315 = vmatpush1.msra.mxu0 0.0
        %3316 = vmatprep.subr.mxu0 0.0
        %3317 = vmatpush1.msra.mxu0 0.0
        %3318 = vmatprep.subr.mxu0 0.0
        %3319 = vmatpush1.msra.mxu0 0.0
        %3320 = vmatprep.subr.mxu0 0.0
        %3321 = vmatpush1.msra.mxu0 0.0
        %3322 = vmatprep.subr.mxu0 0.0
        %3323 = vmatpush1.msra.mxu0 0.0
        %3324 = vmatprep.subr.mxu0 0.0
        %3325 = vmatpush1.msra.mxu0 0.0
        %3326 = vmatprep.subr.mxu0 0.0
        %3327 = vmatpush1.msra.mxu0 0.0
        %3328 = vmatprep.subr.mxu0 0.0
        %3329 = vmatpush1.msra.mxu0 0.0
        %3330 = vmatprep.subr.mxu0 0.0
        %3331 = vmatpush1.msra.mxu0 0.0
        %3332 = vmatprep.subr.mxu0 0.0
        %3333 = vmatpush1.msra.mxu0 0.0
        %3334 = vmatprep.subr.mxu0 0.0
        %3335 = vmatpush1.msra.mxu0 0.0
        %3336 = vmatprep.subr.mxu0 0.0
        %3337 = vmatpush1.msra.mxu0 0.0
        %3338 = vmatprep.subr.mxu0 0.0
        %3339 = vmatpush1.msra.mxu0 0.0
        %3340 = vmatprep.subr.mxu0 0.0
        %3341 = vmatpush1.msra.mxu0 0.0
        %3342 = vmatprep.subr.mxu0 0.0
        %3343 = vmatpush1.msra.mxu0 0.0
        %3344 = vmatprep.subr.mxu0 0.0
        %3345 = vmatpush1.msra.mxu0 0.0
        %3346 = vmatprep.subr.mxu0 0.0
        %3347 = vmatpush1.msra.mxu0 0.0
        %3348 = vmatprep.subr.mxu0 0.0
        %3349 = vmatpush1.msra.mxu0 0.0
        %3350 = vmatprep.subr.mxu0 0.0
        %3351 = vmatpush1.msra.mxu0 0.0
        %3352 = vmatprep.subr.mxu0 0.0
        %3353 = vmatpush1.msra.mxu0 0.0
        %3354 = vmatprep.subr.mxu0 0.0
        %3355 = vmatpush1.msra.mxu0 0.0
        %3356 = vmatprep.subr.mxu0 0.0
        %3357 = vmatpush1.msra.mxu0 0.0
        %3358 = vmatprep.subr.mxu0 0.0
        %3359 = vmatpush1.msra.mxu0 0.0
        %3360 = vmatprep.mubr.f32.mxu0 0.0
        %3361 = vmatmul.mubr.f32.gmra.mrb[0].mxu0 %v3291
        %v3362 = vpop.f32.mrb[0].mxu0
        %v3363 = vadd.f32 0.0, %v3362
        %v3364 = vpop.f32.mrb[0].mxu0
        %3365 = vmatprep.mubr.f32.mxu0 0.0
        %3366 = vmatmul.mubr.f32.gmra.mrb[0].mxu0 %v3294
        %v3367 = vpop.f32.mrb[0].mxu0
        %v3368 = vadd.f32 0.0, %v3367
        %v3369 = vpop.f32.mrb[0].mxu0
        %3370 = vdwg.mxu0
        %s3371 = scalar_lea.vmem %s239, 208 [#allocation5]
        %3372 = vst.msk [vmem:[%s3371] sm:$0xff] %vm510, %v3363
        %3373 = vst.msk [vmem:[%s3371 + $0x8] sm:$0xff] %vm510, %v3368
        %v3374 = vsel %vm510, %v3240, 0.0
        %v3375 = vsel %vm510, %v3245, 0.0
        %v3376 = vadd.f32 %v3374, %v3375
        %v3377 = vsel %vm510, %v3250, 0.0
        %v3378 = vadd.f32 %v3376, %v3377
        %v3379 = vsel %vm510, %v3255, 0.0
        %v3380 = vadd.f32 %v3378, %v3379
        %v3381 = vrot.slane %v3380, 4
        %v3382 = vadd.f32 %v3380, %v3381
        %v3383 = vrot.slane %v3382, 2
        %v3384 = vadd.f32 %v3382, %v3383
        %v3385 = vrot.slane %v3384, 1
        %v3386 = vadd.f32 %v3384, %v3385
        %v3387 = vmul.f32 %v3386, %v526
        %s3388 = scalar_lea.vmem %s246, 13 [#allocation6]
        %3389 = vst.msk [vmem:[%s3388] sm:$0x1] %vm528, %v3387
        %v3391 = vsel %vm307, %v272, 0
        %3393 = vmatprep.subr.mxu0 0.0
        %3394 = vmatpush1.msra.mxu0 %v3391
        %3395 = vmatprep.subr.mxu0 0.0
        %3396 = vmatpush1.msra.mxu0 0.0
        %3397 = vmatprep.subr.mxu0 0.0
        %3398 = vmatpush1.msra.mxu0 0.0
        %3399 = vmatprep.subr.mxu0 0.0
        %3400 = vmatpush1.msra.mxu0 0.0
        %3401 = vmatprep.subr.mxu0 0.0
        %3402 = vmatpush1.msra.mxu0 0.0
        %3403 = vmatprep.subr.mxu0 0.0
        %3404 = vmatpush1.msra.mxu0 0.0
        %3405 = vmatprep.subr.mxu0 0.0
        %3406 = vmatpush1.msra.mxu0 0.0
        %3407 = vmatprep.subr.mxu0 0.0
        %3408 = vmatpush1.msra.mxu0 0.0
        %3409 = vmatprep.subr.mxu0 0.0
        %3410 = vmatpush1.msra.mxu0 0.0
        %3411 = vmatprep.subr.mxu0 0.0
        %3412 = vmatpush1.msra.mxu0 0.0
        %3413 = vmatprep.subr.mxu0 0.0
        %3414 = vmatpush1.msra.mxu0 0.0
        %3415 = vmatprep.subr.mxu0 0.0
        %3416 = vmatpush1.msra.mxu0 0.0
        %3417 = vmatprep.subr.mxu0 0.0
        %3418 = vmatpush1.msra.mxu0 0.0
        %3419 = vmatprep.subr.mxu0 0.0
        %3420 = vmatpush1.msra.mxu0 0.0
        %3421 = vmatprep.subr.mxu0 0.0
        %3422 = vmatpush1.msra.mxu0 0.0
        %3423 = vmatprep.subr.mxu0 0.0
        %3424 = vmatpush1.msra.mxu0 0.0
        %3425 = vmatprep.subr.mxu0 0.0
        %3426 = vmatpush1.msra.mxu0 0.0
        %3427 = vmatprep.subr.mxu0 0.0
        %3428 = vmatpush1.msra.mxu0 0.0
        %3429 = vmatprep.subr.mxu0 0.0
        %3430 = vmatpush1.msra.mxu0 0.0
        %3431 = vmatprep.subr.mxu0 0.0
        %3432 = vmatpush1.msra.mxu0 0.0
        %3433 = vmatprep.subr.mxu0 0.0
        %3434 = vmatpush1.msra.mxu0 0.0
        %3435 = vmatprep.subr.mxu0 0.0
        %3436 = vmatpush1.msra.mxu0 0.0
        %3437 = vmatprep.subr.mxu0 0.0
        %3438 = vmatpush1.msra.mxu0 0.0
        %3439 = vmatprep.subr.mxu0 0.0
        %3440 = vmatpush1.msra.mxu0 0.0
        %3441 = vmatprep.subr.mxu0 0.0
        %3442 = vmatpush1.msra.mxu0 0.0
        %3443 = vmatprep.subr.mxu0 0.0
        %3444 = vmatpush1.msra.mxu0 0.0
        %3445 = vmatprep.subr.mxu0 0.0
        %3446 = vmatpush1.msra.mxu0 0.0
        %3447 = vmatprep.subr.mxu0 0.0
        %3448 = vmatpush1.msra.mxu0 0.0
        %3449 = vmatprep.subr.mxu0 0.0
        %3450 = vmatpush1.msra.mxu0 0.0
        %3451 = vmatprep.subr.mxu0 0.0
        %3452 = vmatpush1.msra.mxu0 0.0
        %3453 = vmatprep.subr.mxu0 0.0
        %3454 = vmatpush1.msra.mxu0 0.0
        %3455 = vmatprep.subr.mxu0 0.0
        %3456 = vmatpush1.msra.mxu0 0.0
        %3457 = vmatprep.mubr.f32.mxu0 0.0
        %3458 = vmatmul.mubr.f32.gmra.mrb[0].mxu0 %v296
        %v3459 = vpop.f32.mrb[0].mxu0
        %v3460 = vadd.f32 %v277, %v3459
        %v3461 = vpop.f32.mrb[0].mxu0
        %3462 = vmatprep.mubr.f32.mxu0 0.0
        %3463 = vmatmul.mubr.f32.gmra.mrb[0].mxu0 %v299
        %v3464 = vpop.f32.mrb[0].mxu0
        %v3465 = vadd.f32 %v282, %v3464
        %v3466 = vpop.f32.mrb[0].mxu0
        %3467 = vmatprep.mubr.f32.mxu0 0.0
        %3468 = vmatmul.mubr.f32.gmra.mrb[0].mxu0 %v302
        %v3469 = vpop.f32.mrb[0].mxu0
        %v3470 = vadd.f32 %v287, %v3469
        %v3471 = vpop.f32.mrb[0].mxu0
        %3472 = vmatprep.mubr.f32.mxu0 0.0
        %3473 = vmatmul.mubr.f32.gmra.mrb[0].mxu0 %v305
        %v3474 = vpop.f32.mrb[0].mxu0
        %v3475 = vadd.f32 %v292, %v3474
        %v3476 = vpop.f32.mrb[0].mxu0
        %3477 = vdwg.mxu0
        %3478 = vxpose.xlu0.b32.start [1/16] %v3460, 128
        %3479 = vxpose.xlu0.b32.cont [2/16] %v3465, 128
        %3480 = vxpose.xlu0.b32.cont [3/16] %v3470, 128
        %3481 = vxpose.xlu0.b32.cont [4/16] %v3475, 128
        %3482 = vxpose.xlu0.b32.cont [5/16] 0.0, 128
        %3483 = vxpose.xlu0.b32.cont [6/16] 0.0, 128
        %3484 = vxpose.xlu0.b32.cont [7/16] 0.0, 128
        %3485 = vxpose.xlu0.b32.cont [8/16] 0.0, 128
        %3486 = vxpose.xlu0.b32.cont [9/16] 0.0, 128
        %3487 = vxpose.xlu0.b32.cont [10/16] 0.0, 128
        %3488 = vxpose.xlu0.b32.cont [11/16] 0.0, 128
        %3489 = vxpose.xlu0.b32.cont [12/16] 0.0, 128
        %3490 = vxpose.xlu0.b32.cont [13/16] 0.0, 128
        %3491 = vxpose.xlu0.b32.cont [14/16] 0.0, 128
        %3492 = vxpose.xlu0.b32.cont [15/16] 0.0, 128
        %3493 = vxpose.xlu0.b32.end [16/16] 0.0, 128
        %v3494 = vpop.trf.xlu0
        %v3495 = vpop.trf.xlu0
        %v3496 = vpop.trf.xlu0
        %v3497 = vpop.trf.xlu0
        %v3498 = vpop.trf.xlu0
        %v3499 = vpop.trf.xlu0
        %v3500 = vpop.trf.xlu0
        %v3501 = vpop.trf.xlu0
        %v3502 = vpop.trf.xlu0
        %v3503 = vpop.trf.xlu0
        %v3504 = vpop.trf.xlu0
        %v3505 = vpop.trf.xlu0
        %v3506 = vpop.trf.xlu0
        %v3507 = vpop.trf.xlu0
        %v3508 = vpop.trf.xlu0
        %v3509 = vpop.trf.xlu0
        %v3511 = vsel %vm428, %v3494, 0
        %v3514 = vsel %vm428, %v3495, 0
        %3516 = vmatprep.subr.mxu0 0.0
        %3517 = vmatpush1.msra.mxu0 %v3460
        %3518 = vmatprep.subr.mxu0 0.0
        %3519 = vmatpush1.msra.mxu0 %v3465
        %3520 = vmatprep.subr.mxu0 0.0
        %3521 = vmatpush1.msra.mxu0 %v3470
        %3522 = vmatprep.subr.mxu0 0.0
        %3523 = vmatpush1.msra.mxu0 %v3475
        %3524 = vmatprep.subr.mxu0 0.0
        %3525 = vmatpush1.msra.mxu0 0.0
        %3526 = vmatprep.subr.mxu0 0.0
        %3527 = vmatpush1.msra.mxu0 0.0
        %3528 = vmatprep.subr.mxu0 0.0
        %3529 = vmatpush1.msra.mxu0 0.0
        %3530 = vmatprep.subr.mxu0 0.0
        %3531 = vmatpush1.msra.mxu0 0.0
        %3532 = vmatprep.subr.mxu0 0.0
        %3533 = vmatpush1.msra.mxu0 0.0
        %3534 = vmatprep.subr.mxu0 0.0
        %3535 = vmatpush1.msra.mxu0 0.0
        %3536 = vmatprep.subr.mxu0 0.0
        %3537 = vmatpush1.msra.mxu0 0.0
        %3538 = vmatprep.subr.mxu0 0.0
        %3539 = vmatpush1.msra.mxu0 0.0
        %3540 = vmatprep.subr.mxu0 0.0
        %3541 = vmatpush1.msra.mxu0 0.0
        %3542 = vmatprep.subr.mxu0 0.0
        %3543 = vmatpush1.msra.mxu0 0.0
        %3544 = vmatprep.subr.mxu0 0.0
        %3545 = vmatpush1.msra.mxu0 0.0
        %3546 = vmatprep.subr.mxu0 0.0
        %3547 = vmatpush1.msra.mxu0 0.0
        %3548 = vmatprep.subr.mxu0 0.0
        %3549 = vmatpush1.msra.mxu0 0.0
        %3550 = vmatprep.subr.mxu0 0.0
        %3551 = vmatpush1.msra.mxu0 0.0
        %3552 = vmatprep.subr.mxu0 0.0
        %3553 = vmatpush1.msra.mxu0 0.0
        %3554 = vmatprep.subr.mxu0 0.0
        %3555 = vmatpush1.msra.mxu0 0.0
        %3556 = vmatprep.subr.mxu0 0.0
        %3557 = vmatpush1.msra.mxu0 0.0
        %3558 = vmatprep.subr.mxu0 0.0
        %3559 = vmatpush1.msra.mxu0 0.0
        %3560 = vmatprep.subr.mxu0 0.0
        %3561 = vmatpush1.msra.mxu0 0.0
        %3562 = vmatprep.subr.mxu0 0.0
        %3563 = vmatpush1.msra.mxu0 0.0
        %3564 = vmatprep.subr.mxu0 0.0
        %3565 = vmatpush1.msra.mxu0 0.0
        %3566 = vmatprep.subr.mxu0 0.0
        %3567 = vmatpush1.msra.mxu0 0.0
        %3568 = vmatprep.subr.mxu0 0.0
        %3569 = vmatpush1.msra.mxu0 0.0
        %3570 = vmatprep.subr.mxu0 0.0
        %3571 = vmatpush1.msra.mxu0 0.0
        %3572 = vmatprep.subr.mxu0 0.0
        %3573 = vmatpush1.msra.mxu0 0.0
        %3574 = vmatprep.subr.mxu0 0.0
        %3575 = vmatpush1.msra.mxu0 0.0
        %3576 = vmatprep.subr.mxu0 0.0
        %3577 = vmatpush1.msra.mxu0 0.0
        %3578 = vmatprep.subr.mxu0 0.0
        %3579 = vmatpush1.msra.mxu0 0.0
        %3580 = vmatprep.mubr.f32.mxu0 0.0
        %3581 = vmatmul.mubr.f32.gmra.mrb[0].mxu0 %v3511
        %v3582 = vpop.f32.mrb[0].mxu0
        %v3583 = vadd.f32 0.0, %v3582
        %v3584 = vpop.f32.mrb[0].mxu0
        %3585 = vmatprep.mubr.f32.mxu0 0.0
        %3586 = vmatmul.mubr.f32.gmra.mrb[0].mxu0 %v3514
        %v3587 = vpop.f32.mrb[0].mxu0
        %v3588 = vadd.f32 0.0, %v3587
        %v3589 = vpop.f32.mrb[0].mxu0
        %3590 = vdwg.mxu0
        %s3591 = scalar_lea.vmem %s239, 224 [#allocation5]
        %3592 = vst.msk [vmem:[%s3591] sm:$0xff] %vm510, %v3583
        %3593 = vst.msk [vmem:[%s3591 + $0x8] sm:$0xff] %vm510, %v3588
        %v3594 = vsel %vm510, %v3460, 0.0
        %v3595 = vsel %vm510, %v3465, 0.0
        %v3596 = vadd.f32 %v3594, %v3595
        %v3597 = vsel %vm510, %v3470, 0.0
        %v3598 = vadd.f32 %v3596, %v3597
        %v3599 = vsel %vm510, %v3475, 0.0
        %v3600 = vadd.f32 %v3598, %v3599
        %v3601 = vrot.slane %v3600, 4
        %v3602 = vadd.f32 %v3600, %v3601
        %v3603 = vrot.slane %v3602, 2
        %v3604 = vadd.f32 %v3602, %v3603
        %v3605 = vrot.slane %v3604, 1
        %v3606 = vadd.f32 %v3604, %v3605
        %v3607 = vmul.f32 %v3606, %v526
        %s3608 = scalar_lea.vmem %s246, 14 [#allocation6]
        %3609 = vst.msk [vmem:[%s3608] sm:$0x1] %vm528, %v3607
        %v3611 = vsel %vm307, %v273, 0
        %3613 = vmatprep.subr.mxu0 0.0
        %3614 = vmatpush1.msra.mxu0 %v3611
        %3615 = vmatprep.subr.mxu0 0.0
        %3616 = vmatpush1.msra.mxu0 0.0
        %3617 = vmatprep.subr.mxu0 0.0
        %3618 = vmatpush1.msra.mxu0 0.0
        %3619 = vmatprep.subr.mxu0 0.0
        %3620 = vmatpush1.msra.mxu0 0.0
        %3621 = vmatprep.subr.mxu0 0.0
        %3622 = vmatpush1.msra.mxu0 0.0
        %3623 = vmatprep.subr.mxu0 0.0
        %3624 = vmatpush1.msra.mxu0 0.0
        %3625 = vmatprep.subr.mxu0 0.0
        %3626 = vmatpush1.msra.mxu0 0.0
        %3627 = vmatprep.subr.mxu0 0.0
        %3628 = vmatpush1.msra.mxu0 0.0
        %3629 = vmatprep.subr.mxu0 0.0
        %3630 = vmatpush1.msra.mxu0 0.0
        %3631 = vmatprep.subr.mxu0 0.0
        %3632 = vmatpush1.msra.mxu0 0.0
        %3633 = vmatprep.subr.mxu0 0.0
        %3634 = vmatpush1.msra.mxu0 0.0
        %3635 = vmatprep.subr.mxu0 0.0
        %3636 = vmatpush1.msra.mxu0 0.0
        %3637 = vmatprep.subr.mxu0 0.0
        %3638 = vmatpush1.msra.mxu0 0.0
        %3639 = vmatprep.subr.mxu0 0.0
        %3640 = vmatpush1.msra.mxu0 0.0
        %3641 = vmatprep.subr.mxu0 0.0
        %3642 = vmatpush1.msra.mxu0 0.0
        %3643 = vmatprep.subr.mxu0 0.0
        %3644 = vmatpush1.msra.mxu0 0.0
        %3645 = vmatprep.subr.mxu0 0.0
        %3646 = vmatpush1.msra.mxu0 0.0
        %3647 = vmatprep.subr.mxu0 0.0
        %3648 = vmatpush1.msra.mxu0 0.0
        %3649 = vmatprep.subr.mxu0 0.0
        %3650 = vmatpush1.msra.mxu0 0.0
        %3651 = vmatprep.subr.mxu0 0.0
        %3652 = vmatpush1.msra.mxu0 0.0
        %3653 = vmatprep.subr.mxu0 0.0
        %3654 = vmatpush1.msra.mxu0 0.0
        %3655 = vmatprep.subr.mxu0 0.0
        %3656 = vmatpush1.msra.mxu0 0.0
        %3657 = vmatprep.subr.mxu0 0.0
        %3658 = vmatpush1.msra.mxu0 0.0
        %3659 = vmatprep.subr.mxu0 0.0
        %3660 = vmatpush1.msra.mxu0 0.0
        %3661 = vmatprep.subr.mxu0 0.0
        %3662 = vmatpush1.msra.mxu0 0.0
        %3663 = vmatprep.subr.mxu0 0.0
        %3664 = vmatpush1.msra.mxu0 0.0
        %3665 = vmatprep.subr.mxu0 0.0
        %3666 = vmatpush1.msra.mxu0 0.0
        %3667 = vmatprep.subr.mxu0 0.0
        %3668 = vmatpush1.msra.mxu0 0.0
        %3669 = vmatprep.subr.mxu0 0.0
        %3670 = vmatpush1.msra.mxu0 0.0
        %3671 = vmatprep.subr.mxu0 0.0
        %3672 = vmatpush1.msra.mxu0 0.0
        %3673 = vmatprep.subr.mxu0 0.0
        %3674 = vmatpush1.msra.mxu0 0.0
        %3675 = vmatprep.subr.mxu0 0.0
        %3676 = vmatpush1.msra.mxu0 0.0
        %3677 = vmatprep.mubr.f32.mxu0 0.0
        %3678 = vmatmul.mubr.f32.gmra.mrb[0].mxu0 %v296
        %v3679 = vpop.f32.mrb[0].mxu0
        %v3680 = vadd.f32 %v277, %v3679
        %v3681 = vpop.f32.mrb[0].mxu0
        %3682 = vmatprep.mubr.f32.mxu0 0.0
        %3683 = vmatmul.mubr.f32.gmra.mrb[0].mxu0 %v299
        %v3684 = vpop.f32.mrb[0].mxu0
        %v3685 = vadd.f32 %v282, %v3684
        %v3686 = vpop.f32.mrb[0].mxu0
        %3687 = vmatprep.mubr.f32.mxu0 0.0
        %3688 = vmatmul.mubr.f32.gmra.mrb[0].mxu0 %v302
        %v3689 = vpop.f32.mrb[0].mxu0
        %v3690 = vadd.f32 %v287, %v3689
        %v3691 = vpop.f32.mrb[0].mxu0
        %3692 = vmatprep.mubr.f32.mxu0 0.0
        %3693 = vmatmul.mubr.f32.gmra.mrb[0].mxu0 %v305
        %v3694 = vpop.f32.mrb[0].mxu0
        %v3695 = vadd.f32 %v292, %v3694
        %v3696 = vpop.f32.mrb[0].mxu0
        %3697 = vdwg.mxu0
        %3698 = vxpose.xlu0.b32.start [1/16] %v3680, 128
        %3699 = vxpose.xlu0.b32.cont [2/16] %v3685, 128
        %3700 = vxpose.xlu0.b32.cont [3/16] %v3690, 128
        %3701 = vxpose.xlu0.b32.cont [4/16] %v3695, 128
        %3702 = vxpose.xlu0.b32.cont [5/16] 0.0, 128
        %3703 = vxpose.xlu0.b32.cont [6/16] 0.0, 128
        %3704 = vxpose.xlu0.b32.cont [7/16] 0.0, 128
        %3705 = vxpose.xlu0.b32.cont [8/16] 0.0, 128
        %3706 = vxpose.xlu0.b32.cont [9/16] 0.0, 128
        %3707 = vxpose.xlu0.b32.cont [10/16] 0.0, 128
        %3708 = vxpose.xlu0.b32.cont [11/16] 0.0, 128
        %3709 = vxpose.xlu0.b32.cont [12/16] 0.0, 128
        %3710 = vxpose.xlu0.b32.cont [13/16] 0.0, 128
        %3711 = vxpose.xlu0.b32.cont [14/16] 0.0, 128
        %3712 = vxpose.xlu0.b32.cont [15/16] 0.0, 128
        %3713 = vxpose.xlu0.b32.end [16/16] 0.0, 128
        %v3714 = vpop.trf.xlu0
        %v3715 = vpop.trf.xlu0
        %v3716 = vpop.trf.xlu0
        %v3717 = vpop.trf.xlu0
        %v3718 = vpop.trf.xlu0
        %v3719 = vpop.trf.xlu0
        %v3720 = vpop.trf.xlu0
        %v3721 = vpop.trf.xlu0
        %v3722 = vpop.trf.xlu0
        %v3723 = vpop.trf.xlu0
        %v3724 = vpop.trf.xlu0
        %v3725 = vpop.trf.xlu0
        %v3726 = vpop.trf.xlu0
        %v3727 = vpop.trf.xlu0
        %v3728 = vpop.trf.xlu0
        %v3729 = vpop.trf.xlu0
        %v3731 = vsel %vm428, %v3714, 0
        %v3734 = vsel %vm428, %v3715, 0
        %3736 = vmatprep.subr.mxu0 0.0
        %3737 = vmatpush1.msra.mxu0 %v3680
        %3738 = vmatprep.subr.mxu0 0.0
        %3739 = vmatpush1.msra.mxu0 %v3685
        %3740 = vmatprep.subr.mxu0 0.0
        %3741 = vmatpush1.msra.mxu0 %v3690
        %3742 = vmatprep.subr.mxu0 0.0
        %3743 = vmatpush1.msra.mxu0 %v3695
        %3744 = vmatprep.subr.mxu0 0.0
        %3745 = vmatpush1.msra.mxu0 0.0
        %3746 = vmatprep.subr.mxu0 0.0
        %3747 = vmatpush1.msra.mxu0 0.0
        %3748 = vmatprep.subr.mxu0 0.0
        %3749 = vmatpush1.msra.mxu0 0.0
        %3750 = vmatprep.subr.mxu0 0.0
        %3751 = vmatpush1.msra.mxu0 0.0
        %3752 = vmatprep.subr.mxu0 0.0
        %3753 = vmatpush1.msra.mxu0 0.0
        %3754 = vmatprep.subr.mxu0 0.0
        %3755 = vmatpush1.msra.mxu0 0.0
        %3756 = vmatprep.subr.mxu0 0.0
        %3757 = vmatpush1.msra.mxu0 0.0
        %3758 = vmatprep.subr.mxu0 0.0
        %3759 = vmatpush1.msra.mxu0 0.0
        %3760 = vmatprep.subr.mxu0 0.0
        %3761 = vmatpush1.msra.mxu0 0.0
        %3762 = vmatprep.subr.mxu0 0.0
        %3763 = vmatpush1.msra.mxu0 0.0
        %3764 = vmatprep.subr.mxu0 0.0
        %3765 = vmatpush1.msra.mxu0 0.0
        %3766 = vmatprep.subr.mxu0 0.0
        %3767 = vmatpush1.msra.mxu0 0.0
        %3768 = vmatprep.subr.mxu0 0.0
        %3769 = vmatpush1.msra.mxu0 0.0
        %3770 = vmatprep.subr.mxu0 0.0
        %3771 = vmatpush1.msra.mxu0 0.0
        %3772 = vmatprep.subr.mxu0 0.0
        %3773 = vmatpush1.msra.mxu0 0.0
        %3774 = vmatprep.subr.mxu0 0.0
        %3775 = vmatpush1.msra.mxu0 0.0
        %3776 = vmatprep.subr.mxu0 0.0
        %3777 = vmatpush1.msra.mxu0 0.0
        %3778 = vmatprep.subr.mxu0 0.0
        %3779 = vmatpush1.msra.mxu0 0.0
        %3780 = vmatprep.subr.mxu0 0.0
        %3781 = vmatpush1.msra.mxu0 0.0
        %3782 = vmatprep.subr.mxu0 0.0
        %3783 = vmatpush1.msra.mxu0 0.0
        %3784 = vmatprep.subr.mxu0 0.0
        %3785 = vmatpush1.msra.mxu0 0.0
        %3786 = vmatprep.subr.mxu0 0.0
        %3787 = vmatpush1.msra.mxu0 0.0
        %3788 = vmatprep.subr.mxu0 0.0
        %3789 = vmatpush1.msra.mxu0 0.0
        %3790 = vmatprep.subr.mxu0 0.0
        %3791 = vmatpush1.msra.mxu0 0.0
        %3792 = vmatprep.subr.mxu0 0.0
        %3793 = vmatpush1.msra.mxu0 0.0
        %3794 = vmatprep.subr.mxu0 0.0
        %3795 = vmatpush1.msra.mxu0 0.0
        %3796 = vmatprep.subr.mxu0 0.0
        %3797 = vmatpush1.msra.mxu0 0.0
        %3798 = vmatprep.subr.mxu0 0.0
        %3799 = vmatpush1.msra.mxu0 0.0
        %3800 = vmatprep.mubr.f32.mxu0 0.0
        %3801 = vmatmul.mubr.f32.gmra.mrb[0].mxu0 %v3731
        %v3802 = vpop.f32.mrb[0].mxu0
        %v3803 = vadd.f32 0.0, %v3802
        %v3804 = vpop.f32.mrb[0].mxu0
        %3805 = vmatprep.mubr.f32.mxu0 0.0
        %3806 = vmatmul.mubr.f32.gmra.mrb[0].mxu0 %v3734
        %v3807 = vpop.f32.mrb[0].mxu0
        %v3808 = vadd.f32 0.0, %v3807
        %v3809 = vpop.f32.mrb[0].mxu0
        %3810 = vdwg.mxu0
        %s3811 = scalar_lea.vmem %s239, 240 [#allocation5]
        %3812 = vst.msk [vmem:[%s3811] sm:$0xff] %vm510, %v3803
        %3813 = vst.msk [vmem:[%s3811 + $0x8] sm:$0xff] %vm510, %v3808
        %v3814 = vsel %vm510, %v3680, 0.0
        %v3815 = vsel %vm510, %v3685, 0.0
        %v3816 = vadd.f32 %v3814, %v3815
        %v3817 = vsel %vm510, %v3690, 0.0
        %v3818 = vadd.f32 %v3816, %v3817
        %v3819 = vsel %vm510, %v3695, 0.0
        %v3820 = vadd.f32 %v3818, %v3819
        %v3821 = vrot.slane %v3820, 4
        %v3822 = vadd.f32 %v3820, %v3821
        %v3823 = vrot.slane %v3822, 2
        %v3824 = vadd.f32 %v3822, %v3823
        %v3825 = vrot.slane %v3824, 1
        %v3826 = vadd.f32 %v3824, %v3825
        %v3827 = vmul.f32 %v3826, %v526
        %s3828 = scalar_lea.vmem %s246, 15 [#allocation6]
        %3829 = vst.msk [vmem:[%s3828] sm:$0x1] %vm528, %v3827
        %s3830 = sand.u32 %s117, 1
        %s3831 = scalar_lea.sflag [#allocation4], %s3830
        %s3832 = sand.u32 %s117, 1
        %s3833 = smul.addr %s3832, 256
        %s3834 = scalar_lea.vmem [#allocation5], %s3833
        %s3835 = sand.u32 %s145, 1
        %s3836 = scalar_lea.sflag [#allocation7], %s3835
        %s3837 = sand.u32 %s145, 1
        %s3838 = smul.addr %s3837, 16
        %s3839 = scalar_lea.vmem [#allocation6], %s3838
        // Predicated region
        $region37: #{tpu_custom_call.1} parent=31 // pred_check
          %p3840 = pneg %p127
        $region38: #{tpu_custom_call.1} parent=31 // pred_check_branch
          %3842 = sbr.rel (%p3840) target = $region40
        $region39: #{tpu_custom_call.1} parent=31 // pred_region
          %s3843 = smul.u32 16, %s30
          %s3845 = ssub.s32 4096, 4096
          %3846 = vsyncadd %s3831, %s3845
          %s3847 = smul.addr %s3843, 2
          %s3848 = smul.addr %s29, 32
          %s3849 = sadd.s32 %s3847, %s3848
          %s3850 = smul.addr %s3849, 128
          %s3851 = scalar_lea.hbm %s3, %s3850
          %s3852 = sshll.u32 %s3834, 4
          %s3853 = int_to_ptr.vmem [resolvable:$true] %s3852
          %3858 = dma.vmem_to_hbm [thread:$0]  %s3853, 4096, %s3851, %s3831, 128, 128, 8
        $region40: #{tpu_custom_call.1} parent=31 // pred_fallthru
          _
        // Predicated region
        $region41: #{tpu_custom_call.1} parent=31 // pred_check
          %p3859 = pneg %p155
        $region42: #{tpu_custom_call.1} parent=31 // pred_check_branch
          %3861 = sbr.rel (%p3859) target = $region44
        $region43: #{tpu_custom_call.1} parent=31 // pred_region
          %s3862 = smul.u32 16, %s30
          %s3864 = ssub.s32 256, 256
          %3865 = vsyncadd %s3836, %s3864
          %s3866 = smul.addr %s29, 16
          %s3867 = sadd.s32 %s3862, %s3866
          %s3868 = smul.addr %s3867, 16
          %s3869 = scalar_lea.hbm %s4, %s3868
          %s3870 = sshll.u32 %s3839, 4
          %s3871 = int_to_ptr.vmem [resolvable:$true] %s3870
          %3876 = dma.vmem_to_hbm [thread:$0]  %s3871, 256, %s3869, %s3836, 16, 16, 1
        $region44: #{tpu_custom_call.1} parent=31 // pred_fallthru
          _
      $region32: #{tpu_custom_call.1} parent=5 // pred_fallthru
        _
      %p3877 = scmp.le.s32.totalorder 2, %s20
      // Predicated region
      $region45: #{tpu_custom_call.1} parent=5 // pred_check
        %p3878 = pneg %p3877
      $region46: #{tpu_custom_call.1} parent=5 // pred_check_branch
        %3880 = sbr.rel (%p3878) target = $region48
      $region47: #{tpu_custom_call.1} parent=5 // pred_region
        %s3881 = ssub.s32 %s20, 2
        // Predicated region
        $region49: #{tpu_custom_call.1} parent=47 // pred_check
          %p3882 = pneg %p133
        $region50: #{tpu_custom_call.1} parent=47 // pred_check_branch
          %3884 = sbr.rel (%p3882) target = $region52
        $region51: #{tpu_custom_call.1} parent=47 // pred_region
          %s3885 = sand.u32 %s118, 1
          %s3886 = scalar_lea.sflag [#allocation4], %s3885
          %s3887 = sand.u32 %s118, 1
          %s3888 = smul.addr %s3887, 256
          %s3889 = scalar_lea.vmem [#allocation5], %s3888
          %3890 = dma.done %s3886, 4096
        $region52: #{tpu_custom_call.1} parent=47 // pred_fallthru
          _
        // Predicated region
        $region53: #{tpu_custom_call.1} parent=47 // pred_check
          %p3891 = pneg %p161
        $region54: #{tpu_custom_call.1} parent=47 // pred_check_branch
          %3893 = sbr.rel (%p3891) target = $region56
        $region55: #{tpu_custom_call.1} parent=47 // pred_region
          %s3894 = sand.u32 %s146, 1
          %s3895 = scalar_lea.sflag [#allocation7], %s3894
          %s3896 = sand.u32 %s146, 1
          %s3897 = smul.addr %s3896, 16
          %s3898 = scalar_lea.vmem [#allocation6], %s3897
          %3899 = dma.done %s3895, 256
        $region56: #{tpu_custom_call.1} parent=47 // pred_fallthru
          _
      $region48: #{tpu_custom_call.1} parent=5 // pred_fallthru
        _
    $region6: #{tpu_custom_call.1} parent=1 // loop_footer
      %s24 = sadd.s32 1, %s20
    $region7: #{tpu_custom_call.1} parent=1 // loop_footer_branch
      %19 = sbr.rel target = $region3
    $region8: #{tpu_custom_call.1} parent=1 // loop_exit
      _
    %3900 = vsyncpa [#allocation3], 1
    %s3901 = scalar_lea.sflag [#allocation3], 1
    %3902 = vsyncpa %s3901, 1
    %3903 = vsyncpa [#allocation4], 1
    %s3904 = scalar_lea.sflag [#allocation4], 1
    %3905 = vsyncpa %s3904, 1
    %3906 = vsyncpa [#allocation7], 1
    %s3907 = scalar_lea.sflag [#allocation7], 1
    %3908 = vsyncpa %s3907, 1

</llo_original>
